<compile_context>
chip_gen: v5e
topology: v5e:2x2
jax: 0.10.0
libtpu: 0.0.40
codegen_flags: <defaults>
</compile_context>

<pallas_src>
import jax
import jax.numpy as jnp
from jax.experimental import pallas as pl
from jax.experimental.pallas import tpu as pltpu


# Channel / feature padding constants.
C1_PAD = 32     # conv1 out channels: 20 -> 32  (sublane-aligned, keeps conv2 K small)
C2_PAD = 64     # conv2 out channels: 50 -> 64  (keeps fc1 K = 1024)
F1_PAD = 512    # fc1 out features : 500 -> 512
F2_PAD = 128    # fc2 out features : 10  -> 128 (lane-dense logits)
NEG_BIG = -1e30  # bias for padded fc2 logit columns (vanishes under softmax)


# ----------------------------- Pallas kernels ------------------------------

def conv_relu_pool_kernel(p_ref, w_ref, b_ref, o_ref):
    """Fused conv (matmul over im2col patches) + bias + relu + 2x2 maxpool.

    p_ref: (4, TG, K) bf16 -- axis 0 holds the 4 positions of each 2x2 pooling
                              window for the same pooled output pixel.
    w_ref: (K, N)     bf16
    b_ref: (1, N)     f32
    o_ref: (TG, N)    bf16

    relu(max_d(z_d) + b) == maxpool(relu(z_d + b)) because relu is monotone
    and the bias is shared across the window, so bias/relu run once, post-max.
    """
    _, g, k = p_ref.shape
    # One long MXU stream: (4*TG, K) @ (K, N), f32 accumulation.
    y = jnp.dot(p_ref[...].reshape(4 * g, k), w_ref[...],
                preferred_element_type=jnp.float32)
    # 2x2 max-pool == elementwise max of the 4 row slabs (cheap VPU work).
    y = jnp.maximum(jnp.maximum(y[:g], y[g:2 * g]),
                    jnp.maximum(y[2 * g:3 * g], y[3 * g:]))
    o_ref[...] = jnp.maximum(y + b_ref[...], 0.0).astype(o_ref.dtype)


def mlp_head_kernel(x_ref, w1_ref, b1_ref, w2_ref, b2_ref, o_ref):
    """Fused fc1 + relu + fc2 + log_softmax.

    Padded fc2 columns carry a bias of -1e30 (and zero weights), so they
    contribute exp(-huge)=0 to the softmax; columns 0..9 are the exact
    log_softmax over the 10 real classes.
    """
    h = jnp.dot(x_ref[...], w1_ref[...], preferred_element_type=jnp.float32)
    h = jnp.maximum(h + b1_ref[...], 0.0).astype(jnp.bfloat16)
    logits = jnp.dot(h, w2_ref[...], preferred_element_type=jnp.float32)
    logits = logits + b2_ref[...]
    m = jnp.max(logits, axis=-1, keepdims=True)
    s = logits - m
    lse = jnp.log(jnp.sum(jnp.exp(s), axis=-1, keepdims=True))
    o_ref[...] = (s - lse).astype(o_ref.dtype)


# ----------------------------- Pallas wrappers ------------------------------

def conv_relu_pool(patches4, w_mat, b_row, row_tile):
    """patches4: (4, G, K) bf16; w_mat: (K, N) bf16; b_row: (1, N) f32 -> (G, N) bf16.

    Grid over pooled-row tiles (== batch tiles); weights/bias use a constant
    index_map so they are DMA'd once and stay resident in VMEM.
    """
    _, G, K = patches4.shape
    N = w_mat.shape[1]
    assert G % row_tile == 0
    grid = (G // row_tile,)
    cost = pl.CostEstimate(
        flops=2 * 4 * G * K * N,
        transcendentals=0,
        bytes_accessed=(4 * G * K + K * N + G * N) * 2 + N * 4)
    return pl.pallas_call(
        conv_relu_pool_kernel,
        out_shape=jax.ShapeDtypeStruct((G, N), jnp.bfloat16),
        grid_spec=pltpu.PrefetchScalarGridSpec(
            num_scalar_prefetch=0,
            grid=grid,
            in_specs=[
                pl.BlockSpec((4, row_tile, K), lambda i: (0, i, 0)),
                pl.BlockSpec((K, N), lambda i: (0, 0)),
                pl.BlockSpec((1, N), lambda i: (0, 0)),
            ],
            out_specs=pl.BlockSpec((row_tile, N), lambda i: (i, 0)),
        ),
        compiler_params=pltpu.CompilerParams(
            dimension_semantics=("parallel",)),
        cost_estimate=cost,
    )(patches4, w_mat, b_row)


def mlp_head(x, w1, b1, w2, b2, row_tile):
    """x: (Bp, 1024) bf16 -> (Bp, F2_PAD) f32; fused fc1+relu+fc2+log_softmax."""
    B, K1 = x.shape
    N1 = w1.shape[1]
    N2 = w2.shape[1]
    assert B % row_tile == 0
    grid = (B // row_tile,)
    cost = pl.CostEstimate(
        flops=2 * B * (K1 * N1 + N1 * N2),
        transcendentals=B * N2,
        bytes_accessed=(B * K1 + K1 * N1 + N1 * N2) * 2
                       + (N1 + N2) * 4 + B * N2 * 4)
    return pl.pallas_call(
        mlp_head_kernel,
        out_shape=jax.ShapeDtypeStruct((B, N2), jnp.float32),
        grid_spec=pltpu.PrefetchScalarGridSpec(
            num_scalar_prefetch=0,
            grid=grid,
            in_specs=[
                pl.BlockSpec((row_tile, K1), lambda i: (i, 0)),
                pl.BlockSpec((K1, N1), lambda i: (0, 0)),
                pl.BlockSpec((1, N1), lambda i: (0, 0)),
                pl.BlockSpec((N1, N2), lambda i: (0, 0)),
                pl.BlockSpec((1, N2), lambda i: (0, 0)),
            ],
            out_specs=pl.BlockSpec((row_tile, N2), lambda i: (i, 0)),
        ),
        compiler_params=pltpu.CompilerParams(
            dimension_semantics=("parallel",)),
        cost_estimate=cost,
    )(x, w1, b1, w2, b2)


# ------------------------- im2col / pooling-group glue ----------------------

def _im2col(x, kh, kw):
    """x: (B, H, W, C) NHWC -> (B, Ho, Wo, kh*kw*C); feature order (i, j, c)."""
    B, H, W, C = x.shape
    Ho, Wo = H - kh + 1, W - kw + 1
    cols = [x[:, i:i + Ho, j:j + Wo, :] for i in range(kh) for j in range(kw)]
    p = jnp.stack(cols, axis=3)                   # (B, Ho, Wo, kh*kw, C)
    return p.reshape(B, Ho, Wo, kh * kw * C)


def _pool_group(p):
    """(B, Ho, Wo, K) -> (4, B*(Ho//2)*(Wo//2), K).

    Axis 0 indexes the position inside the 2x2 pooling window, so the fused
    kernel can max-pool by maxing the 4 matmul row slabs."""
    B, Ho, Wo, K = p.shape
    Hp, Wp = Ho // 2, Wo // 2
    p = p.reshape(B, Hp, 2, Wp, 2, K)
    p = jnp.transpose(p, (2, 4, 0, 1, 3, 5))       # (2, 2, B, Hp, Wp, K)
    return p.reshape(4, B * Hp * Wp, K)


def _batch_tile(B, cap=32):
    """Largest divisor of B that is <= min(cap, ceil(B/2)): >=2 grid steps
    whenever B >= 2 (both v7x TensorCores), capped so the conv2 patch tile
    stays within every generation's scoped-VMEM budget."""
    target = min(cap, max(1, -(-B // 2)))
    t = min(B, target)
    while B % t:
        t -= 1
    return t


# --------------------------- parameters & prep -------------------------------

def init_params(key):
    """PyTorch-layout parameters with PyTorch-style uniform init (f32)."""
    ks = jax.random.split(key, 8)

    def init(k, shape, fan_in):
        bound = 1.0 / jnp.sqrt(float(fan_in))
        return jax.random.uniform(k, shape, jnp.float32, -bound, bound)

    return {
        "conv1_w": init(ks[0], (20, 1, 5, 5), 1 * 5 * 5),
        "conv1_b": init(ks[1], (20,), 1 * 5 * 5),
        "conv2_w": init(ks[2], (50, 20, 5, 5), 20 * 5 * 5),
        "conv2_b": init(ks[3], (50,), 20 * 5 * 5),
        "fc1_w":   init(ks[4], (500, 800), 800),
        "fc1_b":   init(ks[5], (500,), 800),
        "fc2_w":   init(ks[6], (10, 500), 500),
        "fc2_b":   init(ks[7], (10,), 500),
    }


def prepare_params(params):
    """One-time layout work: transposes, small channel padding (32/64/512/128),
    bf16 weight cast, and folding the PyTorch NCHW-flatten permutation into
    fc1's weight rows. Biases stay f32 (added post f32-accumulation)."""
    # conv1: (20,1,5,5) -> (25, 32)   [rows = (i,j,cin), cols = padded cout]
    w1 = jnp.transpose(params["conv1_w"], (2, 3, 1, 0)).reshape(25, 20)
    w1 = jnp.pad(w1, ((0, 0), (0, C1_PAD - 20))).astype(jnp.bfloat16)
    b1 = jnp.pad(params["conv1_b"], (0, C1_PAD - 20)).reshape(1, C1_PAD)

    # conv2: (50,20,5,5) -> (25*32, 64); input channels padded 20->32 only.
    w2 = jnp.transpose(params["conv2_w"], (2, 3, 1, 0))            # (5,5,20,50)
    w2 = jnp.pad(w2, ((0, 0), (0, 0), (0, C1_PAD - 20), (0, C2_PAD - 50)))
    w2 = w2.reshape(25 * C1_PAD, C2_PAD).astype(jnp.bfloat16)      # (800, 64)
    b2 = jnp.pad(params["conv2_b"], (0, C2_PAD - 50)).reshape(1, C2_PAD)

    # fc1: (500, 800) -> (16*64, 512). PyTorch flatten index is c*16 + h*4 + w;
    # our activation flattens as (h*4+w)*64 + c, so permute+pad the rows once.
    fw1 = params["fc1_w"].reshape(500, 50, 16)                     # (o, c, hw)
    fw1 = jnp.transpose(fw1, (2, 1, 0))                            # (hw, c, o)
    fw1 = jnp.pad(fw1, ((0, 0), (0, C2_PAD - 50), (0, 0)))         # (16,64,500)
    fw1 = fw1.reshape(16 * C2_PAD, 500)                            # (1024, 500)
    fw1 = jnp.pad(fw1, ((0, 0), (0, F1_PAD - 500))).astype(jnp.bfloat16)
    fb1 = jnp.pad(params["fc1_b"], (0, F1_PAD - 500)).reshape(1, F1_PAD)

    # fc2: (10, 500) -> (512, 128); padded logit columns get -1e30 bias.
    fw2 = params["fc2_w"].T                                        # (500, 10)
    fw2 = jnp.pad(fw2, ((0, F1_PAD - 500), (0, F2_PAD - 10)))      # (512, 128)
    fw2 = fw2.astype(jnp.bfloat16)
    fb2 = jnp.pad(params["fc2_b"], (0, F2_PAD - 10),
                  constant_values=NEG_BIG).reshape(1, F2_PAD)

    return {"w1": w1, "b1": b1, "w2": w2, "b2": b2,
            "fc1_w": fw1, "fc1_b": fb1, "fc2_w": fw2, "fc2_b": fb2}


# ------------------------------- the network --------------------------------

def net_forward(x_nchw, prep):
    B = x_nchw.shape[0]
    # NCHW -> NHWC is a pure reshape when C == 1; cast once to bf16.
    x = x_nchw.astype(jnp.bfloat16).reshape(B, 28, 28, 1)
    tb = _batch_tile(B)

    # conv1 + relu + 2x2 pool (fused) -> rows ordered (b, hp, wp), 32 channels
    p1 = _pool_group(_im2col(x, 5, 5))                      # (4, B*144, 25) bf16
    a1 = conv_relu_pool(p1, prep["w1"], prep["b1"], row_tile=tb * 144)
    a1 = a1.reshape(B, 12, 12, C1_PAD)                      # (B,12,12,32) bf16

    # conv2 + relu + 2x2 pool (fused); K = 25*32 = 800 (un-padded contraction).
    # TODO(synk): this im2col/pool-group remains XLA glue between Pallas stages.
    p2 = _pool_group(_im2col(a1, 5, 5))                     # (4, B*16, 800) bf16
    a2 = conv_relu_pool(p2, prep["w2"], prep["b2"], row_tile=tb * 16)

    # Flatten; the PyTorch NCHW (c,h,w) flatten order is already folded into
    # fc1's weight rows, so this is a plain reshape (no runtime permute).
    feat = a2.reshape(B, 16 * C2_PAD)                       # (B, 1024) bf16

    # fc1 + relu + fc2 + log_softmax (fused). Pad the batch so the head always
    # has >= 2 grid steps with (8,128)-legal row tiles; padded rows are sliced.
    tb_mlp = 128 if B >= 256 else 16
    Bp = max(2 * tb_mlp, ((B + tb_mlp - 1) // tb_mlp) * tb_mlp)
    if Bp != B:
        feat = jnp.pad(feat, ((0, Bp - B), (0, 0)))
    out = mlp_head(feat, prep["fc1_w"], prep["fc1_b"],
                   prep["fc2_w"], prep["fc2_b"], row_tile=tb_mlp)  # (Bp, 128)
    return out[:B, :10]


# ----------------------------- pure-JAX reference ----------------------------

def reference_forward(x_nchw, params):
    """Direct f32 translation of the PyTorch forward (NCHW), for correctness."""
    x = x_nchw.astype(jnp.float32)

    def conv(x, w, b):
        y = jax.lax.conv_general_dilated(
            x, w, window_strides=(1, 1), padding="VALID",
            dimension_numbers=("NCHW", "OIHW", "NCHW"),
            precision=jax.lax.Precision.HIGHEST)
        return y + b.reshape(1, -1, 1, 1)

    def pool(x):
        B, C, H, W = x.shape
        return jnp.max(x.reshape(B, C, H // 2, 2, W // 2, 2), axis=(3, 5))

    with jax.default_matmul_precision("highest"):
        x = jax.nn.relu(conv(x, params["conv1_w"], params["conv1_b"]))
        x = pool(x)
        x = jax.nn.relu(conv(x, params["conv2_w"], params["conv2_b"]))
        x = pool(x)
        x = x.reshape(x.shape[0], -1)                       # NCHW flatten (c,h,w)
        x = jax.nn.relu(x @ params["fc1_w"].T + params["fc1_b"])
        x = x @ params["fc2_w"].T + params["fc2_b"]
        return jax.nn.log_softmax(x, axis=1)


# ---------------------------------- main -------------------------------------

if __name__ == "__main__":
    key = jax.random.PRNGKey(0)
    k_in, k_par = jax.random.split(key)

    # MNIST-shaped input (28x28 is required by the 4*4*50 flatten), batch=2.
    x = jax.random.normal(k_in, (2, 1, 28, 28), dtype=jnp.float32)
    params = init_params(k_par)
    prep = prepare_params(params)          # one-time weight layout/bf16 work

    out = jax.jit(net_forward)(x, prep)
    out = jax.block_until_ready(out)
    assert out.shape == (2, 10)

    # sanity: each row of the log-softmax exponentiates-sums to ~1
    row_sums = jnp.sum(jnp.exp(out), axis=1)
    assert bool(jnp.all(jnp.abs(row_sums - 1.0) < 1e-3))

    # correctness vs a plain-JAX f32 translation of the PyTorch forward
    ref = jax.block_until_ready(reference_forward(x, params))
    assert bool(jnp.allclose(out, ref, atol=2e-2, rtol=2e-2)), (
        "Pallas output disagrees with reference")

    print("KERNEL_OK")
</pallas_src>

<mosaic_0001>
module attributes {stable_mosaic.version = 11 : i64} {
  func.func @conv_relu_pool_kernel(%arg0: i32, %arg1: memref<4x144x25xbf16, #tpu.memory_space<vmem>>, %arg2: memref<25x32xbf16, #tpu.memory_space<vmem>>, %arg3: memref<1x32xf32, #tpu.memory_space<vmem>>, %arg4: memref<144x32xbf16, #tpu.memory_space<vmem>>) attributes {dimension_semantics = [#tpu.dimension_semantics<parallel>], iteration_bounds = array<i64: 2>, scalar_prefetch = 0 : i64, scratch_operands = 0 : i64, tpu.core_type = #tpu.core_type<tc>, window_params = [{transform_indices = @transform_0, window_bounds = array<i64: 4, 144, 25>}, {pipeline_mode = #tpu.pipeline_mode<synchronous>, transform_indices = @transform_1, window_bounds = array<i64: 25, 32>}, {pipeline_mode = #tpu.pipeline_mode<synchronous>, transform_indices = @transform_2, window_bounds = array<i64: 1, 32>}, {transform_indices = @transform_3, window_bounds = array<i64: 144, 32>}]} {
    %c0 = arith.constant 0 : index
    %c0_0 = arith.constant 0 : index
    %c0_1 = arith.constant 0 : index
    %0 = vector.load %arg1[%c0, %c0_0, %c0_1] : memref<4x144x25xbf16, #tpu.memory_space<vmem>>, vector<4x144x25xbf16>
    %1 = vector.shape_cast %0 : vector<4x144x25xbf16> to vector<576x25xbf16>
    %c0_2 = arith.constant 0 : index
    %c0_3 = arith.constant 0 : index
    %2 = vector.load %arg2[%c0_2, %c0_3] : memref<25x32xbf16, #tpu.memory_space<vmem>>, vector<25x32xbf16>
    %cst = arith.constant dense<0.000000e+00> : vector<576x32xf32>
    %3 = tpu.matmul %1, %2, %cst {dimension_numbers = #tpu.dot_dimension_numbers<[1], [0], [0], [1], [0, 0, 1, 1], [], []>} : vector<576x25xbf16>, vector<25x32xbf16>, vector<576x32xf32> -> vector<576x32xf32>
    %4 = vector.extract_strided_slice %3 {offsets = [0, 0], sizes = [144, 32], strides = [1, 1]} : vector<576x32xf32> to vector<144x32xf32>
    %5 = vector.extract_strided_slice %3 {offsets = [144, 0], sizes = [144, 32], strides = [1, 1]} : vector<576x32xf32> to vector<144x32xf32>
    %6 = arith.maximumf %4, %5 : vector<144x32xf32>
    %7 = vector.extract_strided_slice %3 {offsets = [288, 0], sizes = [144, 32], strides = [1, 1]} : vector<576x32xf32> to vector<144x32xf32>
    %8 = vector.extract_strided_slice %3 {offsets = [432, 0], sizes = [144, 32], strides = [1, 1]} : vector<576x32xf32> to vector<144x32xf32>
    %9 = arith.maximumf %7, %8 : vector<144x32xf32>
    %10 = arith.maximumf %6, %9 : vector<144x32xf32>
    %c0_4 = arith.constant 0 : index
    %c0_5 = arith.constant 0 : index
    %11 = vector.load %arg3[%c0_4, %c0_5] : memref<1x32xf32, #tpu.memory_space<vmem>>, vector<1x32xf32>
    %12 = vector.broadcast %11 : vector<1x32xf32> to vector<144x32xf32>
    %13 = arith.addf %10, %12 : vector<144x32xf32>
    %cst_6 = arith.constant 0.000000e+00 : f32
    %14 = vector.broadcast %cst_6 : f32 to vector<144x32xf32>
    %15 = arith.maximumf %13, %14 : vector<144x32xf32>
    %16 = arith.truncf %15 : vector<144x32xf32> to vector<144x32xbf16>
    %c0_7 = arith.constant 0 : index
    %c0_8 = arith.constant 0 : index
    %17 = vector.load %arg4[%c0_7, %c0_8] : memref<144x32xbf16, #tpu.memory_space<vmem>>, vector<144x32xbf16>
    tpu.vector_store %arg4[%c0_7, %c0_8], %16 {strides = array<i32>} : memref<144x32xbf16, #tpu.memory_space<vmem>>, vector<144x32xbf16>,
    return
  }
  func.func @transform_0(%arg0: i32) -> (i32, i32, i32) {
    %c0_i32 = arith.constant 0 : i32
    %c0_i32_0 = arith.constant 0 : i32
    %c0_i32_1 = arith.constant 0 : i32
    return %c0_i32, %arg0, %c0_i32_0 : i32, i32, i32
  }
  func.func @transform_1(%arg0: i32) -> (i32, i32) {
    %c0_i32 = arith.constant 0 : i32
    %c0_i32_0 = arith.constant 0 : i32
    %c0_i32_1 = arith.constant 0 : i32
    return %c0_i32, %c0_i32_0 : i32, i32
  }
  func.func @transform_2(%arg0: i32) -> (i32, i32) {
    %c0_i32 = arith.constant 0 : i32
    %c0_i32_0 = arith.constant 0 : i32
    %c0_i32_1 = arith.constant 0 : i32
    return %c0_i32, %c0_i32_0 : i32, i32
  }
  func.func @transform_3(%arg0: i32) -> (i32, i32) {
    %c0_i32 = arith.constant 0 : i32
    %c0_i32_0 = arith.constant 0 : i32
    return %arg0, %c0_i32 : i32, i32
  }
}

module attributes {stable_mosaic.version = 11 : i64} {
  func.func @conv_relu_pool_kernel(%arg0: i32, %arg1: memref<4x16x800xbf16, #tpu.memory_space<vmem>>, %arg2: memref<800x64xbf16, #tpu.memory_space<vmem>>, %arg3: memref<1x64xf32, #tpu.memory_space<vmem>>, %arg4: memref<16x64xbf16, #tpu.memory_space<vmem>>) attributes {dimension_semantics = [#tpu.dimension_semantics<parallel>], iteration_bounds = array<i64: 2>, scalar_prefetch = 0 : i64, scratch_operands = 0 : i64, tpu.core_type = #tpu.core_type<tc>, window_params = [{transform_indices = @transform_0, window_bounds = array<i64: 4, 16, 800>}, {pipeline_mode = #tpu.pipeline_mode<synchronous>, transform_indices = @transform_1, window_bounds = array<i64: 800, 64>}, {pipeline_mode = #tpu.pipeline_mode<synchronous>, transform_indices = @transform_2, window_bounds = array<i64: 1, 64>}, {transform_indices = @transform_3, window_bounds = array<i64: 16, 64>}]} {
    %c0 = arith.constant 0 : index
    %c0_0 = arith.constant 0 : index
    %c0_1 = arith.constant 0 : index
    %0 = vector.load %arg1[%c0, %c0_0, %c0_1] : memref<4x16x800xbf16, #tpu.memory_space<vmem>>, vector<4x16x800xbf16>
    %1 = vector.shape_cast %0 : vector<4x16x800xbf16> to vector<64x800xbf16>
    %c0_2 = arith.constant 0 : index
    %c0_3 = arith.constant 0 : index
    %2 = vector.load %arg2[%c0_2, %c0_3] : memref<800x64xbf16, #tpu.memory_space<vmem>>, vector<800x64xbf16>
    %cst = arith.constant dense<0.000000e+00> : vector<64x64xf32>
    %3 = tpu.matmul %1, %2, %cst {dimension_numbers = #tpu.dot_dimension_numbers<[1], [0], [0], [1], [0, 0, 1, 1], [], []>} : vector<64x800xbf16>, vector<800x64xbf16>, vector<64x64xf32> -> vector<64x64xf32>
    %4 = vector.extract_strided_slice %3 {offsets = [0, 0], sizes = [16, 64], strides = [1, 1]} : vector<64x64xf32> to vector<16x64xf32>
    %5 = vector.extract_strided_slice %3 {offsets = [16, 0], sizes = [16, 64], strides = [1, 1]} : vector<64x64xf32> to vector<16x64xf32>
    %6 = arith.maximumf %4, %5 : vector<16x64xf32>
    %7 = vector.extract_strided_slice %3 {offsets = [32, 0], sizes = [16, 64], strides = [1, 1]} : vector<64x64xf32> to vector<16x64xf32>
    %8 = vector.extract_strided_slice %3 {offsets = [48, 0], sizes = [16, 64], strides = [1, 1]} : vector<64x64xf32> to vector<16x64xf32>
    %9 = arith.maximumf %7, %8 : vector<16x64xf32>
    %10 = arith.maximumf %6, %9 : vector<16x64xf32>
    %c0_4 = arith.constant 0 : index
    %c0_5 = arith.constant 0 : index
    %11 = vector.load %arg3[%c0_4, %c0_5] : memref<1x64xf32, #tpu.memory_space<vmem>>, vector<1x64xf32>
    %12 = vector.broadcast %11 : vector<1x64xf32> to vector<16x64xf32>
    %13 = arith.addf %10, %12 : vector<16x64xf32>
    %cst_6 = arith.constant 0.000000e+00 : f32
    %14 = vector.broadcast %cst_6 : f32 to vector<16x64xf32>
    %15 = arith.maximumf %13, %14 : vector<16x64xf32>
    %16 = arith.truncf %15 : vector<16x64xf32> to vector<16x64xbf16>
    %c0_7 = arith.constant 0 : index
    %c0_8 = arith.constant 0 : index
    %17 = vector.load %arg4[%c0_7, %c0_8] : memref<16x64xbf16, #tpu.memory_space<vmem>>, vector<16x64xbf16>
    tpu.vector_store %arg4[%c0_7, %c0_8], %16 {strides = array<i32>} : memref<16x64xbf16, #tpu.memory_space<vmem>>, vector<16x64xbf16>,
    return
  }
  func.func @transform_0(%arg0: i32) -> (i32, i32, i32) {
    %c0_i32 = arith.constant 0 : i32
    %c0_i32_0 = arith.constant 0 : i32
    %c0_i32_1 = arith.constant 0 : i32
    return %c0_i32, %arg0, %c0_i32_0 : i32, i32, i32
  }
  func.func @transform_1(%arg0: i32) -> (i32, i32) {
    %c0_i32 = arith.constant 0 : i32
    %c0_i32_0 = arith.constant 0 : i32
    %c0_i32_1 = arith.constant 0 : i32
    return %c0_i32, %c0_i32_0 : i32, i32
  }
  func.func @transform_2(%arg0: i32) -> (i32, i32) {
    %c0_i32 = arith.constant 0 : i32
    %c0_i32_0 = arith.constant 0 : i32
    %c0_i32_1 = arith.constant 0 : i32
    return %c0_i32, %c0_i32_0 : i32, i32
  }
  func.func @transform_3(%arg0: i32) -> (i32, i32) {
    %c0_i32 = arith.constant 0 : i32
    %c0_i32_0 = arith.constant 0 : i32
    return %arg0, %c0_i32 : i32, i32
  }
}

module attributes {stable_mosaic.version = 11 : i64} {
  func.func @mlp_head_kernel(%arg0: i32, %arg1: memref<16x1024xbf16, #tpu.memory_space<vmem>>, %arg2: memref<1024x512xbf16, #tpu.memory_space<vmem>>, %arg3: memref<1x512xf32, #tpu.memory_space<vmem>>, %arg4: memref<512x128xbf16, #tpu.memory_space<vmem>>, %arg5: memref<1x128xf32, #tpu.memory_space<vmem>>, %arg6: memref<16x128xf32, #tpu.memory_space<vmem>>) attributes {dimension_semantics = [#tpu.dimension_semantics<parallel>], iteration_bounds = array<i64: 2>, scalar_prefetch = 0 : i64, scratch_operands = 0 : i64, tpu.core_type = #tpu.core_type<tc>, window_params = [{transform_indices = @transform_0, window_bounds = array<i64: 16, 1024>}, {pipeline_mode = #tpu.pipeline_mode<synchronous>, transform_indices = @transform_1, window_bounds = array<i64: 1024, 512>}, {pipeline_mode = #tpu.pipeline_mode<synchronous>, transform_indices = @transform_2, window_bounds = array<i64: 1, 512>}, {pipeline_mode = #tpu.pipeline_mode<synchronous>, transform_indices = @transform_3, window_bounds = array<i64: 512, 128>}, {pipeline_mode = #tpu.pipeline_mode<synchronous>, transform_indices = @transform_4, window_bounds = array<i64: 1, 128>}, {transform_indices = @transform_5, window_bounds = array<i64: 16, 128>}]} {
    %c0 = arith.constant 0 : index
    %c0_0 = arith.constant 0 : index
    %0 = vector.load %arg1[%c0, %c0_0] : memref<16x1024xbf16, #tpu.memory_space<vmem>>, vector<16x1024xbf16>
    %c0_1 = arith.constant 0 : index
    %c0_2 = arith.constant 0 : index
    %1 = vector.load %arg2[%c0_1, %c0_2] : memref<1024x512xbf16, #tpu.memory_space<vmem>>, vector<1024x512xbf16>
    %cst = arith.constant dense<0.000000e+00> : vector<16x512xf32>
    %2 = tpu.matmul %0, %1, %cst {dimension_numbers = #tpu.dot_dimension_numbers<[1], [0], [0], [1], [0, 0, 1, 1], [], []>} : vector<16x1024xbf16>, vector<1024x512xbf16>, vector<16x512xf32> -> vector<16x512xf32>
    %c0_3 = arith.constant 0 : index
    %c0_4 = arith.constant 0 : index
    %3 = vector.load %arg3[%c0_3, %c0_4] : memref<1x512xf32, #tpu.memory_space<vmem>>, vector<1x512xf32>
    %4 = vector.broadcast %3 : vector<1x512xf32> to vector<16x512xf32>
    %5 = arith.addf %2, %4 : vector<16x512xf32>
    %cst_5 = arith.constant 0.000000e+00 : f32
    %6 = vector.broadcast %cst_5 : f32 to vector<16x512xf32>
    %7 = arith.maximumf %5, %6 : vector<16x512xf32>
    %8 = arith.truncf %7 : vector<16x512xf32> to vector<16x512xbf16>
    %c0_6 = arith.constant 0 : index
    %c0_7 = arith.constant 0 : index
    %9 = vector.load %arg4[%c0_6, %c0_7] : memref<512x128xbf16, #tpu.memory_space<vmem>>, vector<512x128xbf16>
    %cst_8 = arith.constant dense<0.000000e+00> : vector<16x128xf32>
    %10 = tpu.matmul %8, %9, %cst_8 {dimension_numbers = #tpu.dot_dimension_numbers<[1], [0], [0], [1], [0, 0, 1, 1], [], []>} : vector<16x512xbf16>, vector<512x128xbf16>, vector<16x128xf32> -> vector<16x128xf32>
    %c0_9 = arith.constant 0 : index
    %c0_10 = arith.constant 0 : index
    %11 = vector.load %arg5[%c0_9, %c0_10] : memref<1x128xf32, #tpu.memory_space<vmem>>, vector<1x128xf32>
    %12 = vector.broadcast %11 : vector<1x128xf32> to vector<16x128xf32>
    %13 = arith.addf %10, %12 : vector<16x128xf32>
    %cst_11 = arith.constant dense<0xFF800000> : vector<16xf32>
    %14 = vector.multi_reduction <maximumf>, %13, %cst_11 [1] : vector<16x128xf32> to vector<16xf32>
    %15 = vector.shape_cast %14 : vector<16xf32> to vector<16x1xf32>
    %16 = vector.broadcast %15 : vector<16x1xf32> to vector<16x128xf32>
    %17 = arith.subf %13, %16 : vector<16x128xf32>
    %18 = math.exp %17 : vector<16x128xf32>
    %cst_12 = arith.constant dense<0.000000e+00> : vector<16xf32>
    %19 = vector.multi_reduction <add>, %18, %cst_12 [1] : vector<16x128xf32> to vector<16xf32>
    %20 = vector.shape_cast %19 : vector<16xf32> to vector<16x1xf32>
    %21 = math.log %20 : vector<16x1xf32>
    %22 = vector.broadcast %21 : vector<16x1xf32> to vector<16x128xf32>
    %23 = arith.subf %17, %22 : vector<16x128xf32>
    %c0_13 = arith.constant 0 : index
    %c0_14 = arith.constant 0 : index
    %24 = vector.load %arg6[%c0_13, %c0_14] : memref<16x128xf32, #tpu.memory_space<vmem>>, vector<16x128xf32>
    tpu.vector_store %arg6[%c0_13, %c0_14], %23 {strides = array<i32>} : memref<16x128xf32, #tpu.memory_space<vmem>>, vector<16x128xf32>,
    return
  }
  func.func @transform_0(%arg0: i32) -> (i32, i32) {
    %c0_i32 = arith.constant 0 : i32
    %c0_i32_0 = arith.constant 0 : i32
    return %arg0, %c0_i32 : i32, i32
  }
  func.func @transform_1(%arg0: i32) -> (i32, i32) {
    %c0_i32 = arith.constant 0 : i32
    %c0_i32_0 = arith.constant 0 : i32
    %c0_i32_1 = arith.constant 0 : i32
    return %c0_i32, %c0_i32_0 : i32, i32
  }
  func.func @transform_2(%arg0: i32) -> (i32, i32) {
    %c0_i32 = arith.constant 0 : i32
    %c0_i32_0 = arith.constant 0 : i32
    %c0_i32_1 = arith.constant 0 : i32
    return %c0_i32, %c0_i32_0 : i32, i32
  }
  func.func @transform_3(%arg0: i32) -> (i32, i32) {
    %c0_i32 = arith.constant 0 : i32
    %c0_i32_0 = arith.constant 0 : i32
    %c0_i32_1 = arith.constant 0 : i32
    return %c0_i32, %c0_i32_0 : i32, i32
  }
  func.func @transform_4(%arg0: i32) -> (i32, i32) {
    %c0_i32 = arith.constant 0 : i32
    %c0_i32_0 = arith.constant 0 : i32
    %c0_i32_1 = arith.constant 0 : i32
    return %c0_i32, %c0_i32_0 : i32, i32
  }
  func.func @transform_5(%arg0: i32) -> (i32, i32) {
    %c0_i32 = arith.constant 0 : i32
    %c0_i32_0 = arith.constant 0 : i32
    return %arg0, %c0_i32 : i32, i32
  }
}

</mosaic_0001>

<llo_original>
// kernel: net_forward.3
$region0: #{net_forward.3}
  #allocation0 [shape = 'u32[]', space=smem, size = 0x4, offset = 0x4, fixed_abs, tag = 'smem constant byte address 0x4 - core index']
  #allocation1 [shape = 'u32[72,128]{1,0:T(1,128)}', space=vmem, size = 0x9000, scoped, tag = 'internal scratch']
  %s0 = inlined_call_operand.vmem [shape: bf16[4,288,25], index: 0, kind: input, shape index: {}]
  %s1 = inlined_call_operand.vmem [shape: bf16[25,32], index: 1, kind: input, shape index: {}]
  %s2 = inlined_call_operand.vmem [shape: f32[1,32], index: 2, kind: input, shape index: {}]
  %s3 = inlined_call_operand.vmem [shape: bf16[288,32], index: 3, kind: output, shape index: {}]
  %s4 = sld [smem:[#allocation0]]
  $region86: #{net_forward.3} parent=0
    _
  %s6 = ssub.s32 1, %s4
  %s7 = scalar_select 0, %s6, %s4
  $region1: #{net_forward.3} parent=0
    #allocation2 [shape = 'u8[294912]{0}', space=vmem, size = 0x48000, scoped, tag = 'input window, operand 0']
    loop: start=0, step=1, limit=4
    $region2: #{net_forward.3} parent=1 // loop_pre_header
      _
    $region3: #{net_forward.3} parent=1 // loop_header
      %s9 = sphi 0, %s13
      %p10 = scmp.ge.s32.totalorder %s9, 4
      %s19 = sphi 0, %s21
      %s22 = sphi 0, %s19
      %s23 = sphi 0, %s22
      %s39 = sphi 0, %s23
      %s43 = sphi 0, %s43
      %s45 = sphi 0, %s43
      %s46 = sphi 0, %s45
      %s60 = sphi 0, %s46
      %s64 = sphi 0, %s64
      %s66 = sphi 0, %s64
      %s67 = sphi 0, %s66
      %s81 = sphi 0, %s67
      %s87 = sphi 0, %s89
      %s90 = sphi 0, %s87
      %s91 = sphi 0, %s90
      %s107 = sphi 0, %s91
    $region4: #{net_forward.3} parent=1 // loop_header_branch
      %12 = sbr.rel (%p10) target = $region8
    $region5: #{net_forward.3} parent=1 // loop_body
      %s14 = ssub.s32 %s9, 1
      %s15 = ssub.s32 %s9, 2
      %s16 = sadd.s32 %s9, 1
      %s17 = ssub.s32 %s9, %s16
      %p18 = scmp.eq.s32.totalorder %s17, 0
      %s20 = sadd.s32 %s19, 1
      %s21 = scalar_select %p18, %s19, %s20
      %p24 = pneg %p18
      %p25 = scmp.eq.s32.totalorder %s9, 1
      %p26 = por %p24, %p25
      %p27 = scmp.ne.s32.totalorder %s19, %s22
      %p28 = scmp.eq.s32.totalorder %s9, 0
      %p29 = por %p27, %p28
      %p30 = scmp.ne.s32.totalorder %s19, %s22
      %p31 = scmp.eq.s32.totalorder %s14, 1
      %p32 = por %p30, %p31
      %p33 = scmp.ne.s32.totalorder %s22, %s23
      %p34 = scmp.eq.s32.totalorder %s14, 0
      %p35 = por %p33, %p34
      %p36 = scmp.ne.s32.totalorder %s22, %s23
      %p37 = scmp.eq.s32.totalorder %s15, 1
      %p38 = por %p36, %p37
      %p40 = scmp.ne.s32.totalorder %s23, %s39
      %p41 = scmp.eq.s32.totalorder %s15, 0
      %p42 = por %p40, %p41
      %s44 = sadd.s32 %s43, 1
      %p47 = scmp.eq.s32.totalorder %s9, 1
      %p48 = scmp.ne.s32.totalorder %s43, %s45
      %p49 = scmp.eq.s32.totalorder %s9, 0
      %p50 = por %p48, %p49
      %p51 = scmp.ne.s32.totalorder %s43, %s45
      %p52 = scmp.eq.s32.totalorder %s14, 1
      %p53 = por %p51, %p52
      %p54 = scmp.ne.s32.totalorder %s45, %s46
      %p55 = scmp.eq.s32.totalorder %s14, 0
      %p56 = por %p54, %p55
      %p57 = scmp.ne.s32.totalorder %s45, %s46
      %p58 = scmp.eq.s32.totalorder %s15, 1
      %p59 = por %p57, %p58
      %p61 = scmp.ne.s32.totalorder %s46, %s60
      %p62 = scmp.eq.s32.totalorder %s15, 0
      %p63 = por %p61, %p62
      %s65 = sadd.s32 %s64, 1
      %p68 = scmp.eq.s32.totalorder %s9, 1
      %p69 = scmp.ne.s32.totalorder %s64, %s66
      %p70 = scmp.eq.s32.totalorder %s9, 0
      %p71 = por %p69, %p70
      %p72 = scmp.ne.s32.totalorder %s64, %s66
      %p73 = scmp.eq.s32.totalorder %s14, 1
      %p74 = por %p72, %p73
      %p75 = scmp.ne.s32.totalorder %s66, %s67
      %p76 = scmp.eq.s32.totalorder %s14, 0
      %p77 = por %p75, %p76
      %p78 = scmp.ne.s32.totalorder %s66, %s67
      %p79 = scmp.eq.s32.totalorder %s15, 1
      %p80 = por %p78, %p79
      %p82 = scmp.ne.s32.totalorder %s67, %s81
      %p83 = scmp.eq.s32.totalorder %s15, 0
      %p84 = por %p82, %p83
      %s85 = ssub.s32 %s9, %s16
      %p86 = scmp.eq.s32.totalorder %s85, 0
      %s88 = sadd.s32 %s87, 1
      %s89 = scalar_select %p86, %s87, %s88
      %p92 = pneg %p86
      %p93 = scmp.eq.s32.totalorder %s9, 1
      %p94 = por %p92, %p93
      %p95 = scmp.ne.s32.totalorder %s87, %s90
      %p96 = scmp.eq.s32.totalorder %s9, 0
      %p97 = por %p95, %p96
      %p98 = scmp.ne.s32.totalorder %s87, %s90
      %p99 = scmp.eq.s32.totalorder %s14, 1
      %p100 = por %p98, %p99
      %p101 = scmp.ne.s32.totalorder %s90, %s91
      %p102 = scmp.eq.s32.totalorder %s14, 0
      %p103 = por %p101, %p102
      %p104 = scmp.ne.s32.totalorder %s90, %s91
      %p105 = scmp.eq.s32.totalorder %s15, 1
      %p106 = por %p104, %p105
      %p108 = scmp.ne.s32.totalorder %s91, %s107
      %p109 = scmp.eq.s32.totalorder %s15, 0
      %p110 = por %p108, %p109
      %p111 = scmp.le.s32.totalorder 1, %s9
      %p112 = scmp.lt.s32.totalorder %s9, 3
      %p113 = pnand %p111, %p112
      %p114 = pneg %p113
      // Predicated region
      $region9: #{net_forward.3} parent=5 // pred_check
        _
      $region10: #{net_forward.3} parent=5 // pred_check_branch
        %116 = sbr.rel (%p113) target = $region12
      $region11: #{net_forward.3} parent=5 // pred_region
        %s117 = ssub.s32 %s9, 1
        // Predicated region
        $region13: #{net_forward.3} parent=11 // pred_check
          %p118 = pneg %p56
        $region14: #{net_forward.3} parent=11 // pred_check_branch
          %120 = sbr.rel (%p118) target = $region16
        $region15: #{net_forward.3} parent=11 // pred_region
          _
        $region16: #{net_forward.3} parent=11 // pred_fallthru
          _
        // Predicated region
        $region17: #{net_forward.3} parent=11 // pred_check
          %p121 = pneg %p77
        $region18: #{net_forward.3} parent=11 // pred_check_branch
          %123 = sbr.rel (%p121) target = $region20
        $region19: #{net_forward.3} parent=11 // pred_region
          _
        $region20: #{net_forward.3} parent=11 // pred_fallthru
          _
      $region12: #{net_forward.3} parent=5 // pred_fallthru
        _
      %p124 = scmp.lt.s32.totalorder %s9, 2
      // Predicated region
      $region21: #{net_forward.3} parent=5 // pred_check
        %p125 = pneg %p124
      $region22: #{net_forward.3} parent=5 // pred_check_branch
        %127 = sbr.rel (%p125) target = $region24
      $region23: #{net_forward.3} parent=5 // pred_region
        // Predicated region
        $region25: #{net_forward.3} parent=23 // pred_check
          %p128 = pneg %p29
        $region26: #{net_forward.3} parent=23 // pred_check_branch
          %130 = sbr.rel (%p128) target = $region28
        $region27: #{net_forward.3} parent=23 // pred_region
          %s131 = sand.u32 %s19, 1
          %s132 = sand.u32 %s19, 1
          %s133 = smul.addr %s132, 288
          %s134 = scalar_lea.vmem [#allocation2], %s133
          %s135 = smul.u32 18, %s9
          %s136 = smul.addr %s135, 4
          %s137 = scalar_lea.vmem %s0, %s136
          // Predicated region
          $region29: #{net_forward.3} parent=27 // pred_check
            _
          $region30: #{net_forward.3} parent=27 // pred_check_branch
            %139 = sbr.rel (0) target = $region32
          $region31: #{net_forward.3} parent=27 // pred_region
            // Predicated region
            $region33: #{net_forward.3} parent=31 // pred_check
              _
            $region34: #{net_forward.3} parent=31 // pred_check_branch
              %141 = sbr.rel target = $region36
            $region35: #{net_forward.3} parent=31 // pred_region
              // Predicated region
              $region48: #{net_forward.3} parent=35 // pred_check
                _
              $region49: #{net_forward.3} parent=35 // pred_check_branch
                %299 = sbr.rel (0) target = $region51
              $region50: #{net_forward.3} parent=35 // pred_region
                loop: start=0, step=1, limit=1
                $region52: #{net_forward.3} parent=50 // loop_pre_header
                  _
                $region53: #{net_forward.3} parent=50 // loop_header
                  %s301 = sphi 0, %s305
                  %p302 = scmp.ge.s32.totalorder %s301, 1
                  %s306 = sphi %s137, %s137
                  %s307 = sphi %s134, %s134
                $region54: #{net_forward.3} parent=50 // loop_header_branch
                  %304 = sbr.rel (%p302) target = $region58
                $region55: #{net_forward.3} parent=50 // loop_body
                  _
                $region56: #{net_forward.3} parent=50 // loop_footer
                  %s305 = sadd.s32 1, %s301
                $region57: #{net_forward.3} parent=50 // loop_footer_branch
                  %300 = sbr.rel target = $region53
                $region58: #{net_forward.3} parent=50 // loop_exit
                  _
                %s309 = ssub.s32 16, 1
                loop: start=0, step=1, limit=1
                $region59: #{net_forward.3} parent=50 // loop_pre_header
                  _
                $region60: #{net_forward.3} parent=50 // loop_header
                  %s311 = sphi 0, %s315
                  %p312 = scmp.ge.s32.totalorder %s311, 1
                  %s316 = sphi %s137, %s137
                  %s317 = sphi %s134, %s134
                $region61: #{net_forward.3} parent=50 // loop_header_branch
                  %314 = sbr.rel (%p312) target = $region65
                $region62: #{net_forward.3} parent=50 // loop_body
                  %v318 = vld [vmem:[%s316] sm:%s309]
                  %319 = vst [vmem:[%s317] sm:%s309] %v318
                  %v320 = vld [vmem:[%s316 + $0x4] sm:%s309]
                  %321 = vst [vmem:[%s317 + $0x4] sm:%s309] %v320
                  %v322 = vld [vmem:[%s316 + $0x8] sm:%s309]
                  %323 = vst [vmem:[%s317 + $0x8] sm:%s309] %v322
                  %v324 = vld [vmem:[%s316 + $0xc] sm:%s309]
                  %325 = vst [vmem:[%s317 + $0xc] sm:%s309] %v324
                  %v326 = vld [vmem:[%s316 + $0x10] sm:%s309]
                  %327 = vst [vmem:[%s317 + $0x10] sm:%s309] %v326
                  %v328 = vld [vmem:[%s316 + $0x14] sm:%s309]
                  %329 = vst [vmem:[%s317 + $0x14] sm:%s309] %v328
                  %v330 = vld [vmem:[%s316 + $0x18] sm:%s309]
                  %331 = vst [vmem:[%s317 + $0x18] sm:%s309] %v330
                  %v332 = vld [vmem:[%s316 + $0x1c] sm:%s309]
                  %333 = vst [vmem:[%s317 + $0x1c] sm:%s309] %v332
                  %v334 = vld [vmem:[%s316 + $0x20] sm:%s309]
                  %335 = vst [vmem:[%s317 + $0x20] sm:%s309] %v334
                  %v336 = vld [vmem:[%s316 + $0x24] sm:%s309]
                  %337 = vst [vmem:[%s317 + $0x24] sm:%s309] %v336
                  %v338 = vld [vmem:[%s316 + $0x28] sm:%s309]
                  %339 = vst [vmem:[%s317 + $0x28] sm:%s309] %v338
                  %v340 = vld [vmem:[%s316 + $0x2c] sm:%s309]
                  %341 = vst [vmem:[%s317 + $0x2c] sm:%s309] %v340
                  %v342 = vld [vmem:[%s316 + $0x30] sm:%s309]
                  %343 = vst [vmem:[%s317 + $0x30] sm:%s309] %v342
                  %v344 = vld [vmem:[%s316 + $0x34] sm:%s309]
                  %345 = vst [vmem:[%s317 + $0x34] sm:%s309] %v344
                  %v346 = vld [vmem:[%s316 + $0x38] sm:%s309]
                  %347 = vst [vmem:[%s317 + $0x38] sm:%s309] %v346
                  %v348 = vld [vmem:[%s316 + $0x3c] sm:%s309]
                  %349 = vst [vmem:[%s317 + $0x3c] sm:%s309] %v348
                  %v350 = vld [vmem:[%s316 + $0x40] sm:%s309]
                  %351 = vst [vmem:[%s317 + $0x40] sm:%s309] %v350
                  %v352 = vld [vmem:[%s316 + $0x44] sm:%s309]
                  %353 = vst [vmem:[%s317 + $0x44] sm:%s309] %v352
                  %v354 = vld [vmem:[%s316 + $0x90] sm:%s309]
                  %355 = vst [vmem:[%s317 + $0x48] sm:%s309] %v354
                  %v356 = vld [vmem:[%s316 + $0x94] sm:%s309]
                  %357 = vst [vmem:[%s317 + $0x4c] sm:%s309] %v356
                  %v358 = vld [vmem:[%s316 + $0x98] sm:%s309]
                  %359 = vst [vmem:[%s317 + $0x50] sm:%s309] %v358
                  %v360 = vld [vmem:[%s316 + $0x9c] sm:%s309]
                  %361 = vst [vmem:[%s317 + $0x54] sm:%s309] %v360
                  %v362 = vld [vmem:[%s316 + $0xa0] sm:%s309]
                  %363 = vst [vmem:[%s317 + $0x58] sm:%s309] %v362
                  %v364 = vld [vmem:[%s316 + $0xa4] sm:%s309]
                  %365 = vst [vmem:[%s317 + $0x5c] sm:%s309] %v364
                  %v366 = vld [vmem:[%s316 + $0xa8] sm:%s309]
                  %367 = vst [vmem:[%s317 + $0x60] sm:%s309] %v366
                  %v368 = vld [vmem:[%s316 + $0xac] sm:%s309]
                  %369 = vst [vmem:[%s317 + $0x64] sm:%s309] %v368
                  %v370 = vld [vmem:[%s316 + $0xb0] sm:%s309]
                  %371 = vst [vmem:[%s317 + $0x68] sm:%s309] %v370
                  %v372 = vld [vmem:[%s316 + $0xb4] sm:%s309]
                  %373 = vst [vmem:[%s317 + $0x6c] sm:%s309] %v372
                  %v374 = vld [vmem:[%s316 + $0xb8] sm:%s309]
                  %375 = vst [vmem:[%s317 + $0x70] sm:%s309] %v374
                  %v376 = vld [vmem:[%s316 + $0xbc] sm:%s309]
                  %377 = vst [vmem:[%s317 + $0x74] sm:%s309] %v376
                  %v378 = vld [vmem:[%s316 + $0xc0] sm:%s309]
                  %379 = vst [vmem:[%s317 + $0x78] sm:%s309] %v378
                  %v380 = vld [vmem:[%s316 + $0xc4] sm:%s309]
                  %381 = vst [vmem:[%s317 + $0x7c] sm:%s309] %v380
                  %v382 = vld [vmem:[%s316 + $0xc8] sm:%s309]
                  %383 = vst [vmem:[%s317 + $0x80] sm:%s309] %v382
                  %v384 = vld [vmem:[%s316 + $0xcc] sm:%s309]
                  %385 = vst [vmem:[%s317 + $0x84] sm:%s309] %v384
                  %v386 = vld [vmem:[%s316 + $0xd0] sm:%s309]
                  %387 = vst [vmem:[%s317 + $0x88] sm:%s309] %v386
                  %v388 = vld [vmem:[%s316 + $0xd4] sm:%s309]
                  %389 = vst [vmem:[%s317 + $0x8c] sm:%s309] %v388
                  %v390 = vld [vmem:[%s316 + $0x120] sm:%s309]
                  %391 = vst [vmem:[%s317 + $0x90] sm:%s309] %v390
                  %v392 = vld [vmem:[%s316 + $0x124] sm:%s309]
                  %393 = vst [vmem:[%s317 + $0x94] sm:%s309] %v392
                  %v394 = vld [vmem:[%s316 + $0x128] sm:%s309]
                  %395 = vst [vmem:[%s317 + $0x98] sm:%s309] %v394
                  %v396 = vld [vmem:[%s316 + $0x12c] sm:%s309]
                  %397 = vst [vmem:[%s317 + $0x9c] sm:%s309] %v396
                  %v398 = vld [vmem:[%s316 + $0x130] sm:%s309]
                  %399 = vst [vmem:[%s317 + $0xa0] sm:%s309] %v398
                  %v400 = vld [vmem:[%s316 + $0x134] sm:%s309]
                  %401 = vst [vmem:[%s317 + $0xa4] sm:%s309] %v400
                  %v402 = vld [vmem:[%s316 + $0x138] sm:%s309]
                  %403 = vst [vmem:[%s317 + $0xa8] sm:%s309] %v402
                  %v404 = vld [vmem:[%s316 + $0x13c] sm:%s309]
                  %405 = vst [vmem:[%s317 + $0xac] sm:%s309] %v404
                  %v406 = vld [vmem:[%s316 + $0x140] sm:%s309]
                  %407 = vst [vmem:[%s317 + $0xb0] sm:%s309] %v406
                  %v408 = vld [vmem:[%s316 + $0x144] sm:%s309]
                  %409 = vst [vmem:[%s317 + $0xb4] sm:%s309] %v408
                  %v410 = vld [vmem:[%s316 + $0x148] sm:%s309]
                  %411 = vst [vmem:[%s317 + $0xb8] sm:%s309] %v410
                  %v412 = vld [vmem:[%s316 + $0x14c] sm:%s309]
                  %413 = vst [vmem:[%s317 + $0xbc] sm:%s309] %v412
                  %v414 = vld [vmem:[%s316 + $0x150] sm:%s309]
                  %415 = vst [vmem:[%s317 + $0xc0] sm:%s309] %v414
                  %v416 = vld [vmem:[%s316 + $0x154] sm:%s309]
                  %417 = vst [vmem:[%s317 + $0xc4] sm:%s309] %v416
                  %v418 = vld [vmem:[%s316 + $0x158] sm:%s309]
                  %419 = vst [vmem:[%s317 + $0xc8] sm:%s309] %v418
                  %v420 = vld [vmem:[%s316 + $0x15c] sm:%s309]
                  %421 = vst [vmem:[%s317 + $0xcc] sm:%s309] %v420
                  %v422 = vld [vmem:[%s316 + $0x160] sm:%s309]
                  %423 = vst [vmem:[%s317 + $0xd0] sm:%s309] %v422
                  %v424 = vld [vmem:[%s316 + $0x164] sm:%s309]
                  %425 = vst [vmem:[%s317 + $0xd4] sm:%s309] %v424
                  %v426 = vld [vmem:[%s316 + $0x1b0] sm:%s309]
                  %427 = vst [vmem:[%s317 + $0xd8] sm:%s309] %v426
                  %v428 = vld [vmem:[%s316 + $0x1b4] sm:%s309]
                  %429 = vst [vmem:[%s317 + $0xdc] sm:%s309] %v428
                  %v430 = vld [vmem:[%s316 + $0x1b8] sm:%s309]
                  %431 = vst [vmem:[%s317 + $0xe0] sm:%s309] %v430
                  %v432 = vld [vmem:[%s316 + $0x1bc] sm:%s309]
                  %433 = vst [vmem:[%s317 + $0xe4] sm:%s309] %v432
                  %v434 = vld [vmem:[%s316 + $0x1c0] sm:%s309]
                  %435 = vst [vmem:[%s317 + $0xe8] sm:%s309] %v434
                  %v436 = vld [vmem:[%s316 + $0x1c4] sm:%s309]
                  %437 = vst [vmem:[%s317 + $0xec] sm:%s309] %v436
                  %v438 = vld [vmem:[%s316 + $0x1c8] sm:%s309]
                  %439 = vst [vmem:[%s317 + $0xf0] sm:%s309] %v438
                  %v440 = vld [vmem:[%s316 + $0x1cc] sm:%s309]
                  %441 = vst [vmem:[%s317 + $0xf4] sm:%s309] %v440
                  %v442 = vld [vmem:[%s316 + $0x1d0] sm:%s309]
                  %443 = vst [vmem:[%s317 + $0xf8] sm:%s309] %v442
                  %v444 = vld [vmem:[%s316 + $0x1d4] sm:%s309]
                  %445 = vst [vmem:[%s317 + $0xfc] sm:%s309] %v444
                  %v446 = vld [vmem:[%s316 + $0x1d8] sm:%s309]
                  %447 = vst [vmem:[%s317 + $0x100] sm:%s309] %v446
                  %v448 = vld [vmem:[%s316 + $0x1dc] sm:%s309]
                  %449 = vst [vmem:[%s317 + $0x104] sm:%s309] %v448
                  %v450 = vld [vmem:[%s316 + $0x1e0] sm:%s309]
                  %451 = vst [vmem:[%s317 + $0x108] sm:%s309] %v450
                  %v452 = vld [vmem:[%s316 + $0x1e4] sm:%s309]
                  %453 = vst [vmem:[%s317 + $0x10c] sm:%s309] %v452
                  %v454 = vld [vmem:[%s316 + $0x1e8] sm:%s309]
                  %455 = vst [vmem:[%s317 + $0x110] sm:%s309] %v454
                  %v456 = vld [vmem:[%s316 + $0x1ec] sm:%s309]
                  %457 = vst [vmem:[%s317 + $0x114] sm:%s309] %v456
                  %v458 = vld [vmem:[%s316 + $0x1f0] sm:%s309]
                  %459 = vst [vmem:[%s317 + $0x118] sm:%s309] %v458
                  %v460 = vld [vmem:[%s316 + $0x1f4] sm:%s309]
                  %461 = vst [vmem:[%s317 + $0x11c] sm:%s309] %v460
                $region63: #{net_forward.3} parent=50 // loop_footer
                  %s315 = sadd.s32 1, %s311
                $region64: #{net_forward.3} parent=50 // loop_footer_branch
                  %310 = sbr.rel target = $region60
                $region65: #{net_forward.3} parent=50 // loop_exit
                  _
              $region51: #{net_forward.3} parent=35 // pred_fallthru
                _
            $region36: #{net_forward.3} parent=31 // pred_fallthru
              _
            // Predicated region
            $region37: #{net_forward.3} parent=31 // pred_check
              _
            $region38: #{net_forward.3} parent=31 // pred_check_branch
              %143 = sbr.rel (0) target = $region40
            $region39: #{net_forward.3} parent=31 // pred_region
              %s145 = ssub.s32 16, 1
              loop: start=0, step=1, limit=1
              $region41: #{net_forward.3} parent=39 // loop_pre_header
                _
              $region42: #{net_forward.3} parent=39 // loop_header
                %s147 = sphi 0, %s151
                %p148 = scmp.ge.s32.totalorder %s147, 1
                %s152 = sphi %s137, %s137
                %s153 = sphi %s134, %s134
              $region43: #{net_forward.3} parent=39 // loop_header_branch
                %150 = sbr.rel (%p148) target = $region47
              $region44: #{net_forward.3} parent=39 // loop_body
                %v154 = vld [vmem:[%s152] sm:%s145]
                %155 = vst [vmem:[%s153] sm:%s145] %v154
                %v156 = vld [vmem:[%s152 + $0x4] sm:%s145]
                %157 = vst [vmem:[%s153 + $0x4] sm:%s145] %v156
                %v158 = vld [vmem:[%s152 + $0x8] sm:%s145]
                %159 = vst [vmem:[%s153 + $0x8] sm:%s145] %v158
                %v160 = vld [vmem:[%s152 + $0xc] sm:%s145]
                %161 = vst [vmem:[%s153 + $0xc] sm:%s145] %v160
                %v162 = vld [vmem:[%s152 + $0x10] sm:%s145]
                %163 = vst [vmem:[%s153 + $0x10] sm:%s145] %v162
                %v164 = vld [vmem:[%s152 + $0x14] sm:%s145]
                %165 = vst [vmem:[%s153 + $0x14] sm:%s145] %v164
                %v166 = vld [vmem:[%s152 + $0x18] sm:%s145]
                %167 = vst [vmem:[%s153 + $0x18] sm:%s145] %v166
                %v168 = vld [vmem:[%s152 + $0x1c] sm:%s145]
                %169 = vst [vmem:[%s153 + $0x1c] sm:%s145] %v168
                %v170 = vld [vmem:[%s152 + $0x20] sm:%s145]
                %171 = vst [vmem:[%s153 + $0x20] sm:%s145] %v170
                %v172 = vld [vmem:[%s152 + $0x24] sm:%s145]
                %173 = vst [vmem:[%s153 + $0x24] sm:%s145] %v172
                %v174 = vld [vmem:[%s152 + $0x28] sm:%s145]
                %175 = vst [vmem:[%s153 + $0x28] sm:%s145] %v174
                %v176 = vld [vmem:[%s152 + $0x2c] sm:%s145]
                %177 = vst [vmem:[%s153 + $0x2c] sm:%s145] %v176
                %v178 = vld [vmem:[%s152 + $0x30] sm:%s145]
                %179 = vst [vmem:[%s153 + $0x30] sm:%s145] %v178
                %v180 = vld [vmem:[%s152 + $0x34] sm:%s145]
                %181 = vst [vmem:[%s153 + $0x34] sm:%s145] %v180
                %v182 = vld [vmem:[%s152 + $0x38] sm:%s145]
                %183 = vst [vmem:[%s153 + $0x38] sm:%s145] %v182
                %v184 = vld [vmem:[%s152 + $0x3c] sm:%s145]
                %185 = vst [vmem:[%s153 + $0x3c] sm:%s145] %v184
                %v186 = vld [vmem:[%s152 + $0x40] sm:%s145]
                %187 = vst [vmem:[%s153 + $0x40] sm:%s145] %v186
                %v188 = vld [vmem:[%s152 + $0x44] sm:%s145]
                %189 = vst [vmem:[%s153 + $0x44] sm:%s145] %v188
                %v190 = vld [vmem:[%s152 + $0x90] sm:%s145]
                %191 = vst [vmem:[%s153 + $0x48] sm:%s145] %v190
                %v192 = vld [vmem:[%s152 + $0x94] sm:%s145]
                %193 = vst [vmem:[%s153 + $0x4c] sm:%s145] %v192
                %v194 = vld [vmem:[%s152 + $0x98] sm:%s145]
                %195 = vst [vmem:[%s153 + $0x50] sm:%s145] %v194
                %v196 = vld [vmem:[%s152 + $0x9c] sm:%s145]
                %197 = vst [vmem:[%s153 + $0x54] sm:%s145] %v196
                %v198 = vld [vmem:[%s152 + $0xa0] sm:%s145]
                %199 = vst [vmem:[%s153 + $0x58] sm:%s145] %v198
                %v200 = vld [vmem:[%s152 + $0xa4] sm:%s145]
                %201 = vst [vmem:[%s153 + $0x5c] sm:%s145] %v200
                %v202 = vld [vmem:[%s152 + $0xa8] sm:%s145]
                %203 = vst [vmem:[%s153 + $0x60] sm:%s145] %v202
                %v204 = vld [vmem:[%s152 + $0xac] sm:%s145]
                %205 = vst [vmem:[%s153 + $0x64] sm:%s145] %v204
                %v206 = vld [vmem:[%s152 + $0xb0] sm:%s145]
                %207 = vst [vmem:[%s153 + $0x68] sm:%s145] %v206
                %v208 = vld [vmem:[%s152 + $0xb4] sm:%s145]
                %209 = vst [vmem:[%s153 + $0x6c] sm:%s145] %v208
                %v210 = vld [vmem:[%s152 + $0xb8] sm:%s145]
                %211 = vst [vmem:[%s153 + $0x70] sm:%s145] %v210
                %v212 = vld [vmem:[%s152 + $0xbc] sm:%s145]
                %213 = vst [vmem:[%s153 + $0x74] sm:%s145] %v212
                %v214 = vld [vmem:[%s152 + $0xc0] sm:%s145]
                %215 = vst [vmem:[%s153 + $0x78] sm:%s145] %v214
                %v216 = vld [vmem:[%s152 + $0xc4] sm:%s145]
                %217 = vst [vmem:[%s153 + $0x7c] sm:%s145] %v216
                %v218 = vld [vmem:[%s152 + $0xc8] sm:%s145]
                %219 = vst [vmem:[%s153 + $0x80] sm:%s145] %v218
                %v220 = vld [vmem:[%s152 + $0xcc] sm:%s145]
                %221 = vst [vmem:[%s153 + $0x84] sm:%s145] %v220
                %v222 = vld [vmem:[%s152 + $0xd0] sm:%s145]
                %223 = vst [vmem:[%s153 + $0x88] sm:%s145] %v222
                %v224 = vld [vmem:[%s152 + $0xd4] sm:%s145]
                %225 = vst [vmem:[%s153 + $0x8c] sm:%s145] %v224
                %v226 = vld [vmem:[%s152 + $0x120] sm:%s145]
                %227 = vst [vmem:[%s153 + $0x90] sm:%s145] %v226
                %v228 = vld [vmem:[%s152 + $0x124] sm:%s145]
                %229 = vst [vmem:[%s153 + $0x94] sm:%s145] %v228
                %v230 = vld [vmem:[%s152 + $0x128] sm:%s145]
                %231 = vst [vmem:[%s153 + $0x98] sm:%s145] %v230
                %v232 = vld [vmem:[%s152 + $0x12c] sm:%s145]
                %233 = vst [vmem:[%s153 + $0x9c] sm:%s145] %v232
                %v234 = vld [vmem:[%s152 + $0x130] sm:%s145]
                %235 = vst [vmem:[%s153 + $0xa0] sm:%s145] %v234
                %v236 = vld [vmem:[%s152 + $0x134] sm:%s145]
                %237 = vst [vmem:[%s153 + $0xa4] sm:%s145] %v236
                %v238 = vld [vmem:[%s152 + $0x138] sm:%s145]
                %239 = vst [vmem:[%s153 + $0xa8] sm:%s145] %v238
                %v240 = vld [vmem:[%s152 + $0x13c] sm:%s145]
                %241 = vst [vmem:[%s153 + $0xac] sm:%s145] %v240
                %v242 = vld [vmem:[%s152 + $0x140] sm:%s145]
                %243 = vst [vmem:[%s153 + $0xb0] sm:%s145] %v242
                %v244 = vld [vmem:[%s152 + $0x144] sm:%s145]
                %245 = vst [vmem:[%s153 + $0xb4] sm:%s145] %v244
                %v246 = vld [vmem:[%s152 + $0x148] sm:%s145]
                %247 = vst [vmem:[%s153 + $0xb8] sm:%s145] %v246
                %v248 = vld [vmem:[%s152 + $0x14c] sm:%s145]
                %249 = vst [vmem:[%s153 + $0xbc] sm:%s145] %v248
                %v250 = vld [vmem:[%s152 + $0x150] sm:%s145]
                %251 = vst [vmem:[%s153 + $0xc0] sm:%s145] %v250
                %v252 = vld [vmem:[%s152 + $0x154] sm:%s145]
                %253 = vst [vmem:[%s153 + $0xc4] sm:%s145] %v252
                %v254 = vld [vmem:[%s152 + $0x158] sm:%s145]
                %255 = vst [vmem:[%s153 + $0xc8] sm:%s145] %v254
                %v256 = vld [vmem:[%s152 + $0x15c] sm:%s145]
                %257 = vst [vmem:[%s153 + $0xcc] sm:%s145] %v256
                %v258 = vld [vmem:[%s152 + $0x160] sm:%s145]
                %259 = vst [vmem:[%s153 + $0xd0] sm:%s145] %v258
                %v260 = vld [vmem:[%s152 + $0x164] sm:%s145]
                %261 = vst [vmem:[%s153 + $0xd4] sm:%s145] %v260
                %v262 = vld [vmem:[%s152 + $0x1b0] sm:%s145]
                %263 = vst [vmem:[%s153 + $0xd8] sm:%s145] %v262
                %v264 = vld [vmem:[%s152 + $0x1b4] sm:%s145]
                %265 = vst [vmem:[%s153 + $0xdc] sm:%s145] %v264
                %v266 = vld [vmem:[%s152 + $0x1b8] sm:%s145]
                %267 = vst [vmem:[%s153 + $0xe0] sm:%s145] %v266
                %v268 = vld [vmem:[%s152 + $0x1bc] sm:%s145]
                %269 = vst [vmem:[%s153 + $0xe4] sm:%s145] %v268
                %v270 = vld [vmem:[%s152 + $0x1c0] sm:%s145]
                %271 = vst [vmem:[%s153 + $0xe8] sm:%s145] %v270
                %v272 = vld [vmem:[%s152 + $0x1c4] sm:%s145]
                %273 = vst [vmem:[%s153 + $0xec] sm:%s145] %v272
                %v274 = vld [vmem:[%s152 + $0x1c8] sm:%s145]
                %275 = vst [vmem:[%s153 + $0xf0] sm:%s145] %v274
                %v276 = vld [vmem:[%s152 + $0x1cc] sm:%s145]
                %277 = vst [vmem:[%s153 + $0xf4] sm:%s145] %v276
                %v278 = vld [vmem:[%s152 + $0x1d0] sm:%s145]
                %279 = vst [vmem:[%s153 + $0xf8] sm:%s145] %v278
                %v280 = vld [vmem:[%s152 + $0x1d4] sm:%s145]
                %281 = vst [vmem:[%s153 + $0xfc] sm:%s145] %v280
                %v282 = vld [vmem:[%s152 + $0x1d8] sm:%s145]
                %283 = vst [vmem:[%s153 + $0x100] sm:%s145] %v282
                %v284 = vld [vmem:[%s152 + $0x1dc] sm:%s145]
                %285 = vst [vmem:[%s153 + $0x104] sm:%s145] %v284
                %v286 = vld [vmem:[%s152 + $0x1e0] sm:%s145]
                %287 = vst [vmem:[%s153 + $0x108] sm:%s145] %v286
                %v288 = vld [vmem:[%s152 + $0x1e4] sm:%s145]
                %289 = vst [vmem:[%s153 + $0x10c] sm:%s145] %v288
                %v290 = vld [vmem:[%s152 + $0x1e8] sm:%s145]
                %291 = vst [vmem:[%s153 + $0x110] sm:%s145] %v290
                %v292 = vld [vmem:[%s152 + $0x1ec] sm:%s145]
                %293 = vst [vmem:[%s153 + $0x114] sm:%s145] %v292
                %v294 = vld [vmem:[%s152 + $0x1f0] sm:%s145]
                %295 = vst [vmem:[%s153 + $0x118] sm:%s145] %v294
                %v296 = vld [vmem:[%s152 + $0x1f4] sm:%s145]
                %297 = vst [vmem:[%s153 + $0x11c] sm:%s145] %v296
              $region45: #{net_forward.3} parent=39 // loop_footer
                %s151 = sadd.s32 1, %s147
              $region46: #{net_forward.3} parent=39 // loop_footer_branch
                %146 = sbr.rel target = $region42
              $region47: #{net_forward.3} parent=39 // loop_exit
                _
            $region40: #{net_forward.3} parent=31 // pred_fallthru
              _
          $region32: #{net_forward.3} parent=27 // pred_fallthru
            _
          %462 = vnop
        $region28: #{net_forward.3} parent=23 // pred_fallthru
          _
      $region24: #{net_forward.3} parent=5 // pred_fallthru
        _
      %p463 = scmp.le.s32.totalorder 1, %s9
      %p464 = scmp.lt.s32.totalorder %s9, 3
      %p465 = pnand %p463, %p464
      %p466 = pneg %p465
      // Predicated region
      $region66: #{net_forward.3} parent=5 // pred_check
        _
      $region67: #{net_forward.3} parent=5 // pred_check_branch
        %468 = sbr.rel (%p465) target = $region69
      $region68: #{net_forward.3} parent=5 // pred_region
        %s469 = ssub.s32 %s9, 1
        %s470 = sand.u32 %s22, 1
        %s471 = sand.u32 %s22, 1
        %s472 = smul.addr %s471, 288
        %s473 = scalar_lea.vmem [#allocation2], %s472
        // Predicated region
        $region70: #{net_forward.3} parent=68 // pred_check
          %p474 = pneg %p35
        $region71: #{net_forward.3} parent=68 // pred_check_branch
          %476 = sbr.rel (%p474) target = $region73
        $region72: #{net_forward.3} parent=68 // pred_region
          _
        $region73: #{net_forward.3} parent=68 // pred_fallthru
          _
        %s477 = sand.u32 %s22, 1
        %s478 = sand.u32 %s22, 1
        %s479 = smul.addr %s478, 288
        %s480 = scalar_lea.vmem [#allocation2], %s479
        %p481 = pneg %p35
        %p482 = pneg %p32
        %p483 = pneg %p56
        %p484 = pneg %p53
        %p485 = pneg %p77
        %p486 = pneg %p74
        %p487 = pneg %p103
        %p488 = pneg %p100
        %s489 = smul.u32 18, %s14
        %p490 = scmp.lt.s32.totalorder %s489, 35
        %s491 = scalar_select %p490, %s489, 35
        %s492 = smul.addr %s491, 4
        %s493 = scalar_lea.vmem %s3, %s492
        %s494 = smul.u32 18, %s14
        %s495 = smul.u32 18, %s14
        %p496 = scmp.lt.s32.totalorder %s495, 35
        %s497 = scalar_select %p496, %s495, 35
        %s498 = smul.addr %s497, 4
        %s499 = scalar_lea.vmem %s3, %s498
        %s500 = smul.u32 18, %s14
        %v502 = vld [vmem:[%s473] sm:$0xf]
        %v503 = vld [vmem:[%s473 + $0x4] sm:$0xf]
        %v504 = vld [vmem:[%s473 + $0x8] sm:$0xf]
        %v505 = vld [vmem:[%s473 + $0xc] sm:$0xf]
        %v506 = vld [vmem:[%s473 + $0x10] sm:$0xf]
        %v507 = vld [vmem:[%s473 + $0x14] sm:$0xf]
        %v508 = vld [vmem:[%s473 + $0x18] sm:$0xf]
        %v509 = vld [vmem:[%s473 + $0x1c] sm:$0xf]
        %v510 = vld [vmem:[%s473 + $0x20] sm:$0xf]
        %v511 = vld [vmem:[%s473 + $0x24] sm:$0xf]
        %v512 = vld [vmem:[%s473 + $0x28] sm:$0xf]
        %v513 = vld [vmem:[%s473 + $0x2c] sm:$0xf]
        %v514 = vld [vmem:[%s473 + $0x30] sm:$0xf]
        %v515 = vld [vmem:[%s473 + $0x34] sm:$0xf]
        %v516 = vld [vmem:[%s473 + $0x38] sm:$0xf]
        %v517 = vld [vmem:[%s473 + $0x3c] sm:$0xf]
        %v518 = vld [vmem:[%s473 + $0x40] sm:$0xf]
        %v519 = vld [vmem:[%s473 + $0x44] sm:$0xf]
        %v520 = vld [vmem:[%s473 + $0x48] sm:$0xf]
        %v521 = vld [vmem:[%s473 + $0x4c] sm:$0xf]
        %v522 = vld [vmem:[%s473 + $0x50] sm:$0xf]
        %v523 = vld [vmem:[%s473 + $0x54] sm:$0xf]
        %v524 = vld [vmem:[%s473 + $0x58] sm:$0xf]
        %v525 = vld [vmem:[%s473 + $0x5c] sm:$0xf]
        %v526 = vld [vmem:[%s473 + $0x60] sm:$0xf]
        %v527 = vld [vmem:[%s473 + $0x64] sm:$0xf]
        %v528 = vld [vmem:[%s473 + $0x68] sm:$0xf]
        %v529 = vld [vmem:[%s473 + $0x6c] sm:$0xf]
        %v530 = vld [vmem:[%s473 + $0x70] sm:$0xf]
        %v531 = vld [vmem:[%s473 + $0x74] sm:$0xf]
        %v532 = vld [vmem:[%s473 + $0x78] sm:$0xf]
        %v533 = vld [vmem:[%s473 + $0x7c] sm:$0xf]
        %v534 = vld [vmem:[%s473 + $0x80] sm:$0xf]
        %v535 = vld [vmem:[%s473 + $0x84] sm:$0xf]
        %v536 = vld [vmem:[%s473 + $0x88] sm:$0xf]
        %v537 = vld [vmem:[%s473 + $0x8c] sm:$0xf]
        %v538 = vld [vmem:[%s473 + $0x90] sm:$0xf]
        %v539 = vld [vmem:[%s473 + $0x94] sm:$0xf]
        %v540 = vld [vmem:[%s473 + $0x98] sm:$0xf]
        %v541 = vld [vmem:[%s473 + $0x9c] sm:$0xf]
        %v542 = vld [vmem:[%s473 + $0xa0] sm:$0xf]
        %v543 = vld [vmem:[%s473 + $0xa4] sm:$0xf]
        %v544 = vld [vmem:[%s473 + $0xa8] sm:$0xf]
        %v545 = vld [vmem:[%s473 + $0xac] sm:$0xf]
        %v546 = vld [vmem:[%s473 + $0xb0] sm:$0xf]
        %v547 = vld [vmem:[%s473 + $0xb4] sm:$0xf]
        %v548 = vld [vmem:[%s473 + $0xb8] sm:$0xf]
        %v549 = vld [vmem:[%s473 + $0xbc] sm:$0xf]
        %v550 = vld [vmem:[%s473 + $0xc0] sm:$0xf]
        %v551 = vld [vmem:[%s473 + $0xc4] sm:$0xf]
        %v552 = vld [vmem:[%s473 + $0xc8] sm:$0xf]
        %v553 = vld [vmem:[%s473 + $0xcc] sm:$0xf]
        %v554 = vld [vmem:[%s473 + $0xd0] sm:$0xf]
        %v555 = vld [vmem:[%s473 + $0xd4] sm:$0xf]
        %v556 = vld [vmem:[%s473 + $0xd8] sm:$0xf]
        %v557 = vld [vmem:[%s473 + $0xdc] sm:$0xf]
        %v558 = vld [vmem:[%s473 + $0xe0] sm:$0xf]
        %v559 = vld [vmem:[%s473 + $0xe4] sm:$0xf]
        %v560 = vld [vmem:[%s473 + $0xe8] sm:$0xf]
        %v561 = vld [vmem:[%s473 + $0xec] sm:$0xf]
        %v562 = vld [vmem:[%s473 + $0xf0] sm:$0xf]
        %v563 = vld [vmem:[%s473 + $0xf4] sm:$0xf]
        %v564 = vld [vmem:[%s473 + $0xf8] sm:$0xf]
        %v565 = vld [vmem:[%s473 + $0xfc] sm:$0xf]
        %v566 = vld [vmem:[%s473 + $0x100] sm:$0xf]
        %v567 = vld [vmem:[%s473 + $0x104] sm:$0xf]
        %v568 = vld [vmem:[%s473 + $0x108] sm:$0xf]
        %v569 = vld [vmem:[%s473 + $0x10c] sm:$0xf]
        %v570 = vld [vmem:[%s473 + $0x110] sm:$0xf]
        %v571 = vld [vmem:[%s473 + $0x114] sm:$0xf]
        %v572 = vld [vmem:[%s473 + $0x118] sm:$0xf]
        %v573 = vld [vmem:[%s473 + $0x11c] sm:$0xf]
        %v574 = vld [vmem:[%s1] sm:$0xf]
        %v575 = vld [vmem:[%s1 + $0x4] sm:$0xf]
        %v576 = vld [vmem:[%s1 + $0x8] sm:$0xf]
        %v577 = vld [vmem:[%s1 + $0xc] sm:$0x1]
        %v650 = vunpack.c.l.b16 %v502
        %v651 = vunpack.c.l.b16 %v503
        %v652 = vunpack.c.l.b16 %v504
        %v653 = vunpack.c.l.b16 %v505
        %v654 = vunpack.c.l.b16 %v506
        %v655 = vunpack.c.l.b16 %v507
        %v656 = vunpack.c.l.b16 %v508
        %v657 = vunpack.c.l.b16 %v509
        %v658 = vunpack.c.l.b16 %v510
        %v659 = vunpack.c.l.b16 %v511
        %v660 = vunpack.c.l.b16 %v512
        %v661 = vunpack.c.l.b16 %v513
        %v662 = vunpack.c.l.b16 %v514
        %v663 = vunpack.c.l.b16 %v515
        %v664 = vunpack.c.l.b16 %v516
        %v665 = vunpack.c.l.b16 %v517
        %v666 = vunpack.c.l.b16 %v518
        %v667 = vunpack.c.l.b16 %v519
        %v668 = vunpack.c.l.b16 %v520
        %v669 = vunpack.c.l.b16 %v521
        %v670 = vunpack.c.l.b16 %v522
        %v671 = vunpack.c.l.b16 %v523
        %v672 = vunpack.c.l.b16 %v524
        %v673 = vunpack.c.l.b16 %v525
        %v674 = vunpack.c.l.b16 %v526
        %v675 = vunpack.c.l.b16 %v527
        %v676 = vunpack.c.l.b16 %v528
        %v677 = vunpack.c.l.b16 %v529
        %v678 = vunpack.c.l.b16 %v530
        %v679 = vunpack.c.l.b16 %v531
        %v680 = vunpack.c.l.b16 %v532
        %v681 = vunpack.c.l.b16 %v533
        %v682 = vunpack.c.l.b16 %v534
        %v683 = vunpack.c.l.b16 %v535
        %v684 = vunpack.c.l.b16 %v536
        %v685 = vunpack.c.l.b16 %v537
        %v686 = vunpack.c.l.b16 %v538
        %v687 = vunpack.c.l.b16 %v539
        %v688 = vunpack.c.l.b16 %v540
        %v689 = vunpack.c.l.b16 %v541
        %v690 = vunpack.c.l.b16 %v542
        %v691 = vunpack.c.l.b16 %v543
        %v692 = vunpack.c.l.b16 %v544
        %v693 = vunpack.c.l.b16 %v545
        %v694 = vunpack.c.l.b16 %v546
        %v695 = vunpack.c.l.b16 %v547
        %v696 = vunpack.c.l.b16 %v548
        %v697 = vunpack.c.l.b16 %v549
        %v698 = vunpack.c.l.b16 %v550
        %v699 = vunpack.c.l.b16 %v551
        %v700 = vunpack.c.l.b16 %v552
        %v701 = vunpack.c.l.b16 %v553
        %v702 = vunpack.c.l.b16 %v554
        %v703 = vunpack.c.l.b16 %v555
        %v704 = vunpack.c.l.b16 %v556
        %v705 = vunpack.c.l.b16 %v557
        %v706 = vunpack.c.l.b16 %v558
        %v707 = vunpack.c.l.b16 %v559
        %v708 = vunpack.c.l.b16 %v560
        %v709 = vunpack.c.l.b16 %v561
        %v710 = vunpack.c.l.b16 %v562
        %v711 = vunpack.c.l.b16 %v563
        %v712 = vunpack.c.l.b16 %v564
        %v713 = vunpack.c.l.b16 %v565
        %v714 = vunpack.c.l.b16 %v566
        %v715 = vunpack.c.l.b16 %v567
        %v716 = vunpack.c.l.b16 %v568
        %v717 = vunpack.c.l.b16 %v569
        %v718 = vunpack.c.l.b16 %v570
        %v719 = vunpack.c.l.b16 %v571
        %v720 = vunpack.c.l.b16 %v572
        %v721 = vunpack.c.l.b16 %v573
        %v722 = vpack.c.b16 %v651, %v650
        %v723 = vpack.c.b16 %v653, %v652
        %v724 = vpack.c.b16 %v655, %v654
        %v725 = vpack.c.b16 %v657, %v656
        %v726 = vpack.c.b16 %v659, %v658
        %v727 = vpack.c.b16 %v661, %v660
        %v728 = vpack.c.b16 %v663, %v662
        %v729 = vpack.c.b16 %v665, %v664
        %v730 = vpack.c.b16 %v667, %v666
        %v731 = vpack.c.b16 %v669, %v668
        %v732 = vpack.c.b16 %v671, %v670
        %v733 = vpack.c.b16 %v673, %v672
        %v734 = vpack.c.b16 %v675, %v674
        %v735 = vpack.c.b16 %v677, %v676
        %v736 = vpack.c.b16 %v679, %v678
        %v737 = vpack.c.b16 %v681, %v680
        %v738 = vpack.c.b16 %v683, %v682
        %v739 = vpack.c.b16 %v685, %v684
        %v740 = vpack.c.b16 %v687, %v686
        %v741 = vpack.c.b16 %v689, %v688
        %v742 = vpack.c.b16 %v691, %v690
        %v743 = vpack.c.b16 %v693, %v692
        %v744 = vpack.c.b16 %v695, %v694
        %v745 = vpack.c.b16 %v697, %v696
        %v746 = vpack.c.b16 %v699, %v698
        %v747 = vpack.c.b16 %v701, %v700
        %v748 = vpack.c.b16 %v703, %v702
        %v749 = vpack.c.b16 %v705, %v704
        %v750 = vpack.c.b16 %v707, %v706
        %v751 = vpack.c.b16 %v709, %v708
        %v752 = vpack.c.b16 %v711, %v710
        %v753 = vpack.c.b16 %v713, %v712
        %v754 = vpack.c.b16 %v715, %v714
        %v755 = vpack.c.b16 %v717, %v716
        %v756 = vpack.c.b16 %v719, %v718
        %v757 = vpack.c.b16 %v721, %v720
        %v762 = vunpack.c.l.b16 %v574
        %v763 = vunpack.c.l.b16 %v575
        %v764 = vunpack.c.l.b16 %v576
        %v765 = vunpack.c.l.b16 %v577
        %v766 = vpack.c.b16 %v763, %v762
        %v767 = vpack.c.b16 %v765, %v764
        %vm769 = vcmask 203776
        %v771 = vsel %vm769, %v722, 0
        %v774 = vsel %vm769, %v723, 0
        %v777 = vsel %vm769, %v724, 0
        %v780 = vsel %vm769, %v725, 0
        %v783 = vsel %vm769, %v726, 0
        %v786 = vsel %vm769, %v727, 0
        %v789 = vsel %vm769, %v728, 0
        %v792 = vsel %vm769, %v729, 0
        %v795 = vsel %vm769, %v730, 0
        %v798 = vsel %vm769, %v731, 0
        %v801 = vsel %vm769, %v732, 0
        %v804 = vsel %vm769, %v733, 0
        %v807 = vsel %vm769, %v734, 0
        %v810 = vsel %vm769, %v735, 0
        %v813 = vsel %vm769, %v736, 0
        %v816 = vsel %vm769, %v737, 0
        %v819 = vsel %vm769, %v738, 0
        %v822 = vsel %vm769, %v739, 0
        %v825 = vsel %vm769, %v740, 0
        %v828 = vsel %vm769, %v741, 0
        %v831 = vsel %vm769, %v742, 0
        %v834 = vsel %vm769, %v743, 0
        %v837 = vsel %vm769, %v744, 0
        %v840 = vsel %vm769, %v745, 0
        %v843 = vsel %vm769, %v746, 0
        %v846 = vsel %vm769, %v747, 0
        %v849 = vsel %vm769, %v748, 0
        %v852 = vsel %vm769, %v749, 0
        %v855 = vsel %vm769, %v750, 0
        %v858 = vsel %vm769, %v751, 0
        %v861 = vsel %vm769, %v752, 0
        %v864 = vsel %vm769, %v753, 0
        %v867 = vsel %vm769, %v754, 0
        %v870 = vsel %vm769, %v755, 0
        %v873 = vsel %vm769, %v756, 0
        %v876 = vsel %vm769, %v757, 0
        %vm878 = vcmask 1043456
        %vm879 = vcmask 1044480
        %v880 = vsel %vm878, 4294967295, 65535
        %v881 = vsel %vm879, %v880, 0
        %v883 = vand.u32 %v767, %v881
        %885 = vmatpush.bf16.msra.mxu0 0
        %886 = vmatpush.bf16.msra.mxu0 0
        %887 = vmatpush.bf16.msra.mxu0 0
        %888 = vmatpush.bf16.msra.mxu0 0
        %889 = vmatpush.bf16.msra.mxu0 0
        %890 = vmatpush.bf16.msra.mxu0 0
        %891 = vmatpush.bf16.msra.mxu0 %v883
        %892 = vmatpush.bf16.msra.mxu0 %v766
        %893 = vmatmul.bf16.gmra.mxu0 %v771
        %v894 = vpop.f32.mrf.mxu0
        %v895 = vadd.f32 0.0, %v894
        %v896 = vpop.f32.mrf.mxu0
        %v897 = vadd.f32 0.0, %v896
        %898 = vmatmul.bf16.gmra.mxu0 %v774
        %v899 = vpop.f32.mrf.mxu0
        %v900 = vadd.f32 0.0, %v899
        %v901 = vpop.f32.mrf.mxu0
        %v902 = vadd.f32 0.0, %v901
        %903 = vmatmul.bf16.gmra.mxu0 %v777
        %v904 = vpop.f32.mrf.mxu0
        %v905 = vadd.f32 0.0, %v904
        %v906 = vpop.f32.mrf.mxu0
        %v907 = vadd.f32 0.0, %v906
        %908 = vmatmul.bf16.gmra.mxu0 %v780
        %v909 = vpop.f32.mrf.mxu0
        %v910 = vadd.f32 0.0, %v909
        %v911 = vpop.f32.mrf.mxu0
        %v912 = vadd.f32 0.0, %v911
        %913 = vmatmul.bf16.gmra.mxu0 %v783
        %v914 = vpop.f32.mrf.mxu0
        %v915 = vadd.f32 0.0, %v914
        %v916 = vpop.f32.mrf.mxu0
        %v917 = vadd.f32 0.0, %v916
        %918 = vmatmul.bf16.gmra.mxu0 %v786
        %v919 = vpop.f32.mrf.mxu0
        %v920 = vadd.f32 0.0, %v919
        %v921 = vpop.f32.mrf.mxu0
        %v922 = vadd.f32 0.0, %v921
        %923 = vmatmul.bf16.gmra.mxu0 %v789
        %v924 = vpop.f32.mrf.mxu0
        %v925 = vadd.f32 0.0, %v924
        %v926 = vpop.f32.mrf.mxu0
        %v927 = vadd.f32 0.0, %v926
        %928 = vmatmul.bf16.gmra.mxu0 %v792
        %v929 = vpop.f32.mrf.mxu0
        %v930 = vadd.f32 0.0, %v929
        %v931 = vpop.f32.mrf.mxu0
        %v932 = vadd.f32 0.0, %v931
        %933 = vmatmul.bf16.gmra.mxu0 %v795
        %v934 = vpop.f32.mrf.mxu0
        %v935 = vadd.f32 0.0, %v934
        %v936 = vpop.f32.mrf.mxu0
        %v937 = vadd.f32 0.0, %v936
        %938 = vmatmul.bf16.gmra.mxu0 %v798
        %v939 = vpop.f32.mrf.mxu0
        %v940 = vadd.f32 0.0, %v939
        %v941 = vpop.f32.mrf.mxu0
        %v942 = vadd.f32 0.0, %v941
        %943 = vmatmul.bf16.gmra.mxu0 %v801
        %v944 = vpop.f32.mrf.mxu0
        %v945 = vadd.f32 0.0, %v944
        %v946 = vpop.f32.mrf.mxu0
        %v947 = vadd.f32 0.0, %v946
        %948 = vmatmul.bf16.gmra.mxu0 %v804
        %v949 = vpop.f32.mrf.mxu0
        %v950 = vadd.f32 0.0, %v949
        %v951 = vpop.f32.mrf.mxu0
        %v952 = vadd.f32 0.0, %v951
        %953 = vmatmul.bf16.gmra.mxu0 %v807
        %v954 = vpop.f32.mrf.mxu0
        %v955 = vadd.f32 0.0, %v954
        %v956 = vpop.f32.mrf.mxu0
        %v957 = vadd.f32 0.0, %v956
        %958 = vmatmul.bf16.gmra.mxu0 %v810
        %v959 = vpop.f32.mrf.mxu0
        %v960 = vadd.f32 0.0, %v959
        %v961 = vpop.f32.mrf.mxu0
        %v962 = vadd.f32 0.0, %v961
        %963 = vmatmul.bf16.gmra.mxu0 %v813
        %v964 = vpop.f32.mrf.mxu0
        %v965 = vadd.f32 0.0, %v964
        %v966 = vpop.f32.mrf.mxu0
        %v967 = vadd.f32 0.0, %v966
        %968 = vmatmul.bf16.gmra.mxu0 %v816
        %v969 = vpop.f32.mrf.mxu0
        %v970 = vadd.f32 0.0, %v969
        %v971 = vpop.f32.mrf.mxu0
        %v972 = vadd.f32 0.0, %v971
        %973 = vmatmul.bf16.gmra.mxu0 %v819
        %v974 = vpop.f32.mrf.mxu0
        %v975 = vadd.f32 0.0, %v974
        %v976 = vpop.f32.mrf.mxu0
        %v977 = vadd.f32 0.0, %v976
        %978 = vmatmul.bf16.gmra.mxu0 %v822
        %v979 = vpop.f32.mrf.mxu0
        %v980 = vadd.f32 0.0, %v979
        %v981 = vpop.f32.mrf.mxu0
        %v982 = vadd.f32 0.0, %v981
        %983 = vmatmul.bf16.gmra.mxu0 %v825
        %v984 = vpop.f32.mrf.mxu0
        %v985 = vadd.f32 0.0, %v984
        %v986 = vpop.f32.mrf.mxu0
        %v987 = vadd.f32 0.0, %v986
        %988 = vmatmul.bf16.gmra.mxu0 %v828
        %v989 = vpop.f32.mrf.mxu0
        %v990 = vadd.f32 0.0, %v989
        %v991 = vpop.f32.mrf.mxu0
        %v992 = vadd.f32 0.0, %v991
        %993 = vmatmul.bf16.gmra.mxu0 %v831
        %v994 = vpop.f32.mrf.mxu0
        %v995 = vadd.f32 0.0, %v994
        %v996 = vpop.f32.mrf.mxu0
        %v997 = vadd.f32 0.0, %v996
        %998 = vmatmul.bf16.gmra.mxu0 %v834
        %v999 = vpop.f32.mrf.mxu0
        %v1000 = vadd.f32 0.0, %v999
        %v1001 = vpop.f32.mrf.mxu0
        %v1002 = vadd.f32 0.0, %v1001
        %1003 = vmatmul.bf16.gmra.mxu0 %v837
        %v1004 = vpop.f32.mrf.mxu0
        %v1005 = vadd.f32 0.0, %v1004
        %v1006 = vpop.f32.mrf.mxu0
        %v1007 = vadd.f32 0.0, %v1006
        %1008 = vmatmul.bf16.gmra.mxu0 %v840
        %v1009 = vpop.f32.mrf.mxu0
        %v1010 = vadd.f32 0.0, %v1009
        %v1011 = vpop.f32.mrf.mxu0
        %v1012 = vadd.f32 0.0, %v1011
        %1013 = vmatmul.bf16.gmra.mxu0 %v843
        %v1014 = vpop.f32.mrf.mxu0
        %v1015 = vadd.f32 0.0, %v1014
        %v1016 = vpop.f32.mrf.mxu0
        %v1017 = vadd.f32 0.0, %v1016
        %1018 = vmatmul.bf16.gmra.mxu0 %v846
        %v1019 = vpop.f32.mrf.mxu0
        %v1020 = vadd.f32 0.0, %v1019
        %v1021 = vpop.f32.mrf.mxu0
        %v1022 = vadd.f32 0.0, %v1021
        %1023 = vmatmul.bf16.gmra.mxu0 %v849
        %v1024 = vpop.f32.mrf.mxu0
        %v1025 = vadd.f32 0.0, %v1024
        %v1026 = vpop.f32.mrf.mxu0
        %v1027 = vadd.f32 0.0, %v1026
        %1028 = vmatmul.bf16.gmra.mxu0 %v852
        %v1029 = vpop.f32.mrf.mxu0
        %v1030 = vadd.f32 0.0, %v1029
        %v1031 = vpop.f32.mrf.mxu0
        %v1032 = vadd.f32 0.0, %v1031
        %1033 = vmatmul.bf16.gmra.mxu0 %v855
        %v1034 = vpop.f32.mrf.mxu0
        %v1035 = vadd.f32 0.0, %v1034
        %v1036 = vpop.f32.mrf.mxu0
        %v1037 = vadd.f32 0.0, %v1036
        %1038 = vmatmul.bf16.gmra.mxu0 %v858
        %v1039 = vpop.f32.mrf.mxu0
        %v1040 = vadd.f32 0.0, %v1039
        %v1041 = vpop.f32.mrf.mxu0
        %v1042 = vadd.f32 0.0, %v1041
        %1043 = vmatmul.bf16.gmra.mxu0 %v861
        %v1044 = vpop.f32.mrf.mxu0
        %v1045 = vadd.f32 0.0, %v1044
        %v1046 = vpop.f32.mrf.mxu0
        %v1047 = vadd.f32 0.0, %v1046
        %1048 = vmatmul.bf16.gmra.mxu0 %v864
        %v1049 = vpop.f32.mrf.mxu0
        %v1050 = vadd.f32 0.0, %v1049
        %v1051 = vpop.f32.mrf.mxu0
        %v1052 = vadd.f32 0.0, %v1051
        %1053 = vmatmul.bf16.gmra.mxu0 %v867
        %v1054 = vpop.f32.mrf.mxu0
        %v1055 = vadd.f32 0.0, %v1054
        %v1056 = vpop.f32.mrf.mxu0
        %v1057 = vadd.f32 0.0, %v1056
        %1058 = vmatmul.bf16.gmra.mxu0 %v870
        %v1059 = vpop.f32.mrf.mxu0
        %v1060 = vadd.f32 0.0, %v1059
        %v1061 = vpop.f32.mrf.mxu0
        %v1062 = vadd.f32 0.0, %v1061
        %1063 = vmatmul.bf16.gmra.mxu0 %v873
        %v1064 = vpop.f32.mrf.mxu0
        %v1065 = vadd.f32 0.0, %v1064
        %v1066 = vpop.f32.mrf.mxu0
        %v1067 = vadd.f32 0.0, %v1066
        %1068 = vmatmul.bf16.gmra.mxu0 %v876
        %v1069 = vpop.f32.mrf.mxu0
        %v1070 = vadd.f32 0.0, %v1069
        %v1071 = vpop.f32.mrf.mxu0
        %v1072 = vadd.f32 0.0, %v1071
        %1073 = vdwg.mxu0
        %v1074 = vmax.f32 %v895, %v940
        %v1075 = vmax.f32 %v897, %v942
        %v1076 = vmax.f32 %v900, %v945
        %v1077 = vmax.f32 %v902, %v947
        %v1078 = vmax.f32 %v905, %v950
        %v1079 = vmax.f32 %v907, %v952
        %v1080 = vmax.f32 %v910, %v955
        %v1081 = vmax.f32 %v912, %v957
        %v1082 = vmax.f32 %v915, %v960
        %v1083 = vmax.f32 %v917, %v962
        %v1084 = vmax.f32 %v920, %v965
        %v1085 = vmax.f32 %v922, %v967
        %v1086 = vmax.f32 %v925, %v970
        %v1087 = vmax.f32 %v927, %v972
        %v1088 = vmax.f32 %v930, %v975
        %v1089 = vmax.f32 %v932, %v977
        %v1090 = vmax.f32 %v935, %v980
        %v1091 = vmax.f32 %v937, %v982
        %v1092 = vmax.f32 %v985, %v1030
        %v1093 = vmax.f32 %v987, %v1032
        %v1094 = vmax.f32 %v990, %v1035
        %v1095 = vmax.f32 %v992, %v1037
        %v1096 = vmax.f32 %v995, %v1040
        %v1097 = vmax.f32 %v997, %v1042
        %v1098 = vmax.f32 %v1000, %v1045
        %v1099 = vmax.f32 %v1002, %v1047
        %v1100 = vmax.f32 %v1005, %v1050
        %v1101 = vmax.f32 %v1007, %v1052
        %v1102 = vmax.f32 %v1010, %v1055
        %v1103 = vmax.f32 %v1012, %v1057
        %v1104 = vmax.f32 %v1015, %v1060
        %v1105 = vmax.f32 %v1017, %v1062
        %v1106 = vmax.f32 %v1020, %v1065
        %v1107 = vmax.f32 %v1022, %v1067
        %v1108 = vmax.f32 %v1025, %v1070
        %v1109 = vmax.f32 %v1027, %v1072
        %v1110 = vmax.f32 %v1074, %v1092
        %v1111 = vmax.f32 %v1075, %v1093
        %v1112 = vmax.f32 %v1076, %v1094
        %v1113 = vmax.f32 %v1077, %v1095
        %v1114 = vmax.f32 %v1078, %v1096
        %v1115 = vmax.f32 %v1079, %v1097
        %v1116 = vmax.f32 %v1080, %v1098
        %v1117 = vmax.f32 %v1081, %v1099
        %v1118 = vmax.f32 %v1082, %v1100
        %v1119 = vmax.f32 %v1083, %v1101
        %v1120 = vmax.f32 %v1084, %v1102
        %v1121 = vmax.f32 %v1085, %v1103
        %v1122 = vmax.f32 %v1086, %v1104
        %v1123 = vmax.f32 %v1087, %v1105
        %v1124 = vmax.f32 %v1088, %v1106
        %v1125 = vmax.f32 %v1089, %v1107
        %v1126 = vmax.f32 %v1090, %v1108
        %v1127 = vmax.f32 %v1091, %v1109
        %v1128 = vld [vmem:[%s2] sm:$0x1]
        %v1130 = vperm.slane %v1128, 0
        %v1132 = vadd.f32 %v1110, %v1130
        %v1133 = vadd.f32 %v1111, %v1130
        %v1134 = vadd.f32 %v1112, %v1130
        %v1135 = vadd.f32 %v1113, %v1130
        %v1136 = vadd.f32 %v1114, %v1130
        %v1137 = vadd.f32 %v1115, %v1130
        %v1138 = vadd.f32 %v1116, %v1130
        %v1139 = vadd.f32 %v1117, %v1130
        %v1140 = vadd.f32 %v1118, %v1130
        %v1141 = vadd.f32 %v1119, %v1130
        %v1142 = vadd.f32 %v1120, %v1130
        %v1143 = vadd.f32 %v1121, %v1130
        %v1144 = vadd.f32 %v1122, %v1130
        %v1145 = vadd.f32 %v1123, %v1130
        %v1146 = vadd.f32 %v1124, %v1130
        %v1147 = vadd.f32 %v1125, %v1130
        %v1148 = vadd.f32 %v1126, %v1130
        %v1149 = vadd.f32 %v1127, %v1130
        %v1150 = vmax.f32 %v1132, 0.0
        %v1151 = vmax.f32 %v1133, 0.0
        %v1152 = vmax.f32 %v1134, 0.0
        %v1153 = vmax.f32 %v1135, 0.0
        %v1154 = vmax.f32 %v1136, 0.0
        %v1155 = vmax.f32 %v1137, 0.0
        %v1156 = vmax.f32 %v1138, 0.0
        %v1157 = vmax.f32 %v1139, 0.0
        %v1158 = vmax.f32 %v1140, 0.0
        %v1159 = vmax.f32 %v1141, 0.0
        %v1160 = vmax.f32 %v1142, 0.0
        %v1161 = vmax.f32 %v1143, 0.0
        %v1162 = vmax.f32 %v1144, 0.0
        %v1163 = vmax.f32 %v1145, 0.0
        %v1164 = vmax.f32 %v1146, 0.0
        %v1165 = vmax.f32 %v1147, 0.0
        %v1166 = vmax.f32 %v1148, 0.0
        %v1167 = vmax.f32 %v1149, 0.0
        %v1168 = vpack.c.bf16 %v1150, %v1150
        %v1169 = vpack.c.bf16 %v1151, %v1151
        %v1170 = vpack.c.bf16 %v1152, %v1152
        %v1171 = vpack.c.bf16 %v1153, %v1153
        %v1172 = vpack.c.bf16 %v1154, %v1154
        %v1173 = vpack.c.bf16 %v1155, %v1155
        %v1174 = vpack.c.bf16 %v1156, %v1156
        %v1175 = vpack.c.bf16 %v1157, %v1157
        %v1176 = vpack.c.bf16 %v1158, %v1158
        %v1177 = vpack.c.bf16 %v1159, %v1159
        %v1178 = vpack.c.bf16 %v1160, %v1160
        %v1179 = vpack.c.bf16 %v1161, %v1161
        %v1180 = vpack.c.bf16 %v1162, %v1162
        %v1181 = vpack.c.bf16 %v1163, %v1163
        %v1182 = vpack.c.bf16 %v1164, %v1164
        %v1183 = vpack.c.bf16 %v1165, %v1165
        %v1184 = vpack.c.bf16 %v1166, %v1166
        %v1185 = vpack.c.bf16 %v1167, %v1167
        %vm1186 = vcmask 257024
        %1187 = vst.msk [vmem:[%s499] sm:$0xf] %vm1186, %v1168
        %1188 = vst.msk [vmem:[%s499 + $0x4] sm:$0xf] %vm1186, %v1169
        %1189 = vst.msk [vmem:[%s499 + $0x8] sm:$0xf] %vm1186, %v1170
        %1190 = vst.msk [vmem:[%s499 + $0xc] sm:$0xf] %vm1186, %v1171
        %1191 = vst.msk [vmem:[%s499 + $0x10] sm:$0xf] %vm1186, %v1172
        %1192 = vst.msk [vmem:[%s499 + $0x14] sm:$0xf] %vm1186, %v1173
        %1193 = vst.msk [vmem:[%s499 + $0x18] sm:$0xf] %vm1186, %v1174
        %1194 = vst.msk [vmem:[%s499 + $0x1c] sm:$0xf] %vm1186, %v1175
        %1195 = vst.msk [vmem:[%s499 + $0x20] sm:$0xf] %vm1186, %v1176
        %1196 = vst.msk [vmem:[%s499 + $0x24] sm:$0xf] %vm1186, %v1177
        %1197 = vst.msk [vmem:[%s499 + $0x28] sm:$0xf] %vm1186, %v1178
        %1198 = vst.msk [vmem:[%s499 + $0x2c] sm:$0xf] %vm1186, %v1179
        %1199 = vst.msk [vmem:[%s499 + $0x30] sm:$0xf] %vm1186, %v1180
        %1200 = vst.msk [vmem:[%s499 + $0x34] sm:$0xf] %vm1186, %v1181
        %1201 = vst.msk [vmem:[%s499 + $0x38] sm:$0xf] %vm1186, %v1182
        %1202 = vst.msk [vmem:[%s499 + $0x3c] sm:$0xf] %vm1186, %v1183
        %1203 = vst.msk [vmem:[%s499 + $0x40] sm:$0xf] %vm1186, %v1184
        %1204 = vst.msk [vmem:[%s499 + $0x44] sm:$0xf] %vm1186, %v1185
        %s1205 = smul.u32 18, %s14
        %p1206 = scmp.lt.s32.totalorder %s1205, 35
        %s1207 = scalar_select %p1206, %s1205, 35
        %s1208 = smul.addr %s1207, 4
        %s1209 = scalar_lea.vmem %s3, %s1208
        // Predicated region
        $region74: #{net_forward.3} parent=68 // pred_check
          %p1210 = pneg %p100
        $region75: #{net_forward.3} parent=68 // pred_check_branch
          %1212 = sbr.rel (%p1210) target = $region77
        $region76: #{net_forward.3} parent=68 // pred_region
          %s1213 = smul.u32 18, %s14
        $region77: #{net_forward.3} parent=68 // pred_fallthru
          _
      $region69: #{net_forward.3} parent=5 // pred_fallthru
        _
      %p1214 = scmp.le.s32.totalorder 2, %s9
      // Predicated region
      $region78: #{net_forward.3} parent=5 // pred_check
        %p1215 = pneg %p1214
      $region79: #{net_forward.3} parent=5 // pred_check_branch
        %1217 = sbr.rel (%p1215) target = $region81
      $region80: #{net_forward.3} parent=5 // pred_region
        %s1218 = ssub.s32 %s9, 2
        // Predicated region
        $region82: #{net_forward.3} parent=80 // pred_check
          %p1219 = pneg %p106
        $region83: #{net_forward.3} parent=80 // pred_check_branch
          %1221 = sbr.rel (%p1219) target = $region85
        $region84: #{net_forward.3} parent=80 // pred_region
          %s1222 = smul.u32 18, %s15
          %p1223 = scmp.lt.s32.totalorder %s1222, 35
          %s1224 = scalar_select %p1223, %s1222, 35
          %s1225 = smul.addr %s1224, 4
          %s1226 = scalar_lea.vmem %s3, %s1225
        $region85: #{net_forward.3} parent=80 // pred_fallthru
          _
      $region81: #{net_forward.3} parent=5 // pred_fallthru
        _
    $region6: #{net_forward.3} parent=1 // loop_footer
      %s13 = sadd.s32 1, %s9
    $region7: #{net_forward.3} parent=1 // loop_footer_branch
      %8 = sbr.rel target = $region3
    $region8: #{net_forward.3} parent=1 // loop_exit
      _

// kernel: net_forward.4
$region0: #{net_forward.4}
  #allocation0 [shape = 'u32[]', space=smem, size = 0x4, offset = 0x4, fixed_abs, tag = 'smem constant byte address 0x4 - core index']
  #allocation1 [shape = 'u32[72,128]{1,0:T(1,128)}', space=vmem, size = 0x9000, scoped, tag = 'internal scratch']
  %s0 = inlined_call_operand.vmem [shape: bf16[4,32,800], index: 0, kind: input, shape index: {}]
  %s1 = inlined_call_operand.vmem [shape: bf16[800,64], index: 1, kind: input, shape index: {}]
  %s2 = inlined_call_operand.vmem [shape: f32[1,64], index: 2, kind: input, shape index: {}]
  %s3 = inlined_call_operand.vmem [shape: bf16[32,64], index: 3, kind: output, shape index: {}]
  %s4 = sld [smem:[#allocation0]]
  $region71: #{net_forward.4} parent=0
    _
  %s6 = ssub.s32 1, %s4
  %s7 = scalar_select 0, %s6, %s4
  $region1: #{net_forward.4} parent=0
    #allocation2 [shape = 'u8[229376]{0}', space=vmem, size = 0x38000, scoped, tag = 'input window, operand 0']
    loop: start=0, step=1, limit=4
    $region2: #{net_forward.4} parent=1 // loop_pre_header
      _
    $region3: #{net_forward.4} parent=1 // loop_header
      %s9 = sphi 0, %s13
      %p10 = scmp.ge.s32.totalorder %s9, 4
      %s19 = sphi 0, %s21
      %s22 = sphi 0, %s19
      %s23 = sphi 0, %s22
      %s39 = sphi 0, %s23
      %s43 = sphi 0, %s43
      %s45 = sphi 0, %s43
      %s46 = sphi 0, %s45
      %s60 = sphi 0, %s46
      %s64 = sphi 0, %s64
      %s66 = sphi 0, %s64
      %s67 = sphi 0, %s66
      %s81 = sphi 0, %s67
      %s87 = sphi 0, %s89
      %s90 = sphi 0, %s87
      %s91 = sphi 0, %s90
      %s107 = sphi 0, %s91
    $region4: #{net_forward.4} parent=1 // loop_header_branch
      %12 = sbr.rel (%p10) target = $region8
    $region5: #{net_forward.4} parent=1 // loop_body
      %s14 = ssub.s32 %s9, 1
      %s15 = ssub.s32 %s9, 2
      %s16 = sadd.s32 %s9, 1
      %s17 = ssub.s32 %s9, %s16
      %p18 = scmp.eq.s32.totalorder %s17, 0
      %s20 = sadd.s32 %s19, 1
      %s21 = scalar_select %p18, %s19, %s20
      %p24 = pneg %p18
      %p25 = scmp.eq.s32.totalorder %s9, 1
      %p26 = por %p24, %p25
      %p27 = scmp.ne.s32.totalorder %s19, %s22
      %p28 = scmp.eq.s32.totalorder %s9, 0
      %p29 = por %p27, %p28
      %p30 = scmp.ne.s32.totalorder %s19, %s22
      %p31 = scmp.eq.s32.totalorder %s14, 1
      %p32 = por %p30, %p31
      %p33 = scmp.ne.s32.totalorder %s22, %s23
      %p34 = scmp.eq.s32.totalorder %s14, 0
      %p35 = por %p33, %p34
      %p36 = scmp.ne.s32.totalorder %s22, %s23
      %p37 = scmp.eq.s32.totalorder %s15, 1
      %p38 = por %p36, %p37
      %p40 = scmp.ne.s32.totalorder %s23, %s39
      %p41 = scmp.eq.s32.totalorder %s15, 0
      %p42 = por %p40, %p41
      %s44 = sadd.s32 %s43, 1
      %p47 = scmp.eq.s32.totalorder %s9, 1
      %p48 = scmp.ne.s32.totalorder %s43, %s45
      %p49 = scmp.eq.s32.totalorder %s9, 0
      %p50 = por %p48, %p49
      %p51 = scmp.ne.s32.totalorder %s43, %s45
      %p52 = scmp.eq.s32.totalorder %s14, 1
      %p53 = por %p51, %p52
      %p54 = scmp.ne.s32.totalorder %s45, %s46
      %p55 = scmp.eq.s32.totalorder %s14, 0
      %p56 = por %p54, %p55
      %p57 = scmp.ne.s32.totalorder %s45, %s46
      %p58 = scmp.eq.s32.totalorder %s15, 1
      %p59 = por %p57, %p58
      %p61 = scmp.ne.s32.totalorder %s46, %s60
      %p62 = scmp.eq.s32.totalorder %s15, 0
      %p63 = por %p61, %p62
      %s65 = sadd.s32 %s64, 1
      %p68 = scmp.eq.s32.totalorder %s9, 1
      %p69 = scmp.ne.s32.totalorder %s64, %s66
      %p70 = scmp.eq.s32.totalorder %s9, 0
      %p71 = por %p69, %p70
      %p72 = scmp.ne.s32.totalorder %s64, %s66
      %p73 = scmp.eq.s32.totalorder %s14, 1
      %p74 = por %p72, %p73
      %p75 = scmp.ne.s32.totalorder %s66, %s67
      %p76 = scmp.eq.s32.totalorder %s14, 0
      %p77 = por %p75, %p76
      %p78 = scmp.ne.s32.totalorder %s66, %s67
      %p79 = scmp.eq.s32.totalorder %s15, 1
      %p80 = por %p78, %p79
      %p82 = scmp.ne.s32.totalorder %s67, %s81
      %p83 = scmp.eq.s32.totalorder %s15, 0
      %p84 = por %p82, %p83
      %s85 = ssub.s32 %s9, %s16
      %p86 = scmp.eq.s32.totalorder %s85, 0
      %s88 = sadd.s32 %s87, 1
      %s89 = scalar_select %p86, %s87, %s88
      %p92 = pneg %p86
      %p93 = scmp.eq.s32.totalorder %s9, 1
      %p94 = por %p92, %p93
      %p95 = scmp.ne.s32.totalorder %s87, %s90
      %p96 = scmp.eq.s32.totalorder %s9, 0
      %p97 = por %p95, %p96
      %p98 = scmp.ne.s32.totalorder %s87, %s90
      %p99 = scmp.eq.s32.totalorder %s14, 1
      %p100 = por %p98, %p99
      %p101 = scmp.ne.s32.totalorder %s90, %s91
      %p102 = scmp.eq.s32.totalorder %s14, 0
      %p103 = por %p101, %p102
      %p104 = scmp.ne.s32.totalorder %s90, %s91
      %p105 = scmp.eq.s32.totalorder %s15, 1
      %p106 = por %p104, %p105
      %p108 = scmp.ne.s32.totalorder %s91, %s107
      %p109 = scmp.eq.s32.totalorder %s15, 0
      %p110 = por %p108, %p109
      %p111 = scmp.le.s32.totalorder 1, %s9
      %p112 = scmp.lt.s32.totalorder %s9, 3
      %p113 = pnand %p111, %p112
      %p114 = pneg %p113
      // Predicated region
      $region9: #{net_forward.4} parent=5 // pred_check
        _
      $region10: #{net_forward.4} parent=5 // pred_check_branch
        %116 = sbr.rel (%p113) target = $region12
      $region11: #{net_forward.4} parent=5 // pred_region
        %s117 = ssub.s32 %s9, 1
        // Predicated region
        $region13: #{net_forward.4} parent=11 // pred_check
          %p118 = pneg %p56
        $region14: #{net_forward.4} parent=11 // pred_check_branch
          %120 = sbr.rel (%p118) target = $region16
        $region15: #{net_forward.4} parent=11 // pred_region
          _
        $region16: #{net_forward.4} parent=11 // pred_fallthru
          _
        // Predicated region
        $region17: #{net_forward.4} parent=11 // pred_check
          %p121 = pneg %p77
        $region18: #{net_forward.4} parent=11 // pred_check_branch
          %123 = sbr.rel (%p121) target = $region20
        $region19: #{net_forward.4} parent=11 // pred_region
          _
        $region20: #{net_forward.4} parent=11 // pred_fallthru
          _
      $region12: #{net_forward.4} parent=5 // pred_fallthru
        _
      %p124 = scmp.lt.s32.totalorder %s9, 2
      // Predicated region
      $region21: #{net_forward.4} parent=5 // pred_check
        %p125 = pneg %p124
      $region22: #{net_forward.4} parent=5 // pred_check_branch
        %127 = sbr.rel (%p125) target = $region24
      $region23: #{net_forward.4} parent=5 // pred_region
        // Predicated region
        $region25: #{net_forward.4} parent=23 // pred_check
          %p128 = pneg %p29
        $region26: #{net_forward.4} parent=23 // pred_check_branch
          %130 = sbr.rel (%p128) target = $region28
        $region27: #{net_forward.4} parent=23 // pred_region
          %s131 = sand.u32 %s19, 1
          %s132 = sand.u32 %s19, 1
          %s133 = smul.addr %s132, 224
          %s134 = scalar_lea.vmem [#allocation2], %s133
          %s135 = smul.u32 2, %s9
          %s136 = smul.addr %s135, 7
          %s137 = smul.addr %s136, 4
          %s138 = scalar_lea.vmem %s0, %s137
          // Predicated region
          $region29: #{net_forward.4} parent=27 // pred_check
            _
          $region30: #{net_forward.4} parent=27 // pred_check_branch
            %140 = sbr.rel (0) target = $region32
          $region31: #{net_forward.4} parent=27 // pred_region
            // Predicated region
            $region33: #{net_forward.4} parent=31 // pred_check
              _
            $region34: #{net_forward.4} parent=31 // pred_check_branch
              %142 = sbr.rel (0) target = $region36
            $region35: #{net_forward.4} parent=31 // pred_region
              %s143 = scalar_lea.vmem %s138, 24
              %s144 = scalar_lea.vmem %s134, 24 [#allocation2]
              loop: start=0, step=1, limit=1
              $region37: #{net_forward.4} parent=35 // loop_pre_header
                _
              $region38: #{net_forward.4} parent=35 // loop_header
                %s146 = sphi 0, %s150
                %p147 = scmp.ge.s32.totalorder %s146, 1
                %s151 = sphi %s138, %s138
                %s152 = sphi %s134, %s134
              $region39: #{net_forward.4} parent=35 // loop_header_branch
                %149 = sbr.rel (%p147) target = $region43
              $region40: #{net_forward.4} parent=35 // loop_body
                %v153 = vld [vmem:[%s151] sm:$0xff]
                %154 = vst [vmem:[%s152] sm:$0xff] %v153
                %v155 = vld [vmem:[%s151 + $0x8] sm:$0xff]
                %156 = vst [vmem:[%s152 + $0x8] sm:$0xff] %v155
                %v157 = vld [vmem:[%s151 + $0x10] sm:$0xff]
                %158 = vst [vmem:[%s152 + $0x10] sm:$0xff] %v157
                %v159 = vld [vmem:[%s151 + $0x1c] sm:$0xff]
                %160 = vst [vmem:[%s152 + $0x1c] sm:$0xff] %v159
                %v161 = vld [vmem:[%s151 + $0x24] sm:$0xff]
                %162 = vst [vmem:[%s152 + $0x24] sm:$0xff] %v161
                %v163 = vld [vmem:[%s151 + $0x2c] sm:$0xff]
                %164 = vst [vmem:[%s152 + $0x2c] sm:$0xff] %v163
                %v165 = vld [vmem:[%s151 + $0x70] sm:$0xff]
                %166 = vst [vmem:[%s152 + $0x38] sm:$0xff] %v165
                %v167 = vld [vmem:[%s151 + $0x78] sm:$0xff]
                %168 = vst [vmem:[%s152 + $0x40] sm:$0xff] %v167
                %v169 = vld [vmem:[%s151 + $0x80] sm:$0xff]
                %170 = vst [vmem:[%s152 + $0x48] sm:$0xff] %v169
                %v171 = vld [vmem:[%s151 + $0x8c] sm:$0xff]
                %172 = vst [vmem:[%s152 + $0x54] sm:$0xff] %v171
                %v173 = vld [vmem:[%s151 + $0x94] sm:$0xff]
                %174 = vst [vmem:[%s152 + $0x5c] sm:$0xff] %v173
                %v175 = vld [vmem:[%s151 + $0x9c] sm:$0xff]
                %176 = vst [vmem:[%s152 + $0x64] sm:$0xff] %v175
                %v177 = vld [vmem:[%s151 + $0xe0] sm:$0xff]
                %178 = vst [vmem:[%s152 + $0x70] sm:$0xff] %v177
                %v179 = vld [vmem:[%s151 + $0xe8] sm:$0xff]
                %180 = vst [vmem:[%s152 + $0x78] sm:$0xff] %v179
                %v181 = vld [vmem:[%s151 + $0xf0] sm:$0xff]
                %182 = vst [vmem:[%s152 + $0x80] sm:$0xff] %v181
                %v183 = vld [vmem:[%s151 + $0xfc] sm:$0xff]
                %184 = vst [vmem:[%s152 + $0x8c] sm:$0xff] %v183
                %v185 = vld [vmem:[%s151 + $0x104] sm:$0xff]
                %186 = vst [vmem:[%s152 + $0x94] sm:$0xff] %v185
                %v187 = vld [vmem:[%s151 + $0x10c] sm:$0xff]
                %188 = vst [vmem:[%s152 + $0x9c] sm:$0xff] %v187
                %v189 = vld [vmem:[%s151 + $0x150] sm:$0xff]
                %190 = vst [vmem:[%s152 + $0xa8] sm:$0xff] %v189
                %v191 = vld [vmem:[%s151 + $0x158] sm:$0xff]
                %192 = vst [vmem:[%s152 + $0xb0] sm:$0xff] %v191
                %v193 = vld [vmem:[%s151 + $0x160] sm:$0xff]
                %194 = vst [vmem:[%s152 + $0xb8] sm:$0xff] %v193
                %v195 = vld [vmem:[%s151 + $0x16c] sm:$0xff]
                %196 = vst [vmem:[%s152 + $0xc4] sm:$0xff] %v195
                %v197 = vld [vmem:[%s151 + $0x174] sm:$0xff]
                %198 = vst [vmem:[%s152 + $0xcc] sm:$0xff] %v197
                %v199 = vld [vmem:[%s151 + $0x17c] sm:$0xff]
                %200 = vst [vmem:[%s152 + $0xd4] sm:$0xff] %v199
              $region41: #{net_forward.4} parent=35 // loop_footer
                %s150 = sadd.s32 1, %s146
              $region42: #{net_forward.4} parent=35 // loop_footer_branch
                %145 = sbr.rel target = $region38
              $region43: #{net_forward.4} parent=35 // loop_exit
                _
              %s202 = ssub.s32 16, 1
              loop: start=0, step=1, limit=1
              $region44: #{net_forward.4} parent=35 // loop_pre_header
                _
              $region45: #{net_forward.4} parent=35 // loop_header
                %s204 = sphi 0, %s208
                %p205 = scmp.ge.s32.totalorder %s204, 1
                %s209 = sphi %s143, %s143
                %s210 = sphi %s144, %s144
              $region46: #{net_forward.4} parent=35 // loop_header_branch
                %207 = sbr.rel (%p205) target = $region50
              $region47: #{net_forward.4} parent=35 // loop_body
                %v211 = vld [vmem:[%s209] sm:%s202]
                %212 = vst [vmem:[%s210] sm:%s202] %v211
                %v213 = vld [vmem:[%s209 + $0x1c] sm:%s202]
                %214 = vst [vmem:[%s210 + $0x1c] sm:%s202] %v213
                %v215 = vld [vmem:[%s209 + $0x70] sm:%s202]
                %216 = vst [vmem:[%s210 + $0x38] sm:%s202] %v215
                %v217 = vld [vmem:[%s209 + $0x8c] sm:%s202]
                %218 = vst [vmem:[%s210 + $0x54] sm:%s202] %v217
                %v219 = vld [vmem:[%s209 + $0xe0] sm:%s202]
                %220 = vst [vmem:[%s210 + $0x70] sm:%s202] %v219
                %v221 = vld [vmem:[%s209 + $0xfc] sm:%s202]
                %222 = vst [vmem:[%s210 + $0x8c] sm:%s202] %v221
                %v223 = vld [vmem:[%s209 + $0x150] sm:%s202]
                %224 = vst [vmem:[%s210 + $0xa8] sm:%s202] %v223
                %v225 = vld [vmem:[%s209 + $0x16c] sm:%s202]
                %226 = vst [vmem:[%s210 + $0xc4] sm:%s202] %v225
              $region48: #{net_forward.4} parent=35 // loop_footer
                %s208 = sadd.s32 1, %s204
              $region49: #{net_forward.4} parent=35 // loop_footer_branch
                %203 = sbr.rel target = $region45
              $region50: #{net_forward.4} parent=35 // loop_exit
                _
            $region36: #{net_forward.4} parent=31 // pred_fallthru
              _
          $region32: #{net_forward.4} parent=27 // pred_fallthru
            _
          %227 = vnop
        $region28: #{net_forward.4} parent=23 // pred_fallthru
          _
      $region24: #{net_forward.4} parent=5 // pred_fallthru
        _
      %p228 = scmp.le.s32.totalorder 1, %s9
      %p229 = scmp.lt.s32.totalorder %s9, 3
      %p230 = pnand %p228, %p229
      %p231 = pneg %p230
      // Predicated region
      $region51: #{net_forward.4} parent=5 // pred_check
        _
      $region52: #{net_forward.4} parent=5 // pred_check_branch
        %233 = sbr.rel (%p230) target = $region54
      $region53: #{net_forward.4} parent=5 // pred_region
        %s234 = ssub.s32 %s9, 1
        %s235 = sand.u32 %s22, 1
        %s236 = sand.u32 %s22, 1
        %s237 = smul.addr %s236, 224
        %s238 = scalar_lea.vmem [#allocation2], %s237
        // Predicated region
        $region55: #{net_forward.4} parent=53 // pred_check
          %p239 = pneg %p35
        $region56: #{net_forward.4} parent=53 // pred_check_branch
          %241 = sbr.rel (%p239) target = $region58
        $region57: #{net_forward.4} parent=53 // pred_region
          _
        $region58: #{net_forward.4} parent=53 // pred_fallthru
          _
        %s242 = sand.u32 %s22, 1
        %s243 = sand.u32 %s22, 1
        %s244 = smul.addr %s243, 224
        %s245 = scalar_lea.vmem [#allocation2], %s244
        %p246 = pneg %p35
        %p247 = pneg %p32
        %p248 = pneg %p56
        %p249 = pneg %p53
        %p250 = pneg %p77
        %p251 = pneg %p74
        %p252 = pneg %p103
        %p253 = pneg %p100
        %s254 = smul.u32 2, %s14
        %p255 = scmp.lt.s32.totalorder %s254, 3
        %s256 = scalar_select %p255, %s254, 3
        %s257 = smul.addr %s256, 4
        %s258 = scalar_lea.vmem %s3, %s257
        %s259 = smul.u32 2, %s14
        %s260 = smul.u32 2, %s14
        %p261 = scmp.lt.s32.totalorder %s260, 3
        %s262 = scalar_select %p261, %s260, 3
        %s263 = smul.addr %s262, 4
        %s264 = scalar_lea.vmem %s3, %s263
        %s265 = smul.u32 2, %s14
        %v267 = vld [vmem:[%s238] sm:$0xff]
        %v268 = vld [vmem:[%s238 + $0x8] sm:$0xff]
        %v269 = vld [vmem:[%s238 + $0x10] sm:$0xff]
        %v270 = vld [vmem:[%s238 + $0x18] sm:$0xf]
        %v271 = vld [vmem:[%s238 + $0x1c] sm:$0xff]
        %v272 = vld [vmem:[%s238 + $0x24] sm:$0xff]
        %v273 = vld [vmem:[%s238 + $0x2c] sm:$0xff]
        %v274 = vld [vmem:[%s238 + $0x34] sm:$0xf]
        %v275 = vld [vmem:[%s238 + $0x38] sm:$0xff]
        %v276 = vld [vmem:[%s238 + $0x40] sm:$0xff]
        %v277 = vld [vmem:[%s238 + $0x48] sm:$0xff]
        %v278 = vld [vmem:[%s238 + $0x50] sm:$0xf]
        %v279 = vld [vmem:[%s238 + $0x54] sm:$0xff]
        %v280 = vld [vmem:[%s238 + $0x5c] sm:$0xff]
        %v281 = vld [vmem:[%s238 + $0x64] sm:$0xff]
        %v282 = vld [vmem:[%s238 + $0x6c] sm:$0xf]
        %v283 = vld [vmem:[%s238 + $0x70] sm:$0xff]
        %v284 = vld [vmem:[%s238 + $0x78] sm:$0xff]
        %v285 = vld [vmem:[%s238 + $0x80] sm:$0xff]
        %v286 = vld [vmem:[%s238 + $0x88] sm:$0xf]
        %v287 = vld [vmem:[%s238 + $0x8c] sm:$0xff]
        %v288 = vld [vmem:[%s238 + $0x94] sm:$0xff]
        %v289 = vld [vmem:[%s238 + $0x9c] sm:$0xff]
        %v290 = vld [vmem:[%s238 + $0xa4] sm:$0xf]
        %v291 = vld [vmem:[%s238 + $0xa8] sm:$0xff]
        %v292 = vld [vmem:[%s238 + $0xb0] sm:$0xff]
        %v293 = vld [vmem:[%s238 + $0xb8] sm:$0xff]
        %v294 = vld [vmem:[%s238 + $0xc0] sm:$0xf]
        %v295 = vld [vmem:[%s238 + $0xc4] sm:$0xff]
        %v296 = vld [vmem:[%s238 + $0xcc] sm:$0xff]
        %v297 = vld [vmem:[%s238 + $0xd4] sm:$0xff]
        %v298 = vld [vmem:[%s238 + $0xdc] sm:$0xf]
        %v299 = vld [vmem:[%s1] sm:$0xf]
        %v300 = vld [vmem:[%s1 + $0x4] sm:$0xf]
        %v301 = vld [vmem:[%s1 + $0x8] sm:$0xf]
        %v302 = vld [vmem:[%s1 + $0xc] sm:$0xf]
        %v303 = vld [vmem:[%s1 + $0x10] sm:$0xf]
        %v304 = vld [vmem:[%s1 + $0x14] sm:$0xf]
        %v305 = vld [vmem:[%s1 + $0x18] sm:$0xf]
        %v306 = vld [vmem:[%s1 + $0x1c] sm:$0xf]
        %v307 = vld [vmem:[%s1 + $0x20] sm:$0xf]
        %v308 = vld [vmem:[%s1 + $0x24] sm:$0xf]
        %v309 = vld [vmem:[%s1 + $0x28] sm:$0xf]
        %v310 = vld [vmem:[%s1 + $0x2c] sm:$0xf]
        %v311 = vld [vmem:[%s1 + $0x30] sm:$0xf]
        %v312 = vld [vmem:[%s1 + $0x34] sm:$0xf]
        %v313 = vld [vmem:[%s1 + $0x38] sm:$0xf]
        %v314 = vld [vmem:[%s1 + $0x3c] sm:$0xf]
        %v315 = vld [vmem:[%s1 + $0x40] sm:$0xf]
        %v316 = vld [vmem:[%s1 + $0x44] sm:$0xf]
        %v317 = vld [vmem:[%s1 + $0x48] sm:$0xf]
        %v318 = vld [vmem:[%s1 + $0x4c] sm:$0xf]
        %v319 = vld [vmem:[%s1 + $0x50] sm:$0xf]
        %v320 = vld [vmem:[%s1 + $0x54] sm:$0xf]
        %v321 = vld [vmem:[%s1 + $0x58] sm:$0xf]
        %v322 = vld [vmem:[%s1 + $0x5c] sm:$0xf]
        %v323 = vld [vmem:[%s1 + $0x60] sm:$0xf]
        %v324 = vld [vmem:[%s1 + $0x64] sm:$0xf]
        %v325 = vld [vmem:[%s1 + $0x68] sm:$0xf]
        %v326 = vld [vmem:[%s1 + $0x6c] sm:$0xf]
        %v327 = vld [vmem:[%s1 + $0x70] sm:$0xf]
        %v328 = vld [vmem:[%s1 + $0x74] sm:$0xf]
        %v329 = vld [vmem:[%s1 + $0x78] sm:$0xf]
        %v330 = vld [vmem:[%s1 + $0x7c] sm:$0xf]
        %v331 = vld [vmem:[%s1 + $0x80] sm:$0xf]
        %v332 = vld [vmem:[%s1 + $0x84] sm:$0xf]
        %v333 = vld [vmem:[%s1 + $0x88] sm:$0xf]
        %v334 = vld [vmem:[%s1 + $0x8c] sm:$0xf]
        %v335 = vld [vmem:[%s1 + $0x90] sm:$0xf]
        %v336 = vld [vmem:[%s1 + $0x94] sm:$0xf]
        %v337 = vld [vmem:[%s1 + $0x98] sm:$0xf]
        %v338 = vld [vmem:[%s1 + $0x9c] sm:$0xf]
        %v339 = vld [vmem:[%s1 + $0xa0] sm:$0xf]
        %v340 = vld [vmem:[%s1 + $0xa4] sm:$0xf]
        %v341 = vld [vmem:[%s1 + $0xa8] sm:$0xf]
        %v342 = vld [vmem:[%s1 + $0xac] sm:$0xf]
        %v343 = vld [vmem:[%s1 + $0xb0] sm:$0xf]
        %v344 = vld [vmem:[%s1 + $0xb4] sm:$0xf]
        %v345 = vld [vmem:[%s1 + $0xb8] sm:$0xf]
        %v346 = vld [vmem:[%s1 + $0xbc] sm:$0xf]
        %v347 = vld [vmem:[%s1 + $0xc0] sm:$0xf]
        %v348 = vld [vmem:[%s1 + $0xc4] sm:$0xf]
        %v349 = vld [vmem:[%s1 + $0xc8] sm:$0xf]
        %v350 = vld [vmem:[%s1 + $0xcc] sm:$0xf]
        %v351 = vld [vmem:[%s1 + $0xd0] sm:$0xf]
        %v352 = vld [vmem:[%s1 + $0xd4] sm:$0xf]
        %v353 = vld [vmem:[%s1 + $0xd8] sm:$0xf]
        %v354 = vld [vmem:[%s1 + $0xdc] sm:$0xf]
        %v355 = vld [vmem:[%s1 + $0xe0] sm:$0xf]
        %v356 = vld [vmem:[%s1 + $0xe4] sm:$0xf]
        %v357 = vld [vmem:[%s1 + $0xe8] sm:$0xf]
        %v358 = vld [vmem:[%s1 + $0xec] sm:$0xf]
        %v359 = vld [vmem:[%s1 + $0xf0] sm:$0xf]
        %v360 = vld [vmem:[%s1 + $0xf4] sm:$0xf]
        %v361 = vld [vmem:[%s1 + $0xf8] sm:$0xf]
        %v362 = vld [vmem:[%s1 + $0xfc] sm:$0xf]
        %v363 = vld [vmem:[%s1 + $0x100] sm:$0xf]
        %v364 = vld [vmem:[%s1 + $0x104] sm:$0xf]
        %v365 = vld [vmem:[%s1 + $0x108] sm:$0xf]
        %v366 = vld [vmem:[%s1 + $0x10c] sm:$0xf]
        %v367 = vld [vmem:[%s1 + $0x110] sm:$0xf]
        %v368 = vld [vmem:[%s1 + $0x114] sm:$0xf]
        %v369 = vld [vmem:[%s1 + $0x118] sm:$0xf]
        %v370 = vld [vmem:[%s1 + $0x11c] sm:$0xf]
        %v371 = vld [vmem:[%s1 + $0x120] sm:$0xf]
        %v372 = vld [vmem:[%s1 + $0x124] sm:$0xf]
        %v373 = vld [vmem:[%s1 + $0x128] sm:$0xf]
        %v374 = vld [vmem:[%s1 + $0x12c] sm:$0xf]
        %v375 = vld [vmem:[%s1 + $0x130] sm:$0xf]
        %v376 = vld [vmem:[%s1 + $0x134] sm:$0xf]
        %v377 = vld [vmem:[%s1 + $0x138] sm:$0xf]
        %v378 = vld [vmem:[%s1 + $0x13c] sm:$0xf]
        %v379 = vld [vmem:[%s1 + $0x140] sm:$0xf]
        %v380 = vld [vmem:[%s1 + $0x144] sm:$0xf]
        %v381 = vld [vmem:[%s1 + $0x148] sm:$0xf]
        %v382 = vld [vmem:[%s1 + $0x14c] sm:$0xf]
        %v383 = vld [vmem:[%s1 + $0x150] sm:$0xf]
        %v384 = vld [vmem:[%s1 + $0x154] sm:$0xf]
        %v385 = vld [vmem:[%s1 + $0x158] sm:$0xf]
        %v386 = vld [vmem:[%s1 + $0x15c] sm:$0xf]
        %v387 = vld [vmem:[%s1 + $0x160] sm:$0xf]
        %v388 = vld [vmem:[%s1 + $0x164] sm:$0xf]
        %v389 = vld [vmem:[%s1 + $0x168] sm:$0xf]
        %v390 = vld [vmem:[%s1 + $0x16c] sm:$0xf]
        %v391 = vld [vmem:[%s1 + $0x170] sm:$0xf]
        %v392 = vld [vmem:[%s1 + $0x174] sm:$0xf]
        %v393 = vld [vmem:[%s1 + $0x178] sm:$0xf]
        %v394 = vld [vmem:[%s1 + $0x17c] sm:$0xf]
        %v395 = vld [vmem:[%s1 + $0x180] sm:$0xf]
        %v396 = vld [vmem:[%s1 + $0x184] sm:$0xf]
        %v397 = vld [vmem:[%s1 + $0x188] sm:$0xf]
        %v398 = vld [vmem:[%s1 + $0x18c] sm:$0xf]
        %v431 = vunpack.c.l.b16 %v267
        %v432 = vunpack.c.h.b16 %v267
        %v433 = vunpack.c.l.b16 %v268
        %v434 = vunpack.c.h.b16 %v268
        %v435 = vunpack.c.l.b16 %v269
        %v436 = vunpack.c.h.b16 %v269
        %v437 = vunpack.c.l.b16 %v270
        %v438 = vunpack.c.l.b16 %v271
        %v439 = vunpack.c.h.b16 %v271
        %v440 = vunpack.c.l.b16 %v272
        %v441 = vunpack.c.h.b16 %v272
        %v442 = vunpack.c.l.b16 %v273
        %v443 = vunpack.c.h.b16 %v273
        %v444 = vunpack.c.l.b16 %v274
        %v445 = vunpack.c.l.b16 %v275
        %v446 = vunpack.c.h.b16 %v275
        %v447 = vunpack.c.l.b16 %v276
        %v448 = vunpack.c.h.b16 %v276
        %v449 = vunpack.c.l.b16 %v277
        %v450 = vunpack.c.h.b16 %v277
        %v451 = vunpack.c.l.b16 %v278
        %v452 = vunpack.c.l.b16 %v279
        %v453 = vunpack.c.h.b16 %v279
        %v454 = vunpack.c.l.b16 %v280
        %v455 = vunpack.c.h.b16 %v280
        %v456 = vunpack.c.l.b16 %v281
        %v457 = vunpack.c.h.b16 %v281
        %v458 = vunpack.c.l.b16 %v282
        %v459 = vunpack.c.l.b16 %v283
        %v460 = vunpack.c.h.b16 %v283
        %v461 = vunpack.c.l.b16 %v284
        %v462 = vunpack.c.h.b16 %v284
        %v463 = vunpack.c.l.b16 %v285
        %v464 = vunpack.c.h.b16 %v285
        %v465 = vunpack.c.l.b16 %v286
        %v466 = vunpack.c.l.b16 %v287
        %v467 = vunpack.c.h.b16 %v287
        %v468 = vunpack.c.l.b16 %v288
        %v469 = vunpack.c.h.b16 %v288
        %v470 = vunpack.c.l.b16 %v289
        %v471 = vunpack.c.h.b16 %v289
        %v472 = vunpack.c.l.b16 %v290
        %v473 = vunpack.c.l.b16 %v291
        %v474 = vunpack.c.h.b16 %v291
        %v475 = vunpack.c.l.b16 %v292
        %v476 = vunpack.c.h.b16 %v292
        %v477 = vunpack.c.l.b16 %v293
        %v478 = vunpack.c.h.b16 %v293
        %v479 = vunpack.c.l.b16 %v294
        %v480 = vunpack.c.l.b16 %v295
        %v481 = vunpack.c.h.b16 %v295
        %v482 = vunpack.c.l.b16 %v296
        %v483 = vunpack.c.h.b16 %v296
        %v484 = vunpack.c.l.b16 %v297
        %v485 = vunpack.c.h.b16 %v297
        %v486 = vunpack.c.l.b16 %v298
        %v487 = vpack.c.b16 %v438, %v431
        %v488 = vpack.c.b16 %v439, %v432
        %v489 = vpack.c.b16 %v440, %v433
        %v490 = vpack.c.b16 %v441, %v434
        %v491 = vpack.c.b16 %v442, %v435
        %v492 = vpack.c.b16 %v443, %v436
        %v493 = vpack.c.b16 %v444, %v437
        %v494 = vpack.c.b16 %v452, %v445
        %v495 = vpack.c.b16 %v453, %v446
        %v496 = vpack.c.b16 %v454, %v447
        %v497 = vpack.c.b16 %v455, %v448
        %v498 = vpack.c.b16 %v456, %v449
        %v499 = vpack.c.b16 %v457, %v450
        %v500 = vpack.c.b16 %v458, %v451
        %v501 = vpack.c.b16 %v466, %v459
        %v502 = vpack.c.b16 %v467, %v460
        %v503 = vpack.c.b16 %v468, %v461
        %v504 = vpack.c.b16 %v469, %v462
        %v505 = vpack.c.b16 %v470, %v463
        %v506 = vpack.c.b16 %v471, %v464
        %v507 = vpack.c.b16 %v472, %v465
        %v508 = vpack.c.b16 %v480, %v473
        %v509 = vpack.c.b16 %v481, %v474
        %v510 = vpack.c.b16 %v482, %v475
        %v511 = vpack.c.b16 %v483, %v476
        %v512 = vpack.c.b16 %v484, %v477
        %v513 = vpack.c.b16 %v485, %v478
        %v514 = vpack.c.b16 %v486, %v479
        %v639 = vunpack.c.l.b16 %v299
        %v640 = vunpack.c.l.b16 %v300
        %v641 = vunpack.c.l.b16 %v301
        %v642 = vunpack.c.l.b16 %v302
        %v643 = vunpack.c.l.b16 %v303
        %v644 = vunpack.c.l.b16 %v304
        %v645 = vunpack.c.l.b16 %v305
        %v646 = vunpack.c.l.b16 %v306
        %v647 = vunpack.c.l.b16 %v307
        %v648 = vunpack.c.l.b16 %v308
        %v649 = vunpack.c.l.b16 %v309
        %v650 = vunpack.c.l.b16 %v310
        %v651 = vunpack.c.l.b16 %v311
        %v652 = vunpack.c.l.b16 %v312
        %v653 = vunpack.c.l.b16 %v313
        %v654 = vunpack.c.l.b16 %v314
        %v655 = vunpack.c.l.b16 %v315
        %v656 = vunpack.c.l.b16 %v316
        %v657 = vunpack.c.l.b16 %v317
        %v658 = vunpack.c.l.b16 %v318
        %v659 = vunpack.c.l.b16 %v319
        %v660 = vunpack.c.l.b16 %v320
        %v661 = vunpack.c.l.b16 %v321
        %v662 = vunpack.c.l.b16 %v322
        %v663 = vunpack.c.l.b16 %v323
        %v664 = vunpack.c.l.b16 %v324
        %v665 = vunpack.c.l.b16 %v325
        %v666 = vunpack.c.l.b16 %v326
        %v667 = vunpack.c.l.b16 %v327
        %v668 = vunpack.c.l.b16 %v328
        %v669 = vunpack.c.l.b16 %v329
        %v670 = vunpack.c.l.b16 %v330
        %v671 = vunpack.c.l.b16 %v331
        %v672 = vunpack.c.l.b16 %v332
        %v673 = vunpack.c.l.b16 %v333
        %v674 = vunpack.c.l.b16 %v334
        %v675 = vunpack.c.l.b16 %v335
        %v676 = vunpack.c.l.b16 %v336
        %v677 = vunpack.c.l.b16 %v337
        %v678 = vunpack.c.l.b16 %v338
        %v679 = vunpack.c.l.b16 %v339
        %v680 = vunpack.c.l.b16 %v340
        %v681 = vunpack.c.l.b16 %v341
        %v682 = vunpack.c.l.b16 %v342
        %v683 = vunpack.c.l.b16 %v343
        %v684 = vunpack.c.l.b16 %v344
        %v685 = vunpack.c.l.b16 %v345
        %v686 = vunpack.c.l.b16 %v346
        %v687 = vunpack.c.l.b16 %v347
        %v688 = vunpack.c.l.b16 %v348
        %v689 = vunpack.c.l.b16 %v349
        %v690 = vunpack.c.l.b16 %v350
        %v691 = vunpack.c.l.b16 %v351
        %v692 = vunpack.c.l.b16 %v352
        %v693 = vunpack.c.l.b16 %v353
        %v694 = vunpack.c.l.b16 %v354
        %v695 = vunpack.c.l.b16 %v355
        %v696 = vunpack.c.l.b16 %v356
        %v697 = vunpack.c.l.b16 %v357
        %v698 = vunpack.c.l.b16 %v358
        %v699 = vunpack.c.l.b16 %v359
        %v700 = vunpack.c.l.b16 %v360
        %v701 = vunpack.c.l.b16 %v361
        %v702 = vunpack.c.l.b16 %v362
        %v703 = vunpack.c.l.b16 %v363
        %v704 = vunpack.c.l.b16 %v364
        %v705 = vunpack.c.l.b16 %v365
        %v706 = vunpack.c.l.b16 %v366
        %v707 = vunpack.c.l.b16 %v367
        %v708 = vunpack.c.l.b16 %v368
        %v709 = vunpack.c.l.b16 %v369
        %v710 = vunpack.c.l.b16 %v370
        %v711 = vunpack.c.l.b16 %v371
        %v712 = vunpack.c.l.b16 %v372
        %v713 = vunpack.c.l.b16 %v373
        %v714 = vunpack.c.l.b16 %v374
        %v715 = vunpack.c.l.b16 %v375
        %v716 = vunpack.c.l.b16 %v376
        %v717 = vunpack.c.l.b16 %v377
        %v718 = vunpack.c.l.b16 %v378
        %v719 = vunpack.c.l.b16 %v379
        %v720 = vunpack.c.l.b16 %v380
        %v721 = vunpack.c.l.b16 %v381
        %v722 = vunpack.c.l.b16 %v382
        %v723 = vunpack.c.l.b16 %v383
        %v724 = vunpack.c.l.b16 %v384
        %v725 = vunpack.c.l.b16 %v385
        %v726 = vunpack.c.l.b16 %v386
        %v727 = vunpack.c.l.b16 %v387
        %v728 = vunpack.c.l.b16 %v388
        %v729 = vunpack.c.l.b16 %v389
        %v730 = vunpack.c.l.b16 %v390
        %v731 = vunpack.c.l.b16 %v391
        %v732 = vunpack.c.l.b16 %v392
        %v733 = vunpack.c.l.b16 %v393
        %v734 = vunpack.c.l.b16 %v394
        %v735 = vunpack.c.l.b16 %v395
        %v736 = vunpack.c.l.b16 %v396
        %v737 = vunpack.c.l.b16 %v397
        %v738 = vunpack.c.l.b16 %v398
        %v739 = vpack.c.b16 %v640, %v639
        %v740 = vpack.c.b16 %v642, %v641
        %v741 = vpack.c.b16 %v644, %v643
        %v742 = vpack.c.b16 %v646, %v645
        %v743 = vpack.c.b16 %v648, %v647
        %v744 = vpack.c.b16 %v650, %v649
        %v745 = vpack.c.b16 %v652, %v651
        %v746 = vpack.c.b16 %v654, %v653
        %v747 = vpack.c.b16 %v656, %v655
        %v748 = vpack.c.b16 %v658, %v657
        %v749 = vpack.c.b16 %v660, %v659
        %v750 = vpack.c.b16 %v662, %v661
        %v751 = vpack.c.b16 %v664, %v663
        %v752 = vpack.c.b16 %v666, %v665
        %v753 = vpack.c.b16 %v668, %v667
        %v754 = vpack.c.b16 %v670, %v669
        %v755 = vpack.c.b16 %v672, %v671
        %v756 = vpack.c.b16 %v674, %v673
        %v757 = vpack.c.b16 %v676, %v675
        %v758 = vpack.c.b16 %v678, %v677
        %v759 = vpack.c.b16 %v680, %v679
        %v760 = vpack.c.b16 %v682, %v681
        %v761 = vpack.c.b16 %v684, %v683
        %v762 = vpack.c.b16 %v686, %v685
        %v763 = vpack.c.b16 %v688, %v687
        %v764 = vpack.c.b16 %v690, %v689
        %v765 = vpack.c.b16 %v692, %v691
        %v766 = vpack.c.b16 %v694, %v693
        %v767 = vpack.c.b16 %v696, %v695
        %v768 = vpack.c.b16 %v698, %v697
        %v769 = vpack.c.b16 %v700, %v699
        %v770 = vpack.c.b16 %v702, %v701
        %v771 = vpack.c.b16 %v704, %v703
        %v772 = vpack.c.b16 %v706, %v705
        %v773 = vpack.c.b16 %v708, %v707
        %v774 = vpack.c.b16 %v710, %v709
        %v775 = vpack.c.b16 %v712, %v711
        %v776 = vpack.c.b16 %v714, %v713
        %v777 = vpack.c.b16 %v716, %v715
        %v778 = vpack.c.b16 %v718, %v717
        %v779 = vpack.c.b16 %v720, %v719
        %v780 = vpack.c.b16 %v722, %v721
        %v781 = vpack.c.b16 %v724, %v723
        %v782 = vpack.c.b16 %v726, %v725
        %v783 = vpack.c.b16 %v728, %v727
        %v784 = vpack.c.b16 %v730, %v729
        %v785 = vpack.c.b16 %v732, %v731
        %v786 = vpack.c.b16 %v734, %v733
        %v787 = vpack.c.b16 %v736, %v735
        %v788 = vpack.c.b16 %v738, %v737
        %vm839 = vcmask 261120
        %v841 = vsel %vm839, %v493, 0
        %v844 = vsel %vm839, %v500, 0
        %v847 = vsel %vm839, %v507, 0
        %v850 = vsel %vm839, %v514, 0
        %852 = vmatpush.bf16.msra.mxu0 %v746
        %853 = vmatpush.bf16.msra.mxu0 %v745
        %854 = vmatpush.bf16.msra.mxu0 %v744
        %855 = vmatpush.bf16.msra.mxu0 %v743
        %856 = vmatpush.bf16.msra.mxu0 %v742
        %857 = vmatpush.bf16.msra.mxu0 %v741
        %858 = vmatpush.bf16.msra.mxu0 %v740
        %859 = vmatpush.bf16.msra.mxu0 %v739
        %860 = vmatmul.bf16.gmra.mxu0 %v487
        %v861 = vpop.f32.mrf.mxu0
        %v862 = vadd.f32 0.0, %v861
        %v863 = vpop.f32.mrf.mxu0
        %v864 = vadd.f32 0.0, %v863
        %865 = vmatmul.bf16.gmra.mxu0 %v494
        %v866 = vpop.f32.mrf.mxu0
        %v867 = vadd.f32 0.0, %v866
        %v868 = vpop.f32.mrf.mxu0
        %v869 = vadd.f32 0.0, %v868
        %870 = vmatmul.bf16.gmra.mxu0 %v501
        %v871 = vpop.f32.mrf.mxu0
        %v872 = vadd.f32 0.0, %v871
        %v873 = vpop.f32.mrf.mxu0
        %v874 = vadd.f32 0.0, %v873
        %875 = vmatmul.bf16.gmra.mxu0 %v508
        %v876 = vpop.f32.mrf.mxu0
        %v877 = vadd.f32 0.0, %v876
        %v878 = vpop.f32.mrf.mxu0
        %v879 = vadd.f32 0.0, %v878
        %880 = vdwg.mxu0
        %881 = vmatpush.bf16.msra.mxu0 %v754
        %882 = vmatpush.bf16.msra.mxu0 %v753
        %883 = vmatpush.bf16.msra.mxu0 %v752
        %884 = vmatpush.bf16.msra.mxu0 %v751
        %885 = vmatpush.bf16.msra.mxu0 %v750
        %886 = vmatpush.bf16.msra.mxu0 %v749
        %887 = vmatpush.bf16.msra.mxu0 %v748
        %888 = vmatpush.bf16.msra.mxu0 %v747
        %889 = vmatmul.bf16.gmra.mxu0 %v488
        %v890 = vpop.f32.mrf.mxu0
        %v891 = vadd.f32 %v862, %v890
        %v892 = vpop.f32.mrf.mxu0
        %v893 = vadd.f32 %v864, %v892
        %894 = vmatmul.bf16.gmra.mxu0 %v495
        %v895 = vpop.f32.mrf.mxu0
        %v896 = vadd.f32 %v867, %v895
        %v897 = vpop.f32.mrf.mxu0
        %v898 = vadd.f32 %v869, %v897
        %899 = vmatmul.bf16.gmra.mxu0 %v502
        %v900 = vpop.f32.mrf.mxu0
        %v901 = vadd.f32 %v872, %v900
        %v902 = vpop.f32.mrf.mxu0
        %v903 = vadd.f32 %v874, %v902
        %904 = vmatmul.bf16.gmra.mxu0 %v509
        %v905 = vpop.f32.mrf.mxu0
        %v906 = vadd.f32 %v877, %v905
        %v907 = vpop.f32.mrf.mxu0
        %v908 = vadd.f32 %v879, %v907
        %909 = vdwg.mxu0
        %910 = vmatpush.bf16.msra.mxu0 %v762
        %911 = vmatpush.bf16.msra.mxu0 %v761
        %912 = vmatpush.bf16.msra.mxu0 %v760
        %913 = vmatpush.bf16.msra.mxu0 %v759
        %914 = vmatpush.bf16.msra.mxu0 %v758
        %915 = vmatpush.bf16.msra.mxu0 %v757
        %916 = vmatpush.bf16.msra.mxu0 %v756
        %917 = vmatpush.bf16.msra.mxu0 %v755
        %918 = vmatmul.bf16.gmra.mxu0 %v489
        %v919 = vpop.f32.mrf.mxu0
        %v920 = vadd.f32 %v891, %v919
        %v921 = vpop.f32.mrf.mxu0
        %v922 = vadd.f32 %v893, %v921
        %923 = vmatmul.bf16.gmra.mxu0 %v496
        %v924 = vpop.f32.mrf.mxu0
        %v925 = vadd.f32 %v896, %v924
        %v926 = vpop.f32.mrf.mxu0
        %v927 = vadd.f32 %v898, %v926
        %928 = vmatmul.bf16.gmra.mxu0 %v503
        %v929 = vpop.f32.mrf.mxu0
        %v930 = vadd.f32 %v901, %v929
        %v931 = vpop.f32.mrf.mxu0
        %v932 = vadd.f32 %v903, %v931
        %933 = vmatmul.bf16.gmra.mxu0 %v510
        %v934 = vpop.f32.mrf.mxu0
        %v935 = vadd.f32 %v906, %v934
        %v936 = vpop.f32.mrf.mxu0
        %v937 = vadd.f32 %v908, %v936
        %938 = vdwg.mxu0
        %939 = vmatpush.bf16.msra.mxu0 %v770
        %940 = vmatpush.bf16.msra.mxu0 %v769
        %941 = vmatpush.bf16.msra.mxu0 %v768
        %942 = vmatpush.bf16.msra.mxu0 %v767
        %943 = vmatpush.bf16.msra.mxu0 %v766
        %944 = vmatpush.bf16.msra.mxu0 %v765
        %945 = vmatpush.bf16.msra.mxu0 %v764
        %946 = vmatpush.bf16.msra.mxu0 %v763
        %947 = vmatmul.bf16.gmra.mxu0 %v490
        %v948 = vpop.f32.mrf.mxu0
        %v949 = vadd.f32 %v920, %v948
        %v950 = vpop.f32.mrf.mxu0
        %v951 = vadd.f32 %v922, %v950
        %952 = vmatmul.bf16.gmra.mxu0 %v497
        %v953 = vpop.f32.mrf.mxu0
        %v954 = vadd.f32 %v925, %v953
        %v955 = vpop.f32.mrf.mxu0
        %v956 = vadd.f32 %v927, %v955
        %957 = vmatmul.bf16.gmra.mxu0 %v504
        %v958 = vpop.f32.mrf.mxu0
        %v959 = vadd.f32 %v930, %v958
        %v960 = vpop.f32.mrf.mxu0
        %v961 = vadd.f32 %v932, %v960
        %962 = vmatmul.bf16.gmra.mxu0 %v511
        %v963 = vpop.f32.mrf.mxu0
        %v964 = vadd.f32 %v935, %v963
        %v965 = vpop.f32.mrf.mxu0
        %v966 = vadd.f32 %v937, %v965
        %967 = vdwg.mxu0
        %968 = vmatpush.bf16.msra.mxu0 %v778
        %969 = vmatpush.bf16.msra.mxu0 %v777
        %970 = vmatpush.bf16.msra.mxu0 %v776
        %971 = vmatpush.bf16.msra.mxu0 %v775
        %972 = vmatpush.bf16.msra.mxu0 %v774
        %973 = vmatpush.bf16.msra.mxu0 %v773
        %974 = vmatpush.bf16.msra.mxu0 %v772
        %975 = vmatpush.bf16.msra.mxu0 %v771
        %976 = vmatmul.bf16.gmra.mxu0 %v491
        %v977 = vpop.f32.mrf.mxu0
        %v978 = vadd.f32 %v949, %v977
        %v979 = vpop.f32.mrf.mxu0
        %v980 = vadd.f32 %v951, %v979
        %981 = vmatmul.bf16.gmra.mxu0 %v498
        %v982 = vpop.f32.mrf.mxu0
        %v983 = vadd.f32 %v954, %v982
        %v984 = vpop.f32.mrf.mxu0
        %v985 = vadd.f32 %v956, %v984
        %986 = vmatmul.bf16.gmra.mxu0 %v505
        %v987 = vpop.f32.mrf.mxu0
        %v988 = vadd.f32 %v959, %v987
        %v989 = vpop.f32.mrf.mxu0
        %v990 = vadd.f32 %v961, %v989
        %991 = vmatmul.bf16.gmra.mxu0 %v512
        %v992 = vpop.f32.mrf.mxu0
        %v993 = vadd.f32 %v964, %v992
        %v994 = vpop.f32.mrf.mxu0
        %v995 = vadd.f32 %v966, %v994
        %996 = vdwg.mxu0
        %997 = vmatpush.bf16.msra.mxu0 %v786
        %998 = vmatpush.bf16.msra.mxu0 %v785
        %999 = vmatpush.bf16.msra.mxu0 %v784
        %1000 = vmatpush.bf16.msra.mxu0 %v783
        %1001 = vmatpush.bf16.msra.mxu0 %v782
        %1002 = vmatpush.bf16.msra.mxu0 %v781
        %1003 = vmatpush.bf16.msra.mxu0 %v780
        %1004 = vmatpush.bf16.msra.mxu0 %v779
        %1005 = vmatmul.bf16.gmra.mxu0 %v492
        %v1006 = vpop.f32.mrf.mxu0
        %v1007 = vadd.f32 %v978, %v1006
        %v1008 = vpop.f32.mrf.mxu0
        %v1009 = vadd.f32 %v980, %v1008
        %1010 = vmatmul.bf16.gmra.mxu0 %v499
        %v1011 = vpop.f32.mrf.mxu0
        %v1012 = vadd.f32 %v983, %v1011
        %v1013 = vpop.f32.mrf.mxu0
        %v1014 = vadd.f32 %v985, %v1013
        %1015 = vmatmul.bf16.gmra.mxu0 %v506
        %v1016 = vpop.f32.mrf.mxu0
        %v1017 = vadd.f32 %v988, %v1016
        %v1018 = vpop.f32.mrf.mxu0
        %v1019 = vadd.f32 %v990, %v1018
        %1020 = vmatmul.bf16.gmra.mxu0 %v513
        %v1021 = vpop.f32.mrf.mxu0
        %v1022 = vadd.f32 %v993, %v1021
        %v1023 = vpop.f32.mrf.mxu0
        %v1024 = vadd.f32 %v995, %v1023
        %1025 = vdwg.mxu0
        %1026 = vmatpush.bf16.msra.mxu0 0
        %1027 = vmatpush.bf16.msra.mxu0 0
        %1028 = vmatpush.bf16.msra.mxu0 0
        %1029 = vmatpush.bf16.msra.mxu0 0
        %1030 = vmatpush.bf16.msra.mxu0 0
        %1031 = vmatpush.bf16.msra.mxu0 0
        %1032 = vmatpush.bf16.msra.mxu0 %v788
        %1033 = vmatpush.bf16.msra.mxu0 %v787
        %1034 = vmatmul.bf16.gmra.mxu0 %v841
        %v1035 = vpop.f32.mrf.mxu0
        %v1036 = vadd.f32 %v1007, %v1035
        %v1037 = vpop.f32.mrf.mxu0
        %v1038 = vadd.f32 %v1009, %v1037
        %1039 = vmatmul.bf16.gmra.mxu0 %v844
        %v1040 = vpop.f32.mrf.mxu0
        %v1041 = vadd.f32 %v1012, %v1040
        %v1042 = vpop.f32.mrf.mxu0
        %v1043 = vadd.f32 %v1014, %v1042
        %1044 = vmatmul.bf16.gmra.mxu0 %v847
        %v1045 = vpop.f32.mrf.mxu0
        %v1046 = vadd.f32 %v1017, %v1045
        %v1047 = vpop.f32.mrf.mxu0
        %v1048 = vadd.f32 %v1019, %v1047
        %1049 = vmatmul.bf16.gmra.mxu0 %v850
        %v1050 = vpop.f32.mrf.mxu0
        %v1051 = vadd.f32 %v1022, %v1050
        %v1052 = vpop.f32.mrf.mxu0
        %v1053 = vadd.f32 %v1024, %v1052
        %1054 = vdwg.mxu0
        %v1055 = vmax.f32 %v1036, %v1041
        %v1056 = vmax.f32 %v1038, %v1043
        %v1057 = vmax.f32 %v1046, %v1051
        %v1058 = vmax.f32 %v1048, %v1053
        %v1059 = vmax.f32 %v1055, %v1057
        %v1060 = vmax.f32 %v1056, %v1058
        %v1061 = vld [vmem:[%s2] sm:$0x1]
        %v1063 = vperm.slane %v1061, 0
        %v1065 = vadd.f32 %v1059, %v1063
        %v1066 = vadd.f32 %v1060, %v1063
        %v1067 = vmax.f32 %v1065, 0.0
        %v1068 = vmax.f32 %v1066, 0.0
        %v1069 = vpack.c.bf16 %v1067, %v1067
        %v1070 = vpack.c.bf16 %v1068, %v1068
        %vm1071 = vcmask 519168
        %1072 = vst.msk [vmem:[%s264] sm:$0xf] %vm1071, %v1069
        %1073 = vst.msk [vmem:[%s264 + $0x4] sm:$0xf] %vm1071, %v1070
        %s1074 = smul.u32 2, %s14
        %p1075 = scmp.lt.s32.totalorder %s1074, 3
        %s1076 = scalar_select %p1075, %s1074, 3
        %s1077 = smul.addr %s1076, 4
        %s1078 = scalar_lea.vmem %s3, %s1077
        // Predicated region
        $region59: #{net_forward.4} parent=53 // pred_check
          %p1079 = pneg %p100
        $region60: #{net_forward.4} parent=53 // pred_check_branch
          %1081 = sbr.rel (%p1079) target = $region62
        $region61: #{net_forward.4} parent=53 // pred_region
          %s1082 = smul.u32 2, %s14
        $region62: #{net_forward.4} parent=53 // pred_fallthru
          _
      $region54: #{net_forward.4} parent=5 // pred_fallthru
        _
      %p1083 = scmp.le.s32.totalorder 2, %s9
      // Predicated region
      $region63: #{net_forward.4} parent=5 // pred_check
        %p1084 = pneg %p1083
      $region64: #{net_forward.4} parent=5 // pred_check_branch
        %1086 = sbr.rel (%p1084) target = $region66
      $region65: #{net_forward.4} parent=5 // pred_region
        %s1087 = ssub.s32 %s9, 2
        // Predicated region
        $region67: #{net_forward.4} parent=65 // pred_check
          %p1088 = pneg %p106
        $region68: #{net_forward.4} parent=65 // pred_check_branch
          %1090 = sbr.rel (%p1088) target = $region70
        $region69: #{net_forward.4} parent=65 // pred_region
          %s1091 = smul.u32 2, %s15
          %p1092 = scmp.lt.s32.totalorder %s1091, 3
          %s1093 = scalar_select %p1092, %s1091, 3
          %s1094 = smul.addr %s1093, 4
          %s1095 = scalar_lea.vmem %s3, %s1094
        $region70: #{net_forward.4} parent=65 // pred_fallthru
          _
      $region66: #{net_forward.4} parent=5 // pred_fallthru
        _
    $region6: #{net_forward.4} parent=1 // loop_footer
      %s13 = sadd.s32 1, %s9
    $region7: #{net_forward.4} parent=1 // loop_footer_branch
      %8 = sbr.rel target = $region3
    $region8: #{net_forward.4} parent=1 // loop_exit
      _

// kernel: net_forward.5
$region0: #{net_forward.5}
  #allocation0 [shape = 'u32[]', space=smem, size = 0x4, offset = 0x4, fixed_abs, tag = 'smem constant byte address 0x4 - core index']
  #allocation1 [shape = 'u32[72,128]{1,0:T(1,128)}', space=vmem, size = 0x9000, scoped, tag = 'internal scratch']
  %s0 = inlined_call_operand.vmem [shape: bf16[32,1024], index: 0, kind: input, shape index: {}]
  %s1 = inlined_call_operand.vmem [shape: bf16[1024,512], index: 1, kind: input, shape index: {}]
  %s2 = inlined_call_operand.vmem [shape: f32[1,512], index: 2, kind: input, shape index: {}]
  %s3 = inlined_call_operand.vmem [shape: bf16[512,128], index: 3, kind: input, shape index: {}]
  %s4 = inlined_call_operand.vmem [shape: f32[1,128], index: 4, kind: input, shape index: {}]
  %s5 = inlined_call_operand.vmem [shape: f32[32,128], index: 5, kind: output, shape index: {}]
  %s6 = sld [smem:[#allocation0]]
  $region53: #{net_forward.5} parent=0
    _
  %s8 = ssub.s32 1, %s6
  %s9 = scalar_select 0, %s8, %s6
  loop: start=0, step=1, limit=4
  $region2: #{net_forward.5} parent=0 // loop_pre_header
    _
  $region3: #{net_forward.5} parent=0 // loop_header
    %s11 = sphi 0, %s15
    %p12 = scmp.ge.s32.totalorder %s11, 4
    %s21 = sphi 0, %s23
    %s24 = sphi 0, %s21
    %s25 = sphi 0, %s24
    %s41 = sphi 0, %s25
    %s45 = sphi 0, %s45
    %s47 = sphi 0, %s45
    %s48 = sphi 0, %s47
    %s62 = sphi 0, %s48
    %s66 = sphi 0, %s66
    %s68 = sphi 0, %s66
    %s69 = sphi 0, %s68
    %s83 = sphi 0, %s69
    %s87 = sphi 0, %s87
    %s89 = sphi 0, %s87
    %s90 = sphi 0, %s89
    %s104 = sphi 0, %s90
    %s108 = sphi 0, %s108
    %s110 = sphi 0, %s108
    %s111 = sphi 0, %s110
    %s125 = sphi 0, %s111
    %s131 = sphi 0, %s133
    %s134 = sphi 0, %s131
    %s135 = sphi 0, %s134
    %s151 = sphi 0, %s135
  $region4: #{net_forward.5} parent=0 // loop_header_branch
    %14 = sbr.rel (%p12) target = $region8
  $region5: #{net_forward.5} parent=0 // loop_body
    %s16 = ssub.s32 %s11, 1
    %s17 = ssub.s32 %s11, 2
    %s18 = sadd.s32 %s11, 1
    %s19 = ssub.s32 %s11, %s18
    %p20 = scmp.eq.s32.totalorder %s19, 0
    %s22 = sadd.s32 %s21, 1
    %s23 = scalar_select %p20, %s21, %s22
    %p26 = pneg %p20
    %p27 = scmp.eq.s32.totalorder %s11, 1
    %p28 = por %p26, %p27
    %p29 = scmp.ne.s32.totalorder %s21, %s24
    %p30 = scmp.eq.s32.totalorder %s11, 0
    %p31 = por %p29, %p30
    %p32 = scmp.ne.s32.totalorder %s21, %s24
    %p33 = scmp.eq.s32.totalorder %s16, 1
    %p34 = por %p32, %p33
    %p35 = scmp.ne.s32.totalorder %s24, %s25
    %p36 = scmp.eq.s32.totalorder %s16, 0
    %p37 = por %p35, %p36
    %p38 = scmp.ne.s32.totalorder %s24, %s25
    %p39 = scmp.eq.s32.totalorder %s17, 1
    %p40 = por %p38, %p39
    %p42 = scmp.ne.s32.totalorder %s25, %s41
    %p43 = scmp.eq.s32.totalorder %s17, 0
    %p44 = por %p42, %p43
    %s46 = sadd.s32 %s45, 1
    %p49 = scmp.eq.s32.totalorder %s11, 1
    %p50 = scmp.ne.s32.totalorder %s45, %s47
    %p51 = scmp.eq.s32.totalorder %s11, 0
    %p52 = por %p50, %p51
    %p53 = scmp.ne.s32.totalorder %s45, %s47
    %p54 = scmp.eq.s32.totalorder %s16, 1
    %p55 = por %p53, %p54
    %p56 = scmp.ne.s32.totalorder %s47, %s48
    %p57 = scmp.eq.s32.totalorder %s16, 0
    %p58 = por %p56, %p57
    %p59 = scmp.ne.s32.totalorder %s47, %s48
    %p60 = scmp.eq.s32.totalorder %s17, 1
    %p61 = por %p59, %p60
    %p63 = scmp.ne.s32.totalorder %s48, %s62
    %p64 = scmp.eq.s32.totalorder %s17, 0
    %p65 = por %p63, %p64
    %s67 = sadd.s32 %s66, 1
    %p70 = scmp.eq.s32.totalorder %s11, 1
    %p71 = scmp.ne.s32.totalorder %s66, %s68
    %p72 = scmp.eq.s32.totalorder %s11, 0
    %p73 = por %p71, %p72
    %p74 = scmp.ne.s32.totalorder %s66, %s68
    %p75 = scmp.eq.s32.totalorder %s16, 1
    %p76 = por %p74, %p75
    %p77 = scmp.ne.s32.totalorder %s68, %s69
    %p78 = scmp.eq.s32.totalorder %s16, 0
    %p79 = por %p77, %p78
    %p80 = scmp.ne.s32.totalorder %s68, %s69
    %p81 = scmp.eq.s32.totalorder %s17, 1
    %p82 = por %p80, %p81
    %p84 = scmp.ne.s32.totalorder %s69, %s83
    %p85 = scmp.eq.s32.totalorder %s17, 0
    %p86 = por %p84, %p85
    %s88 = sadd.s32 %s87, 1
    %p91 = scmp.eq.s32.totalorder %s11, 1
    %p92 = scmp.ne.s32.totalorder %s87, %s89
    %p93 = scmp.eq.s32.totalorder %s11, 0
    %p94 = por %p92, %p93
    %p95 = scmp.ne.s32.totalorder %s87, %s89
    %p96 = scmp.eq.s32.totalorder %s16, 1
    %p97 = por %p95, %p96
    %p98 = scmp.ne.s32.totalorder %s89, %s90
    %p99 = scmp.eq.s32.totalorder %s16, 0
    %p100 = por %p98, %p99
    %p101 = scmp.ne.s32.totalorder %s89, %s90
    %p102 = scmp.eq.s32.totalorder %s17, 1
    %p103 = por %p101, %p102
    %p105 = scmp.ne.s32.totalorder %s90, %s104
    %p106 = scmp.eq.s32.totalorder %s17, 0
    %p107 = por %p105, %p106
    %s109 = sadd.s32 %s108, 1
    %p112 = scmp.eq.s32.totalorder %s11, 1
    %p113 = scmp.ne.s32.totalorder %s108, %s110
    %p114 = scmp.eq.s32.totalorder %s11, 0
    %p115 = por %p113, %p114
    %p116 = scmp.ne.s32.totalorder %s108, %s110
    %p117 = scmp.eq.s32.totalorder %s16, 1
    %p118 = por %p116, %p117
    %p119 = scmp.ne.s32.totalorder %s110, %s111
    %p120 = scmp.eq.s32.totalorder %s16, 0
    %p121 = por %p119, %p120
    %p122 = scmp.ne.s32.totalorder %s110, %s111
    %p123 = scmp.eq.s32.totalorder %s17, 1
    %p124 = por %p122, %p123
    %p126 = scmp.ne.s32.totalorder %s111, %s125
    %p127 = scmp.eq.s32.totalorder %s17, 0
    %p128 = por %p126, %p127
    %s129 = ssub.s32 %s11, %s18
    %p130 = scmp.eq.s32.totalorder %s129, 0
    %s132 = sadd.s32 %s131, 1
    %s133 = scalar_select %p130, %s131, %s132
    %p136 = pneg %p130
    %p137 = scmp.eq.s32.totalorder %s11, 1
    %p138 = por %p136, %p137
    %p139 = scmp.ne.s32.totalorder %s131, %s134
    %p140 = scmp.eq.s32.totalorder %s11, 0
    %p141 = por %p139, %p140
    %p142 = scmp.ne.s32.totalorder %s131, %s134
    %p143 = scmp.eq.s32.totalorder %s16, 1
    %p144 = por %p142, %p143
    %p145 = scmp.ne.s32.totalorder %s134, %s135
    %p146 = scmp.eq.s32.totalorder %s16, 0
    %p147 = por %p145, %p146
    %p148 = scmp.ne.s32.totalorder %s134, %s135
    %p149 = scmp.eq.s32.totalorder %s17, 1
    %p150 = por %p148, %p149
    %p152 = scmp.ne.s32.totalorder %s135, %s151
    %p153 = scmp.eq.s32.totalorder %s17, 0
    %p154 = por %p152, %p153
    %p155 = scmp.le.s32.totalorder 1, %s11
    %p156 = scmp.lt.s32.totalorder %s11, 3
    %p157 = pnand %p155, %p156
    %p158 = pneg %p157
    // Predicated region
    $region9: #{net_forward.5} parent=5 // pred_check
      _
    $region10: #{net_forward.5} parent=5 // pred_check_branch
      %160 = sbr.rel (%p157) target = $region12
    $region11: #{net_forward.5} parent=5 // pred_region
      %s161 = ssub.s32 %s11, 1
      // Predicated region
      $region13: #{net_forward.5} parent=11 // pred_check
        %p162 = pneg %p58
      $region14: #{net_forward.5} parent=11 // pred_check_branch
        %164 = sbr.rel (%p162) target = $region16
      $region15: #{net_forward.5} parent=11 // pred_region
        _
      $region16: #{net_forward.5} parent=11 // pred_fallthru
        _
      // Predicated region
      $region17: #{net_forward.5} parent=11 // pred_check
        %p165 = pneg %p79
      $region18: #{net_forward.5} parent=11 // pred_check_branch
        %167 = sbr.rel (%p165) target = $region20
      $region19: #{net_forward.5} parent=11 // pred_region
        _
      $region20: #{net_forward.5} parent=11 // pred_fallthru
        _
      // Predicated region
      $region21: #{net_forward.5} parent=11 // pred_check
        %p168 = pneg %p100
      $region22: #{net_forward.5} parent=11 // pred_check_branch
        %170 = sbr.rel (%p168) target = $region24
      $region23: #{net_forward.5} parent=11 // pred_region
        _
      $region24: #{net_forward.5} parent=11 // pred_fallthru
        _
      // Predicated region
      $region25: #{net_forward.5} parent=11 // pred_check
        %p171 = pneg %p121
      $region26: #{net_forward.5} parent=11 // pred_check_branch
        %173 = sbr.rel (%p171) target = $region28
      $region27: #{net_forward.5} parent=11 // pred_region
        _
      $region28: #{net_forward.5} parent=11 // pred_fallthru
        _
    $region12: #{net_forward.5} parent=5 // pred_fallthru
      _
    %p174 = scmp.lt.s32.totalorder %s11, 2
    // Predicated region
    $region29: #{net_forward.5} parent=5 // pred_check
      %p175 = pneg %p174
    $region30: #{net_forward.5} parent=5 // pred_check_branch
      %177 = sbr.rel (%p175) target = $region32
    $region31: #{net_forward.5} parent=5 // pred_region
      // Predicated region
      $region33: #{net_forward.5} parent=31 // pred_check
        %p178 = pneg %p31
      $region34: #{net_forward.5} parent=31 // pred_check_branch
        %180 = sbr.rel (%p178) target = $region36
      $region35: #{net_forward.5} parent=31 // pred_region
        %s181 = smul.u32 2, %s11
        %p182 = scmp.lt.s32.totalorder %s181, 3
        %s183 = scalar_select %p182, %s181, 3
        %s184 = smul.addr %s183, 8
        %s185 = smul.addr %s184, 4
        %s186 = scalar_lea.vmem %s0, %s185
        %s187 = smul.u32 2, %s11
      $region36: #{net_forward.5} parent=31 // pred_fallthru
        _
    $region32: #{net_forward.5} parent=5 // pred_fallthru
      _
    %p188 = scmp.le.s32.totalorder 1, %s11
    %p189 = scmp.lt.s32.totalorder %s11, 3
    %p190 = pnand %p188, %p189
    %p191 = pneg %p190
    // Predicated region
    $region37: #{net_forward.5} parent=5 // pred_check
      _
    $region38: #{net_forward.5} parent=5 // pred_check_branch
      %193 = sbr.rel (%p190) target = $region40
    $region39: #{net_forward.5} parent=5 // pred_region
      %s194 = ssub.s32 %s11, 1
      %s195 = smul.u32 2, %s16
      %p196 = scmp.lt.s32.totalorder %s195, 3
      %s197 = scalar_select %p196, %s195, 3
      %s198 = smul.addr %s197, 8
      %s199 = smul.addr %s198, 4
      %s200 = scalar_lea.vmem %s0, %s199
      %p201 = pneg %p37
      %p202 = pneg %p34
      %p203 = pneg %p58
      %p204 = pneg %p55
      %p205 = pneg %p79
      %p206 = pneg %p76
      %p207 = pneg %p100
      %p208 = pneg %p97
      %p209 = pneg %p121
      %p210 = pneg %p118
      %p211 = pneg %p147
      %p212 = pneg %p144
      %s213 = smul.u32 2, %s16
      %p214 = scmp.lt.s32.totalorder %s213, 3
      %s215 = scalar_select %p214, %s213, 3
      %s216 = smul.addr %s215, 8
      %s217 = scalar_lea.vmem %s5, %s216
      %s218 = smul.u32 2, %s16
      %p219 = scmp.lt.s32.totalorder %s218, 3
      %s220 = scalar_select %p219, %s218, 3
      %s221 = smul.addr %s220, 8
      %s222 = smul.addr %s221, 4
      %s223 = scalar_lea.vmem %s0, %s222
      %s224 = smul.u32 2, %s16
      %s225 = smul.u32 2, %s16
      %p226 = scmp.lt.s32.totalorder %s225, 3
      %s227 = scalar_select %p226, %s225, 3
      %s228 = smul.addr %s227, 8
      %s229 = scalar_lea.vmem %s5, %s228
      %s230 = smul.u32 2, %s16
      %v231 = vld [vmem:[%s223] sm:$0xff]
      %v232 = vld [vmem:[%s223 + $0x8] sm:$0xff]
      %v233 = vld [vmem:[%s223 + $0x10] sm:$0xff]
      %v234 = vld [vmem:[%s223 + $0x18] sm:$0xff]
      %v235 = vld [vmem:[%s223 + $0x20] sm:$0xff]
      %v236 = vld [vmem:[%s223 + $0x28] sm:$0xff]
      %v237 = vld [vmem:[%s223 + $0x30] sm:$0xff]
      %v238 = vld [vmem:[%s223 + $0x38] sm:$0xff]
      %v239 = vld [vmem:[%s1] sm:$0xff]
      %v240 = vld [vmem:[%s1 + $0x8] sm:$0xff]
      %v241 = vld [vmem:[%s1 + $0x10] sm:$0xff]
      %v242 = vld [vmem:[%s1 + $0x18] sm:$0xff]
      %v243 = vld [vmem:[%s1 + $0x20] sm:$0xff]
      %v244 = vld [vmem:[%s1 + $0x28] sm:$0xff]
      %v245 = vld [vmem:[%s1 + $0x30] sm:$0xff]
      %v246 = vld [vmem:[%s1 + $0x38] sm:$0xff]
      %v247 = vld [vmem:[%s1 + $0x40] sm:$0xff]
      %v248 = vld [vmem:[%s1 + $0x48] sm:$0xff]
      %v249 = vld [vmem:[%s1 + $0x50] sm:$0xff]
      %v250 = vld [vmem:[%s1 + $0x58] sm:$0xff]
      %v251 = vld [vmem:[%s1 + $0x60] sm:$0xff]
      %v252 = vld [vmem:[%s1 + $0x68] sm:$0xff]
      %v253 = vld [vmem:[%s1 + $0x70] sm:$0xff]
      %v254 = vld [vmem:[%s1 + $0x78] sm:$0xff]
      %v255 = vld [vmem:[%s1 + $0x80] sm:$0xff]
      %v256 = vld [vmem:[%s1 + $0x88] sm:$0xff]
      %v257 = vld [vmem:[%s1 + $0x90] sm:$0xff]
      %v258 = vld [vmem:[%s1 + $0x98] sm:$0xff]
      %v259 = vld [vmem:[%s1 + $0xa0] sm:$0xff]
      %v260 = vld [vmem:[%s1 + $0xa8] sm:$0xff]
      %v261 = vld [vmem:[%s1 + $0xb0] sm:$0xff]
      %v262 = vld [vmem:[%s1 + $0xb8] sm:$0xff]
      %v263 = vld [vmem:[%s1 + $0xc0] sm:$0xff]
      %v264 = vld [vmem:[%s1 + $0xc8] sm:$0xff]
      %v265 = vld [vmem:[%s1 + $0xd0] sm:$0xff]
      %v266 = vld [vmem:[%s1 + $0xd8] sm:$0xff]
      %v267 = vld [vmem:[%s1 + $0xe0] sm:$0xff]
      %v268 = vld [vmem:[%s1 + $0xe8] sm:$0xff]
      %v269 = vld [vmem:[%s1 + $0xf0] sm:$0xff]
      %v270 = vld [vmem:[%s1 + $0xf8] sm:$0xff]
      %v271 = vld [vmem:[%s1 + $0x100] sm:$0xff]
      %v272 = vld [vmem:[%s1 + $0x108] sm:$0xff]
      %v273 = vld [vmem:[%s1 + $0x110] sm:$0xff]
      %v274 = vld [vmem:[%s1 + $0x118] sm:$0xff]
      %v275 = vld [vmem:[%s1 + $0x120] sm:$0xff]
      %v276 = vld [vmem:[%s1 + $0x128] sm:$0xff]
      %v277 = vld [vmem:[%s1 + $0x130] sm:$0xff]
      %v278 = vld [vmem:[%s1 + $0x138] sm:$0xff]
      %v279 = vld [vmem:[%s1 + $0x140] sm:$0xff]
      %v280 = vld [vmem:[%s1 + $0x148] sm:$0xff]
      %v281 = vld [vmem:[%s1 + $0x150] sm:$0xff]
      %v282 = vld [vmem:[%s1 + $0x158] sm:$0xff]
      %v283 = vld [vmem:[%s1 + $0x160] sm:$0xff]
      %v284 = vld [vmem:[%s1 + $0x168] sm:$0xff]
      %v285 = vld [vmem:[%s1 + $0x170] sm:$0xff]
      %v286 = vld [vmem:[%s1 + $0x178] sm:$0xff]
      %v287 = vld [vmem:[%s1 + $0x180] sm:$0xff]
      %v288 = vld [vmem:[%s1 + $0x188] sm:$0xff]
      %v289 = vld [vmem:[%s1 + $0x190] sm:$0xff]
      %v290 = vld [vmem:[%s1 + $0x198] sm:$0xff]
      %v291 = vld [vmem:[%s1 + $0x1a0] sm:$0xff]
      %v292 = vld [vmem:[%s1 + $0x1a8] sm:$0xff]
      %v293 = vld [vmem:[%s1 + $0x1b0] sm:$0xff]
      %v294 = vld [vmem:[%s1 + $0x1b8] sm:$0xff]
      %v295 = vld [vmem:[%s1 + $0x1c0] sm:$0xff]
      %v296 = vld [vmem:[%s1 + $0x1c8] sm:$0xff]
      %v297 = vld [vmem:[%s1 + $0x1d0] sm:$0xff]
      %v298 = vld [vmem:[%s1 + $0x1d8] sm:$0xff]
      %v299 = vld [vmem:[%s1 + $0x1e0] sm:$0xff]
      %v300 = vld [vmem:[%s1 + $0x1e8] sm:$0xff]
      %v301 = vld [vmem:[%s1 + $0x1f0] sm:$0xff]
      %v302 = vld [vmem:[%s1 + $0x1f8] sm:$0xff]
      %v303 = vld [vmem:[%s1 + $0x200] sm:$0xff]
      %v304 = vld [vmem:[%s1 + $0x208] sm:$0xff]
      %v305 = vld [vmem:[%s1 + $0x210] sm:$0xff]
      %v306 = vld [vmem:[%s1 + $0x218] sm:$0xff]
      %v307 = vld [vmem:[%s1 + $0x220] sm:$0xff]
      %v308 = vld [vmem:[%s1 + $0x228] sm:$0xff]
      %v309 = vld [vmem:[%s1 + $0x230] sm:$0xff]
      %v310 = vld [vmem:[%s1 + $0x238] sm:$0xff]
      %v311 = vld [vmem:[%s1 + $0x240] sm:$0xff]
      %v312 = vld [vmem:[%s1 + $0x248] sm:$0xff]
      %v313 = vld [vmem:[%s1 + $0x250] sm:$0xff]
      %v314 = vld [vmem:[%s1 + $0x258] sm:$0xff]
      %v315 = vld [vmem:[%s1 + $0x260] sm:$0xff]
      %v316 = vld [vmem:[%s1 + $0x268] sm:$0xff]
      %v317 = vld [vmem:[%s1 + $0x270] sm:$0xff]
      %v318 = vld [vmem:[%s1 + $0x278] sm:$0xff]
      %v319 = vld [vmem:[%s1 + $0x280] sm:$0xff]
      %v320 = vld [vmem:[%s1 + $0x288] sm:$0xff]
      %v321 = vld [vmem:[%s1 + $0x290] sm:$0xff]
      %v322 = vld [vmem:[%s1 + $0x298] sm:$0xff]
      %v323 = vld [vmem:[%s1 + $0x2a0] sm:$0xff]
      %v324 = vld [vmem:[%s1 + $0x2a8] sm:$0xff]
      %v325 = vld [vmem:[%s1 + $0x2b0] sm:$0xff]
      %v326 = vld [vmem:[%s1 + $0x2b8] sm:$0xff]
      %v327 = vld [vmem:[%s1 + $0x2c0] sm:$0xff]
      %v328 = vld [vmem:[%s1 + $0x2c8] sm:$0xff]
      %v329 = vld [vmem:[%s1 + $0x2d0] sm:$0xff]
      %v330 = vld [vmem:[%s1 + $0x2d8] sm:$0xff]
      %v331 = vld [vmem:[%s1 + $0x2e0] sm:$0xff]
      %v332 = vld [vmem:[%s1 + $0x2e8] sm:$0xff]
      %v333 = vld [vmem:[%s1 + $0x2f0] sm:$0xff]
      %v334 = vld [vmem:[%s1 + $0x2f8] sm:$0xff]
      %v335 = vld [vmem:[%s1 + $0x300] sm:$0xff]
      %v336 = vld [vmem:[%s1 + $0x308] sm:$0xff]
      %v337 = vld [vmem:[%s1 + $0x310] sm:$0xff]
      %v338 = vld [vmem:[%s1 + $0x318] sm:$0xff]
      %v339 = vld [vmem:[%s1 + $0x320] sm:$0xff]
      %v340 = vld [vmem:[%s1 + $0x328] sm:$0xff]
      %v341 = vld [vmem:[%s1 + $0x330] sm:$0xff]
      %v342 = vld [vmem:[%s1 + $0x338] sm:$0xff]
      %v343 = vld [vmem:[%s1 + $0x340] sm:$0xff]
      %v344 = vld [vmem:[%s1 + $0x348] sm:$0xff]
      %v345 = vld [vmem:[%s1 + $0x350] sm:$0xff]
      %v346 = vld [vmem:[%s1 + $0x358] sm:$0xff]
      %v347 = vld [vmem:[%s1 + $0x360] sm:$0xff]
      %v348 = vld [vmem:[%s1 + $0x368] sm:$0xff]
      %v349 = vld [vmem:[%s1 + $0x370] sm:$0xff]
      %v350 = vld [vmem:[%s1 + $0x378] sm:$0xff]
      %v351 = vld [vmem:[%s1 + $0x380] sm:$0xff]
      %v352 = vld [vmem:[%s1 + $0x388] sm:$0xff]
      %v353 = vld [vmem:[%s1 + $0x390] sm:$0xff]
      %v354 = vld [vmem:[%s1 + $0x398] sm:$0xff]
      %v355 = vld [vmem:[%s1 + $0x3a0] sm:$0xff]
      %v356 = vld [vmem:[%s1 + $0x3a8] sm:$0xff]
      %v357 = vld [vmem:[%s1 + $0x3b0] sm:$0xff]
      %v358 = vld [vmem:[%s1 + $0x3b8] sm:$0xff]
      %v359 = vld [vmem:[%s1 + $0x3c0] sm:$0xff]
      %v360 = vld [vmem:[%s1 + $0x3c8] sm:$0xff]
      %v361 = vld [vmem:[%s1 + $0x3d0] sm:$0xff]
      %v362 = vld [vmem:[%s1 + $0x3d8] sm:$0xff]
      %v363 = vld [vmem:[%s1 + $0x3e0] sm:$0xff]
      %v364 = vld [vmem:[%s1 + $0x3e8] sm:$0xff]
      %v365 = vld [vmem:[%s1 + $0x3f0] sm:$0xff]
      %v366 = vld [vmem:[%s1 + $0x3f8] sm:$0xff]
      %v367 = vld [vmem:[%s1 + $0x400] sm:$0xff]
      %v368 = vld [vmem:[%s1 + $0x408] sm:$0xff]
      %v369 = vld [vmem:[%s1 + $0x410] sm:$0xff]
      %v370 = vld [vmem:[%s1 + $0x418] sm:$0xff]
      %v371 = vld [vmem:[%s1 + $0x420] sm:$0xff]
      %v372 = vld [vmem:[%s1 + $0x428] sm:$0xff]
      %v373 = vld [vmem:[%s1 + $0x430] sm:$0xff]
      %v374 = vld [vmem:[%s1 + $0x438] sm:$0xff]
      %v375 = vld [vmem:[%s1 + $0x440] sm:$0xff]
      %v376 = vld [vmem:[%s1 + $0x448] sm:$0xff]
      %v377 = vld [vmem:[%s1 + $0x450] sm:$0xff]
      %v378 = vld [vmem:[%s1 + $0x458] sm:$0xff]
      %v379 = vld [vmem:[%s1 + $0x460] sm:$0xff]
      %v380 = vld [vmem:[%s1 + $0x468] sm:$0xff]
      %v381 = vld [vmem:[%s1 + $0x470] sm:$0xff]
      %v382 = vld [vmem:[%s1 + $0x478] sm:$0xff]
      %v383 = vld [vmem:[%s1 + $0x480] sm:$0xff]
      %v384 = vld [vmem:[%s1 + $0x488] sm:$0xff]
      %v385 = vld [vmem:[%s1 + $0x490] sm:$0xff]
      %v386 = vld [vmem:[%s1 + $0x498] sm:$0xff]
      %v387 = vld [vmem:[%s1 + $0x4a0] sm:$0xff]
      %v388 = vld [vmem:[%s1 + $0x4a8] sm:$0xff]
      %v389 = vld [vmem:[%s1 + $0x4b0] sm:$0xff]
      %v390 = vld [vmem:[%s1 + $0x4b8] sm:$0xff]
      %v391 = vld [vmem:[%s1 + $0x4c0] sm:$0xff]
      %v392 = vld [vmem:[%s1 + $0x4c8] sm:$0xff]
      %v393 = vld [vmem:[%s1 + $0x4d0] sm:$0xff]
      %v394 = vld [vmem:[%s1 + $0x4d8] sm:$0xff]
      %v395 = vld [vmem:[%s1 + $0x4e0] sm:$0xff]
      %v396 = vld [vmem:[%s1 + $0x4e8] sm:$0xff]
      %v397 = vld [vmem:[%s1 + $0x4f0] sm:$0xff]
      %v398 = vld [vmem:[%s1 + $0x4f8] sm:$0xff]
      %v399 = vld [vmem:[%s1 + $0x500] sm:$0xff]
      %v400 = vld [vmem:[%s1 + $0x508] sm:$0xff]
      %v401 = vld [vmem:[%s1 + $0x510] sm:$0xff]
      %v402 = vld [vmem:[%s1 + $0x518] sm:$0xff]
      %v403 = vld [vmem:[%s1 + $0x520] sm:$0xff]
      %v404 = vld [vmem:[%s1 + $0x528] sm:$0xff]
      %v405 = vld [vmem:[%s1 + $0x530] sm:$0xff]
      %v406 = vld [vmem:[%s1 + $0x538] sm:$0xff]
      %v407 = vld [vmem:[%s1 + $0x540] sm:$0xff]
      %v408 = vld [vmem:[%s1 + $0x548] sm:$0xff]
      %v409 = vld [vmem:[%s1 + $0x550] sm:$0xff]
      %v410 = vld [vmem:[%s1 + $0x558] sm:$0xff]
      %v411 = vld [vmem:[%s1 + $0x560] sm:$0xff]
      %v412 = vld [vmem:[%s1 + $0x568] sm:$0xff]
      %v413 = vld [vmem:[%s1 + $0x570] sm:$0xff]
      %v414 = vld [vmem:[%s1 + $0x578] sm:$0xff]
      %v415 = vld [vmem:[%s1 + $0x580] sm:$0xff]
      %v416 = vld [vmem:[%s1 + $0x588] sm:$0xff]
      %v417 = vld [vmem:[%s1 + $0x590] sm:$0xff]
      %v418 = vld [vmem:[%s1 + $0x598] sm:$0xff]
      %v419 = vld [vmem:[%s1 + $0x5a0] sm:$0xff]
      %v420 = vld [vmem:[%s1 + $0x5a8] sm:$0xff]
      %v421 = vld [vmem:[%s1 + $0x5b0] sm:$0xff]
      %v422 = vld [vmem:[%s1 + $0x5b8] sm:$0xff]
      %v423 = vld [vmem:[%s1 + $0x5c0] sm:$0xff]
      %v424 = vld [vmem:[%s1 + $0x5c8] sm:$0xff]
      %v425 = vld [vmem:[%s1 + $0x5d0] sm:$0xff]
      %v426 = vld [vmem:[%s1 + $0x5d8] sm:$0xff]
      %v427 = vld [vmem:[%s1 + $0x5e0] sm:$0xff]
      %v428 = vld [vmem:[%s1 + $0x5e8] sm:$0xff]
      %v429 = vld [vmem:[%s1 + $0x5f0] sm:$0xff]
      %v430 = vld [vmem:[%s1 + $0x5f8] sm:$0xff]
      %v431 = vld [vmem:[%s1 + $0x600] sm:$0xff]
      %v432 = vld [vmem:[%s1 + $0x608] sm:$0xff]
      %v433 = vld [vmem:[%s1 + $0x610] sm:$0xff]
      %v434 = vld [vmem:[%s1 + $0x618] sm:$0xff]
      %v435 = vld [vmem:[%s1 + $0x620] sm:$0xff]
      %v436 = vld [vmem:[%s1 + $0x628] sm:$0xff]
      %v437 = vld [vmem:[%s1 + $0x630] sm:$0xff]
      %v438 = vld [vmem:[%s1 + $0x638] sm:$0xff]
      %v439 = vld [vmem:[%s1 + $0x640] sm:$0xff]
      %v440 = vld [vmem:[%s1 + $0x648] sm:$0xff]
      %v441 = vld [vmem:[%s1 + $0x650] sm:$0xff]
      %v442 = vld [vmem:[%s1 + $0x658] sm:$0xff]
      %v443 = vld [vmem:[%s1 + $0x660] sm:$0xff]
      %v444 = vld [vmem:[%s1 + $0x668] sm:$0xff]
      %v445 = vld [vmem:[%s1 + $0x670] sm:$0xff]
      %v446 = vld [vmem:[%s1 + $0x678] sm:$0xff]
      %v447 = vld [vmem:[%s1 + $0x680] sm:$0xff]
      %v448 = vld [vmem:[%s1 + $0x688] sm:$0xff]
      %v449 = vld [vmem:[%s1 + $0x690] sm:$0xff]
      %v450 = vld [vmem:[%s1 + $0x698] sm:$0xff]
      %v451 = vld [vmem:[%s1 + $0x6a0] sm:$0xff]
      %v452 = vld [vmem:[%s1 + $0x6a8] sm:$0xff]
      %v453 = vld [vmem:[%s1 + $0x6b0] sm:$0xff]
      %v454 = vld [vmem:[%s1 + $0x6b8] sm:$0xff]
      %v455 = vld [vmem:[%s1 + $0x6c0] sm:$0xff]
      %v456 = vld [vmem:[%s1 + $0x6c8] sm:$0xff]
      %v457 = vld [vmem:[%s1 + $0x6d0] sm:$0xff]
      %v458 = vld [vmem:[%s1 + $0x6d8] sm:$0xff]
      %v459 = vld [vmem:[%s1 + $0x6e0] sm:$0xff]
      %v460 = vld [vmem:[%s1 + $0x6e8] sm:$0xff]
      %v461 = vld [vmem:[%s1 + $0x6f0] sm:$0xff]
      %v462 = vld [vmem:[%s1 + $0x6f8] sm:$0xff]
      %v463 = vld [vmem:[%s1 + $0x700] sm:$0xff]
      %v464 = vld [vmem:[%s1 + $0x708] sm:$0xff]
      %v465 = vld [vmem:[%s1 + $0x710] sm:$0xff]
      %v466 = vld [vmem:[%s1 + $0x718] sm:$0xff]
      %v467 = vld [vmem:[%s1 + $0x720] sm:$0xff]
      %v468 = vld [vmem:[%s1 + $0x728] sm:$0xff]
      %v469 = vld [vmem:[%s1 + $0x730] sm:$0xff]
      %v470 = vld [vmem:[%s1 + $0x738] sm:$0xff]
      %v471 = vld [vmem:[%s1 + $0x740] sm:$0xff]
      %v472 = vld [vmem:[%s1 + $0x748] sm:$0xff]
      %v473 = vld [vmem:[%s1 + $0x750] sm:$0xff]
      %v474 = vld [vmem:[%s1 + $0x758] sm:$0xff]
      %v475 = vld [vmem:[%s1 + $0x760] sm:$0xff]
      %v476 = vld [vmem:[%s1 + $0x768] sm:$0xff]
      %v477 = vld [vmem:[%s1 + $0x770] sm:$0xff]
      %v478 = vld [vmem:[%s1 + $0x778] sm:$0xff]
      %v479 = vld [vmem:[%s1 + $0x780] sm:$0xff]
      %v480 = vld [vmem:[%s1 + $0x788] sm:$0xff]
      %v481 = vld [vmem:[%s1 + $0x790] sm:$0xff]
      %v482 = vld [vmem:[%s1 + $0x798] sm:$0xff]
      %v483 = vld [vmem:[%s1 + $0x7a0] sm:$0xff]
      %v484 = vld [vmem:[%s1 + $0x7a8] sm:$0xff]
      %v485 = vld [vmem:[%s1 + $0x7b0] sm:$0xff]
      %v486 = vld [vmem:[%s1 + $0x7b8] sm:$0xff]
      %v487 = vld [vmem:[%s1 + $0x7c0] sm:$0xff]
      %v488 = vld [vmem:[%s1 + $0x7c8] sm:$0xff]
      %v489 = vld [vmem:[%s1 + $0x7d0] sm:$0xff]
      %v490 = vld [vmem:[%s1 + $0x7d8] sm:$0xff]
      %v491 = vld [vmem:[%s1 + $0x7e0] sm:$0xff]
      %v492 = vld [vmem:[%s1 + $0x7e8] sm:$0xff]
      %v493 = vld [vmem:[%s1 + $0x7f0] sm:$0xff]
      %v494 = vld [vmem:[%s1 + $0x7f8] sm:$0xff]
      %v495 = vld [vmem:[%s2] sm:$0xf]
      %v497 = vperm.slane %v495, 0
      %v498 = vperm.slane %v495, 1
      %v499 = vperm.slane %v495, 2
      %v500 = vperm.slane %v495, 3
      %v513 = vunpack.c.l.b16 %v231
      %v514 = vunpack.c.h.b16 %v231
      %v515 = vunpack.c.l.b16 %v232
      %v516 = vunpack.c.h.b16 %v232
      %v517 = vunpack.c.l.b16 %v233
      %v518 = vunpack.c.h.b16 %v233
      %v519 = vunpack.c.l.b16 %v234
      %v520 = vunpack.c.h.b16 %v234
      %v521 = vunpack.c.l.b16 %v235
      %v522 = vunpack.c.h.b16 %v235
      %v523 = vunpack.c.l.b16 %v236
      %v524 = vunpack.c.h.b16 %v236
      %v525 = vunpack.c.l.b16 %v237
      %v526 = vunpack.c.h.b16 %v237
      %v527 = vunpack.c.l.b16 %v238
      %v528 = vunpack.c.h.b16 %v238
      %v529 = vpack.c.b16 %v521, %v513
      %v530 = vpack.c.b16 %v522, %v514
      %v531 = vpack.c.b16 %v523, %v515
      %v532 = vpack.c.b16 %v524, %v516
      %v533 = vpack.c.b16 %v525, %v517
      %v534 = vpack.c.b16 %v526, %v518
      %v535 = vpack.c.b16 %v527, %v519
      %v536 = vpack.c.b16 %v528, %v520
      %v801 = vunpack.c.l.b16 %v239
      %v802 = vunpack.c.h.b16 %v239
      %v803 = vunpack.c.l.b16 %v240
      %v804 = vunpack.c.h.b16 %v240
      %v805 = vunpack.c.l.b16 %v241
      %v806 = vunpack.c.h.b16 %v241
      %v807 = vunpack.c.l.b16 %v242
      %v808 = vunpack.c.h.b16 %v242
      %v809 = vunpack.c.l.b16 %v243
      %v810 = vunpack.c.h.b16 %v243
      %v811 = vunpack.c.l.b16 %v244
      %v812 = vunpack.c.h.b16 %v244
      %v813 = vunpack.c.l.b16 %v245
      %v814 = vunpack.c.h.b16 %v245
      %v815 = vunpack.c.l.b16 %v246
      %v816 = vunpack.c.h.b16 %v246
      %v817 = vunpack.c.l.b16 %v247
      %v818 = vunpack.c.h.b16 %v247
      %v819 = vunpack.c.l.b16 %v248
      %v820 = vunpack.c.h.b16 %v248
      %v821 = vunpack.c.l.b16 %v249
      %v822 = vunpack.c.h.b16 %v249
      %v823 = vunpack.c.l.b16 %v250
      %v824 = vunpack.c.h.b16 %v250
      %v825 = vunpack.c.l.b16 %v251
      %v826 = vunpack.c.h.b16 %v251
      %v827 = vunpack.c.l.b16 %v252
      %v828 = vunpack.c.h.b16 %v252
      %v829 = vunpack.c.l.b16 %v253
      %v830 = vunpack.c.h.b16 %v253
      %v831 = vunpack.c.l.b16 %v254
      %v832 = vunpack.c.h.b16 %v254
      %v833 = vunpack.c.l.b16 %v255
      %v834 = vunpack.c.h.b16 %v255
      %v835 = vunpack.c.l.b16 %v256
      %v836 = vunpack.c.h.b16 %v256
      %v837 = vunpack.c.l.b16 %v257
      %v838 = vunpack.c.h.b16 %v257
      %v839 = vunpack.c.l.b16 %v258
      %v840 = vunpack.c.h.b16 %v258
      %v841 = vunpack.c.l.b16 %v259
      %v842 = vunpack.c.h.b16 %v259
      %v843 = vunpack.c.l.b16 %v260
      %v844 = vunpack.c.h.b16 %v260
      %v845 = vunpack.c.l.b16 %v261
      %v846 = vunpack.c.h.b16 %v261
      %v847 = vunpack.c.l.b16 %v262
      %v848 = vunpack.c.h.b16 %v262
      %v849 = vunpack.c.l.b16 %v263
      %v850 = vunpack.c.h.b16 %v263
      %v851 = vunpack.c.l.b16 %v264
      %v852 = vunpack.c.h.b16 %v264
      %v853 = vunpack.c.l.b16 %v265
      %v854 = vunpack.c.h.b16 %v265
      %v855 = vunpack.c.l.b16 %v266
      %v856 = vunpack.c.h.b16 %v266
      %v857 = vunpack.c.l.b16 %v267
      %v858 = vunpack.c.h.b16 %v267
      %v859 = vunpack.c.l.b16 %v268
      %v860 = vunpack.c.h.b16 %v268
      %v861 = vunpack.c.l.b16 %v269
      %v862 = vunpack.c.h.b16 %v269
      %v863 = vunpack.c.l.b16 %v270
      %v864 = vunpack.c.h.b16 %v270
      %v865 = vunpack.c.l.b16 %v271
      %v866 = vunpack.c.h.b16 %v271
      %v867 = vunpack.c.l.b16 %v272
      %v868 = vunpack.c.h.b16 %v272
      %v869 = vunpack.c.l.b16 %v273
      %v870 = vunpack.c.h.b16 %v273
      %v871 = vunpack.c.l.b16 %v274
      %v872 = vunpack.c.h.b16 %v274
      %v873 = vunpack.c.l.b16 %v275
      %v874 = vunpack.c.h.b16 %v275
      %v875 = vunpack.c.l.b16 %v276
      %v876 = vunpack.c.h.b16 %v276
      %v877 = vunpack.c.l.b16 %v277
      %v878 = vunpack.c.h.b16 %v277
      %v879 = vunpack.c.l.b16 %v278
      %v880 = vunpack.c.h.b16 %v278
      %v881 = vunpack.c.l.b16 %v279
      %v882 = vunpack.c.h.b16 %v279
      %v883 = vunpack.c.l.b16 %v280
      %v884 = vunpack.c.h.b16 %v280
      %v885 = vunpack.c.l.b16 %v281
      %v886 = vunpack.c.h.b16 %v281
      %v887 = vunpack.c.l.b16 %v282
      %v888 = vunpack.c.h.b16 %v282
      %v889 = vunpack.c.l.b16 %v283
      %v890 = vunpack.c.h.b16 %v283
      %v891 = vunpack.c.l.b16 %v284
      %v892 = vunpack.c.h.b16 %v284
      %v893 = vunpack.c.l.b16 %v285
      %v894 = vunpack.c.h.b16 %v285
      %v895 = vunpack.c.l.b16 %v286
      %v896 = vunpack.c.h.b16 %v286
      %v897 = vunpack.c.l.b16 %v287
      %v898 = vunpack.c.h.b16 %v287
      %v899 = vunpack.c.l.b16 %v288
      %v900 = vunpack.c.h.b16 %v288
      %v901 = vunpack.c.l.b16 %v289
      %v902 = vunpack.c.h.b16 %v289
      %v903 = vunpack.c.l.b16 %v290
      %v904 = vunpack.c.h.b16 %v290
      %v905 = vunpack.c.l.b16 %v291
      %v906 = vunpack.c.h.b16 %v291
      %v907 = vunpack.c.l.b16 %v292
      %v908 = vunpack.c.h.b16 %v292
      %v909 = vunpack.c.l.b16 %v293
      %v910 = vunpack.c.h.b16 %v293
      %v911 = vunpack.c.l.b16 %v294
      %v912 = vunpack.c.h.b16 %v294
      %v913 = vunpack.c.l.b16 %v295
      %v914 = vunpack.c.h.b16 %v295
      %v915 = vunpack.c.l.b16 %v296
      %v916 = vunpack.c.h.b16 %v296
      %v917 = vunpack.c.l.b16 %v297
      %v918 = vunpack.c.h.b16 %v297
      %v919 = vunpack.c.l.b16 %v298
      %v920 = vunpack.c.h.b16 %v298
      %v921 = vunpack.c.l.b16 %v299
      %v922 = vunpack.c.h.b16 %v299
      %v923 = vunpack.c.l.b16 %v300
      %v924 = vunpack.c.h.b16 %v300
      %v925 = vunpack.c.l.b16 %v301
      %v926 = vunpack.c.h.b16 %v301
      %v927 = vunpack.c.l.b16 %v302
      %v928 = vunpack.c.h.b16 %v302
      %v929 = vunpack.c.l.b16 %v303
      %v930 = vunpack.c.h.b16 %v303
      %v931 = vunpack.c.l.b16 %v304
      %v932 = vunpack.c.h.b16 %v304
      %v933 = vunpack.c.l.b16 %v305
      %v934 = vunpack.c.h.b16 %v305
      %v935 = vunpack.c.l.b16 %v306
      %v936 = vunpack.c.h.b16 %v306
      %v937 = vunpack.c.l.b16 %v307
      %v938 = vunpack.c.h.b16 %v307
      %v939 = vunpack.c.l.b16 %v308
      %v940 = vunpack.c.h.b16 %v308
      %v941 = vunpack.c.l.b16 %v309
      %v942 = vunpack.c.h.b16 %v309
      %v943 = vunpack.c.l.b16 %v310
      %v944 = vunpack.c.h.b16 %v310
      %v945 = vunpack.c.l.b16 %v311
      %v946 = vunpack.c.h.b16 %v311
      %v947 = vunpack.c.l.b16 %v312
      %v948 = vunpack.c.h.b16 %v312
      %v949 = vunpack.c.l.b16 %v313
      %v950 = vunpack.c.h.b16 %v313
      %v951 = vunpack.c.l.b16 %v314
      %v952 = vunpack.c.h.b16 %v314
      %v953 = vunpack.c.l.b16 %v315
      %v954 = vunpack.c.h.b16 %v315
      %v955 = vunpack.c.l.b16 %v316
      %v956 = vunpack.c.h.b16 %v316
      %v957 = vunpack.c.l.b16 %v317
      %v958 = vunpack.c.h.b16 %v317
      %v959 = vunpack.c.l.b16 %v318
      %v960 = vunpack.c.h.b16 %v318
      %v961 = vunpack.c.l.b16 %v319
      %v962 = vunpack.c.h.b16 %v319
      %v963 = vunpack.c.l.b16 %v320
      %v964 = vunpack.c.h.b16 %v320
      %v965 = vunpack.c.l.b16 %v321
      %v966 = vunpack.c.h.b16 %v321
      %v967 = vunpack.c.l.b16 %v322
      %v968 = vunpack.c.h.b16 %v322
      %v969 = vunpack.c.l.b16 %v323
      %v970 = vunpack.c.h.b16 %v323
      %v971 = vunpack.c.l.b16 %v324
      %v972 = vunpack.c.h.b16 %v324
      %v973 = vunpack.c.l.b16 %v325
      %v974 = vunpack.c.h.b16 %v325
      %v975 = vunpack.c.l.b16 %v326
      %v976 = vunpack.c.h.b16 %v326
      %v977 = vunpack.c.l.b16 %v327
      %v978 = vunpack.c.h.b16 %v327
      %v979 = vunpack.c.l.b16 %v328
      %v980 = vunpack.c.h.b16 %v328
      %v981 = vunpack.c.l.b16 %v329
      %v982 = vunpack.c.h.b16 %v329
      %v983 = vunpack.c.l.b16 %v330
      %v984 = vunpack.c.h.b16 %v330
      %v985 = vunpack.c.l.b16 %v331
      %v986 = vunpack.c.h.b16 %v331
      %v987 = vunpack.c.l.b16 %v332
      %v988 = vunpack.c.h.b16 %v332
      %v989 = vunpack.c.l.b16 %v333
      %v990 = vunpack.c.h.b16 %v333
      %v991 = vunpack.c.l.b16 %v334
      %v992 = vunpack.c.h.b16 %v334
      %v993 = vunpack.c.l.b16 %v335
      %v994 = vunpack.c.h.b16 %v335
      %v995 = vunpack.c.l.b16 %v336
      %v996 = vunpack.c.h.b16 %v336
      %v997 = vunpack.c.l.b16 %v337
      %v998 = vunpack.c.h.b16 %v337
      %v999 = vunpack.c.l.b16 %v338
      %v1000 = vunpack.c.h.b16 %v338
      %v1001 = vunpack.c.l.b16 %v339
      %v1002 = vunpack.c.h.b16 %v339
      %v1003 = vunpack.c.l.b16 %v340
      %v1004 = vunpack.c.h.b16 %v340
      %v1005 = vunpack.c.l.b16 %v341
      %v1006 = vunpack.c.h.b16 %v341
      %v1007 = vunpack.c.l.b16 %v342
      %v1008 = vunpack.c.h.b16 %v342
      %v1009 = vunpack.c.l.b16 %v343
      %v1010 = vunpack.c.h.b16 %v343
      %v1011 = vunpack.c.l.b16 %v344
      %v1012 = vunpack.c.h.b16 %v344
      %v1013 = vunpack.c.l.b16 %v345
      %v1014 = vunpack.c.h.b16 %v345
      %v1015 = vunpack.c.l.b16 %v346
      %v1016 = vunpack.c.h.b16 %v346
      %v1017 = vunpack.c.l.b16 %v347
      %v1018 = vunpack.c.h.b16 %v347
      %v1019 = vunpack.c.l.b16 %v348
      %v1020 = vunpack.c.h.b16 %v348
      %v1021 = vunpack.c.l.b16 %v349
      %v1022 = vunpack.c.h.b16 %v349
      %v1023 = vunpack.c.l.b16 %v350
      %v1024 = vunpack.c.h.b16 %v350
      %v1025 = vunpack.c.l.b16 %v351
      %v1026 = vunpack.c.h.b16 %v351
      %v1027 = vunpack.c.l.b16 %v352
      %v1028 = vunpack.c.h.b16 %v352
      %v1029 = vunpack.c.l.b16 %v353
      %v1030 = vunpack.c.h.b16 %v353
      %v1031 = vunpack.c.l.b16 %v354
      %v1032 = vunpack.c.h.b16 %v354
      %v1033 = vunpack.c.l.b16 %v355
      %v1034 = vunpack.c.h.b16 %v355
      %v1035 = vunpack.c.l.b16 %v356
      %v1036 = vunpack.c.h.b16 %v356
      %v1037 = vunpack.c.l.b16 %v357
      %v1038 = vunpack.c.h.b16 %v357
      %v1039 = vunpack.c.l.b16 %v358
      %v1040 = vunpack.c.h.b16 %v358
      %v1041 = vunpack.c.l.b16 %v359
      %v1042 = vunpack.c.h.b16 %v359
      %v1043 = vunpack.c.l.b16 %v360
      %v1044 = vunpack.c.h.b16 %v360
      %v1045 = vunpack.c.l.b16 %v361
      %v1046 = vunpack.c.h.b16 %v361
      %v1047 = vunpack.c.l.b16 %v362
      %v1048 = vunpack.c.h.b16 %v362
      %v1049 = vunpack.c.l.b16 %v363
      %v1050 = vunpack.c.h.b16 %v363
      %v1051 = vunpack.c.l.b16 %v364
      %v1052 = vunpack.c.h.b16 %v364
      %v1053 = vunpack.c.l.b16 %v365
      %v1054 = vunpack.c.h.b16 %v365
      %v1055 = vunpack.c.l.b16 %v366
      %v1056 = vunpack.c.h.b16 %v366
      %v1057 = vunpack.c.l.b16 %v367
      %v1058 = vunpack.c.h.b16 %v367
      %v1059 = vunpack.c.l.b16 %v368
      %v1060 = vunpack.c.h.b16 %v368
      %v1061 = vunpack.c.l.b16 %v369
      %v1062 = vunpack.c.h.b16 %v369
      %v1063 = vunpack.c.l.b16 %v370
      %v1064 = vunpack.c.h.b16 %v370
      %v1065 = vunpack.c.l.b16 %v371
      %v1066 = vunpack.c.h.b16 %v371
      %v1067 = vunpack.c.l.b16 %v372
      %v1068 = vunpack.c.h.b16 %v372
      %v1069 = vunpack.c.l.b16 %v373
      %v1070 = vunpack.c.h.b16 %v373
      %v1071 = vunpack.c.l.b16 %v374
      %v1072 = vunpack.c.h.b16 %v374
      %v1073 = vunpack.c.l.b16 %v375
      %v1074 = vunpack.c.h.b16 %v375
      %v1075 = vunpack.c.l.b16 %v376
      %v1076 = vunpack.c.h.b16 %v376
      %v1077 = vunpack.c.l.b16 %v377
      %v1078 = vunpack.c.h.b16 %v377
      %v1079 = vunpack.c.l.b16 %v378
      %v1080 = vunpack.c.h.b16 %v378
      %v1081 = vunpack.c.l.b16 %v379
      %v1082 = vunpack.c.h.b16 %v379
      %v1083 = vunpack.c.l.b16 %v380
      %v1084 = vunpack.c.h.b16 %v380
      %v1085 = vunpack.c.l.b16 %v381
      %v1086 = vunpack.c.h.b16 %v381
      %v1087 = vunpack.c.l.b16 %v382
      %v1088 = vunpack.c.h.b16 %v382
      %v1089 = vunpack.c.l.b16 %v383
      %v1090 = vunpack.c.h.b16 %v383
      %v1091 = vunpack.c.l.b16 %v384
      %v1092 = vunpack.c.h.b16 %v384
      %v1093 = vunpack.c.l.b16 %v385
      %v1094 = vunpack.c.h.b16 %v385
      %v1095 = vunpack.c.l.b16 %v386
      %v1096 = vunpack.c.h.b16 %v386
      %v1097 = vunpack.c.l.b16 %v387
      %v1098 = vunpack.c.h.b16 %v387
      %v1099 = vunpack.c.l.b16 %v388
      %v1100 = vunpack.c.h.b16 %v388
      %v1101 = vunpack.c.l.b16 %v389
      %v1102 = vunpack.c.h.b16 %v389
      %v1103 = vunpack.c.l.b16 %v390
      %v1104 = vunpack.c.h.b16 %v390
      %v1105 = vunpack.c.l.b16 %v391
      %v1106 = vunpack.c.h.b16 %v391
      %v1107 = vunpack.c.l.b16 %v392
      %v1108 = vunpack.c.h.b16 %v392
      %v1109 = vunpack.c.l.b16 %v393
      %v1110 = vunpack.c.h.b16 %v393
      %v1111 = vunpack.c.l.b16 %v394
      %v1112 = vunpack.c.h.b16 %v394
      %v1113 = vunpack.c.l.b16 %v395
      %v1114 = vunpack.c.h.b16 %v395
      %v1115 = vunpack.c.l.b16 %v396
      %v1116 = vunpack.c.h.b16 %v396
      %v1117 = vunpack.c.l.b16 %v397
      %v1118 = vunpack.c.h.b16 %v397
      %v1119 = vunpack.c.l.b16 %v398
      %v1120 = vunpack.c.h.b16 %v398
      %v1121 = vunpack.c.l.b16 %v399
      %v1122 = vunpack.c.h.b16 %v399
      %v1123 = vunpack.c.l.b16 %v400
      %v1124 = vunpack.c.h.b16 %v400
      %v1125 = vunpack.c.l.b16 %v401
      %v1126 = vunpack.c.h.b16 %v401
      %v1127 = vunpack.c.l.b16 %v402
      %v1128 = vunpack.c.h.b16 %v402
      %v1129 = vunpack.c.l.b16 %v403
      %v1130 = vunpack.c.h.b16 %v403
      %v1131 = vunpack.c.l.b16 %v404
      %v1132 = vunpack.c.h.b16 %v404
      %v1133 = vunpack.c.l.b16 %v405
      %v1134 = vunpack.c.h.b16 %v405
      %v1135 = vunpack.c.l.b16 %v406
      %v1136 = vunpack.c.h.b16 %v406
      %v1137 = vunpack.c.l.b16 %v407
      %v1138 = vunpack.c.h.b16 %v407
      %v1139 = vunpack.c.l.b16 %v408
      %v1140 = vunpack.c.h.b16 %v408
      %v1141 = vunpack.c.l.b16 %v409
      %v1142 = vunpack.c.h.b16 %v409
      %v1143 = vunpack.c.l.b16 %v410
      %v1144 = vunpack.c.h.b16 %v410
      %v1145 = vunpack.c.l.b16 %v411
      %v1146 = vunpack.c.h.b16 %v411
      %v1147 = vunpack.c.l.b16 %v412
      %v1148 = vunpack.c.h.b16 %v412
      %v1149 = vunpack.c.l.b16 %v413
      %v1150 = vunpack.c.h.b16 %v413
      %v1151 = vunpack.c.l.b16 %v414
      %v1152 = vunpack.c.h.b16 %v414
      %v1153 = vunpack.c.l.b16 %v415
      %v1154 = vunpack.c.h.b16 %v415
      %v1155 = vunpack.c.l.b16 %v416
      %v1156 = vunpack.c.h.b16 %v416
      %v1157 = vunpack.c.l.b16 %v417
      %v1158 = vunpack.c.h.b16 %v417
      %v1159 = vunpack.c.l.b16 %v418
      %v1160 = vunpack.c.h.b16 %v418
      %v1161 = vunpack.c.l.b16 %v419
      %v1162 = vunpack.c.h.b16 %v419
      %v1163 = vunpack.c.l.b16 %v420
      %v1164 = vunpack.c.h.b16 %v420
      %v1165 = vunpack.c.l.b16 %v421
      %v1166 = vunpack.c.h.b16 %v421
      %v1167 = vunpack.c.l.b16 %v422
      %v1168 = vunpack.c.h.b16 %v422
      %v1169 = vunpack.c.l.b16 %v423
      %v1170 = vunpack.c.h.b16 %v423
      %v1171 = vunpack.c.l.b16 %v424
      %v1172 = vunpack.c.h.b16 %v424
      %v1173 = vunpack.c.l.b16 %v425
      %v1174 = vunpack.c.h.b16 %v425
      %v1175 = vunpack.c.l.b16 %v426
      %v1176 = vunpack.c.h.b16 %v426
      %v1177 = vunpack.c.l.b16 %v427
      %v1178 = vunpack.c.h.b16 %v427
      %v1179 = vunpack.c.l.b16 %v428
      %v1180 = vunpack.c.h.b16 %v428
      %v1181 = vunpack.c.l.b16 %v429
      %v1182 = vunpack.c.h.b16 %v429
      %v1183 = vunpack.c.l.b16 %v430
      %v1184 = vunpack.c.h.b16 %v430
      %v1185 = vunpack.c.l.b16 %v431
      %v1186 = vunpack.c.h.b16 %v431
      %v1187 = vunpack.c.l.b16 %v432
      %v1188 = vunpack.c.h.b16 %v432
      %v1189 = vunpack.c.l.b16 %v433
      %v1190 = vunpack.c.h.b16 %v433
      %v1191 = vunpack.c.l.b16 %v434
      %v1192 = vunpack.c.h.b16 %v434
      %v1193 = vunpack.c.l.b16 %v435
      %v1194 = vunpack.c.h.b16 %v435
      %v1195 = vunpack.c.l.b16 %v436
      %v1196 = vunpack.c.h.b16 %v436
      %v1197 = vunpack.c.l.b16 %v437
      %v1198 = vunpack.c.h.b16 %v437
      %v1199 = vunpack.c.l.b16 %v438
      %v1200 = vunpack.c.h.b16 %v438
      %v1201 = vunpack.c.l.b16 %v439
      %v1202 = vunpack.c.h.b16 %v439
      %v1203 = vunpack.c.l.b16 %v440
      %v1204 = vunpack.c.h.b16 %v440
      %v1205 = vunpack.c.l.b16 %v441
      %v1206 = vunpack.c.h.b16 %v441
      %v1207 = vunpack.c.l.b16 %v442
      %v1208 = vunpack.c.h.b16 %v442
      %v1209 = vunpack.c.l.b16 %v443
      %v1210 = vunpack.c.h.b16 %v443
      %v1211 = vunpack.c.l.b16 %v444
      %v1212 = vunpack.c.h.b16 %v444
      %v1213 = vunpack.c.l.b16 %v445
      %v1214 = vunpack.c.h.b16 %v445
      %v1215 = vunpack.c.l.b16 %v446
      %v1216 = vunpack.c.h.b16 %v446
      %v1217 = vunpack.c.l.b16 %v447
      %v1218 = vunpack.c.h.b16 %v447
      %v1219 = vunpack.c.l.b16 %v448
      %v1220 = vunpack.c.h.b16 %v448
      %v1221 = vunpack.c.l.b16 %v449
      %v1222 = vunpack.c.h.b16 %v449
      %v1223 = vunpack.c.l.b16 %v450
      %v1224 = vunpack.c.h.b16 %v450
      %v1225 = vunpack.c.l.b16 %v451
      %v1226 = vunpack.c.h.b16 %v451
      %v1227 = vunpack.c.l.b16 %v452
      %v1228 = vunpack.c.h.b16 %v452
      %v1229 = vunpack.c.l.b16 %v453
      %v1230 = vunpack.c.h.b16 %v453
      %v1231 = vunpack.c.l.b16 %v454
      %v1232 = vunpack.c.h.b16 %v454
      %v1233 = vunpack.c.l.b16 %v455
      %v1234 = vunpack.c.h.b16 %v455
      %v1235 = vunpack.c.l.b16 %v456
      %v1236 = vunpack.c.h.b16 %v456
      %v1237 = vunpack.c.l.b16 %v457
      %v1238 = vunpack.c.h.b16 %v457
      %v1239 = vunpack.c.l.b16 %v458
      %v1240 = vunpack.c.h.b16 %v458
      %v1241 = vunpack.c.l.b16 %v459
      %v1242 = vunpack.c.h.b16 %v459
      %v1243 = vunpack.c.l.b16 %v460
      %v1244 = vunpack.c.h.b16 %v460
      %v1245 = vunpack.c.l.b16 %v461
      %v1246 = vunpack.c.h.b16 %v461
      %v1247 = vunpack.c.l.b16 %v462
      %v1248 = vunpack.c.h.b16 %v462
      %v1249 = vunpack.c.l.b16 %v463
      %v1250 = vunpack.c.h.b16 %v463
      %v1251 = vunpack.c.l.b16 %v464
      %v1252 = vunpack.c.h.b16 %v464
      %v1253 = vunpack.c.l.b16 %v465
      %v1254 = vunpack.c.h.b16 %v465
      %v1255 = vunpack.c.l.b16 %v466
      %v1256 = vunpack.c.h.b16 %v466
      %v1257 = vunpack.c.l.b16 %v467
      %v1258 = vunpack.c.h.b16 %v467
      %v1259 = vunpack.c.l.b16 %v468
      %v1260 = vunpack.c.h.b16 %v468
      %v1261 = vunpack.c.l.b16 %v469
      %v1262 = vunpack.c.h.b16 %v469
      %v1263 = vunpack.c.l.b16 %v470
      %v1264 = vunpack.c.h.b16 %v470
      %v1265 = vunpack.c.l.b16 %v471
      %v1266 = vunpack.c.h.b16 %v471
      %v1267 = vunpack.c.l.b16 %v472
      %v1268 = vunpack.c.h.b16 %v472
      %v1269 = vunpack.c.l.b16 %v473
      %v1270 = vunpack.c.h.b16 %v473
      %v1271 = vunpack.c.l.b16 %v474
      %v1272 = vunpack.c.h.b16 %v474
      %v1273 = vunpack.c.l.b16 %v475
      %v1274 = vunpack.c.h.b16 %v475
      %v1275 = vunpack.c.l.b16 %v476
      %v1276 = vunpack.c.h.b16 %v476
      %v1277 = vunpack.c.l.b16 %v477
      %v1278 = vunpack.c.h.b16 %v477
      %v1279 = vunpack.c.l.b16 %v478
      %v1280 = vunpack.c.h.b16 %v478
      %v1281 = vunpack.c.l.b16 %v479
      %v1282 = vunpack.c.h.b16 %v479
      %v1283 = vunpack.c.l.b16 %v480
      %v1284 = vunpack.c.h.b16 %v480
      %v1285 = vunpack.c.l.b16 %v481
      %v1286 = vunpack.c.h.b16 %v481
      %v1287 = vunpack.c.l.b16 %v482
      %v1288 = vunpack.c.h.b16 %v482
      %v1289 = vunpack.c.l.b16 %v483
      %v1290 = vunpack.c.h.b16 %v483
      %v1291 = vunpack.c.l.b16 %v484
      %v1292 = vunpack.c.h.b16 %v484
      %v1293 = vunpack.c.l.b16 %v485
      %v1294 = vunpack.c.h.b16 %v485
      %v1295 = vunpack.c.l.b16 %v486
      %v1296 = vunpack.c.h.b16 %v486
      %v1297 = vunpack.c.l.b16 %v487
      %v1298 = vunpack.c.h.b16 %v487
      %v1299 = vunpack.c.l.b16 %v488
      %v1300 = vunpack.c.h.b16 %v488
      %v1301 = vunpack.c.l.b16 %v489
      %v1302 = vunpack.c.h.b16 %v489
      %v1303 = vunpack.c.l.b16 %v490
      %v1304 = vunpack.c.h.b16 %v490
      %v1305 = vunpack.c.l.b16 %v491
      %v1306 = vunpack.c.h.b16 %v491
      %v1307 = vunpack.c.l.b16 %v492
      %v1308 = vunpack.c.h.b16 %v492
      %v1309 = vunpack.c.l.b16 %v493
      %v1310 = vunpack.c.h.b16 %v493
      %v1311 = vunpack.c.l.b16 %v494
      %v1312 = vunpack.c.h.b16 %v494
      %v1313 = vpack.c.b16 %v805, %v801
      %v1314 = vpack.c.b16 %v806, %v802
      %v1315 = vpack.c.b16 %v807, %v803
      %v1316 = vpack.c.b16 %v808, %v804
      %v1317 = vpack.c.b16 %v813, %v809
      %v1318 = vpack.c.b16 %v814, %v810
      %v1319 = vpack.c.b16 %v815, %v811
      %v1320 = vpack.c.b16 %v816, %v812
      %v1321 = vpack.c.b16 %v821, %v817
      %v1322 = vpack.c.b16 %v822, %v818
      %v1323 = vpack.c.b16 %v823, %v819
      %v1324 = vpack.c.b16 %v824, %v820
      %v1325 = vpack.c.b16 %v829, %v825
      %v1326 = vpack.c.b16 %v830, %v826
      %v1327 = vpack.c.b16 %v831, %v827
      %v1328 = vpack.c.b16 %v832, %v828
      %v1329 = vpack.c.b16 %v837, %v833
      %v1330 = vpack.c.b16 %v838, %v834
      %v1331 = vpack.c.b16 %v839, %v835
      %v1332 = vpack.c.b16 %v840, %v836
      %v1333 = vpack.c.b16 %v845, %v841
      %v1334 = vpack.c.b16 %v846, %v842
      %v1335 = vpack.c.b16 %v847, %v843
      %v1336 = vpack.c.b16 %v848, %v844
      %v1337 = vpack.c.b16 %v853, %v849
      %v1338 = vpack.c.b16 %v854, %v850
      %v1339 = vpack.c.b16 %v855, %v851
      %v1340 = vpack.c.b16 %v856, %v852
      %v1341 = vpack.c.b16 %v861, %v857
      %v1342 = vpack.c.b16 %v862, %v858
      %v1343 = vpack.c.b16 %v863, %v859
      %v1344 = vpack.c.b16 %v864, %v860
      %v1345 = vpack.c.b16 %v869, %v865
      %v1346 = vpack.c.b16 %v870, %v866
      %v1347 = vpack.c.b16 %v871, %v867
      %v1348 = vpack.c.b16 %v872, %v868
      %v1349 = vpack.c.b16 %v877, %v873
      %v1350 = vpack.c.b16 %v878, %v874
      %v1351 = vpack.c.b16 %v879, %v875
      %v1352 = vpack.c.b16 %v880, %v876
      %v1353 = vpack.c.b16 %v885, %v881
      %v1354 = vpack.c.b16 %v886, %v882
      %v1355 = vpack.c.b16 %v887, %v883
      %v1356 = vpack.c.b16 %v888, %v884
      %v1357 = vpack.c.b16 %v893, %v889
      %v1358 = vpack.c.b16 %v894, %v890
      %v1359 = vpack.c.b16 %v895, %v891
      %v1360 = vpack.c.b16 %v896, %v892
      %v1361 = vpack.c.b16 %v901, %v897
      %v1362 = vpack.c.b16 %v902, %v898
      %v1363 = vpack.c.b16 %v903, %v899
      %v1364 = vpack.c.b16 %v904, %v900
      %v1365 = vpack.c.b16 %v909, %v905
      %v1366 = vpack.c.b16 %v910, %v906
      %v1367 = vpack.c.b16 %v911, %v907
      %v1368 = vpack.c.b16 %v912, %v908
      %v1369 = vpack.c.b16 %v917, %v913
      %v1370 = vpack.c.b16 %v918, %v914
      %v1371 = vpack.c.b16 %v919, %v915
      %v1372 = vpack.c.b16 %v920, %v916
      %v1373 = vpack.c.b16 %v925, %v921
      %v1374 = vpack.c.b16 %v926, %v922
      %v1375 = vpack.c.b16 %v927, %v923
      %v1376 = vpack.c.b16 %v928, %v924
      %v1377 = vpack.c.b16 %v933, %v929
      %v1378 = vpack.c.b16 %v934, %v930
      %v1379 = vpack.c.b16 %v935, %v931
      %v1380 = vpack.c.b16 %v936, %v932
      %v1381 = vpack.c.b16 %v941, %v937
      %v1382 = vpack.c.b16 %v942, %v938
      %v1383 = vpack.c.b16 %v943, %v939
      %v1384 = vpack.c.b16 %v944, %v940
      %v1385 = vpack.c.b16 %v949, %v945
      %v1386 = vpack.c.b16 %v950, %v946
      %v1387 = vpack.c.b16 %v951, %v947
      %v1388 = vpack.c.b16 %v952, %v948
      %v1389 = vpack.c.b16 %v957, %v953
      %v1390 = vpack.c.b16 %v958, %v954
      %v1391 = vpack.c.b16 %v959, %v955
      %v1392 = vpack.c.b16 %v960, %v956
      %v1393 = vpack.c.b16 %v965, %v961
      %v1394 = vpack.c.b16 %v966, %v962
      %v1395 = vpack.c.b16 %v967, %v963
      %v1396 = vpack.c.b16 %v968, %v964
      %v1397 = vpack.c.b16 %v973, %v969
      %v1398 = vpack.c.b16 %v974, %v970
      %v1399 = vpack.c.b16 %v975, %v971
      %v1400 = vpack.c.b16 %v976, %v972
      %v1401 = vpack.c.b16 %v981, %v977
      %v1402 = vpack.c.b16 %v982, %v978
      %v1403 = vpack.c.b16 %v983, %v979
      %v1404 = vpack.c.b16 %v984, %v980
      %v1405 = vpack.c.b16 %v989, %v985
      %v1406 = vpack.c.b16 %v990, %v986
      %v1407 = vpack.c.b16 %v991, %v987
      %v1408 = vpack.c.b16 %v992, %v988
      %v1409 = vpack.c.b16 %v997, %v993
      %v1410 = vpack.c.b16 %v998, %v994
      %v1411 = vpack.c.b16 %v999, %v995
      %v1412 = vpack.c.b16 %v1000, %v996
      %v1413 = vpack.c.b16 %v1005, %v1001
      %v1414 = vpack.c.b16 %v1006, %v1002
      %v1415 = vpack.c.b16 %v1007, %v1003
      %v1416 = vpack.c.b16 %v1008, %v1004
      %v1417 = vpack.c.b16 %v1013, %v1009
      %v1418 = vpack.c.b16 %v1014, %v1010
      %v1419 = vpack.c.b16 %v1015, %v1011
      %v1420 = vpack.c.b16 %v1016, %v1012
      %v1421 = vpack.c.b16 %v1021, %v1017
      %v1422 = vpack.c.b16 %v1022, %v1018
      %v1423 = vpack.c.b16 %v1023, %v1019
      %v1424 = vpack.c.b16 %v1024, %v1020
      %v1425 = vpack.c.b16 %v1029, %v1025
      %v1426 = vpack.c.b16 %v1030, %v1026
      %v1427 = vpack.c.b16 %v1031, %v1027
      %v1428 = vpack.c.b16 %v1032, %v1028
      %v1429 = vpack.c.b16 %v1037, %v1033
      %v1430 = vpack.c.b16 %v1038, %v1034
      %v1431 = vpack.c.b16 %v1039, %v1035
      %v1432 = vpack.c.b16 %v1040, %v1036
      %v1433 = vpack.c.b16 %v1045, %v1041
      %v1434 = vpack.c.b16 %v1046, %v1042
      %v1435 = vpack.c.b16 %v1047, %v1043
      %v1436 = vpack.c.b16 %v1048, %v1044
      %v1437 = vpack.c.b16 %v1053, %v1049
      %v1438 = vpack.c.b16 %v1054, %v1050
      %v1439 = vpack.c.b16 %v1055, %v1051
      %v1440 = vpack.c.b16 %v1056, %v1052
      %v1441 = vpack.c.b16 %v1061, %v1057
      %v1442 = vpack.c.b16 %v1062, %v1058
      %v1443 = vpack.c.b16 %v1063, %v1059
      %v1444 = vpack.c.b16 %v1064, %v1060
      %v1445 = vpack.c.b16 %v1069, %v1065
      %v1446 = vpack.c.b16 %v1070, %v1066
      %v1447 = vpack.c.b16 %v1071, %v1067
      %v1448 = vpack.c.b16 %v1072, %v1068
      %v1449 = vpack.c.b16 %v1077, %v1073
      %v1450 = vpack.c.b16 %v1078, %v1074
      %v1451 = vpack.c.b16 %v1079, %v1075
      %v1452 = vpack.c.b16 %v1080, %v1076
      %v1453 = vpack.c.b16 %v1085, %v1081
      %v1454 = vpack.c.b16 %v1086, %v1082
      %v1455 = vpack.c.b16 %v1087, %v1083
      %v1456 = vpack.c.b16 %v1088, %v1084
      %v1457 = vpack.c.b16 %v1093, %v1089
      %v1458 = vpack.c.b16 %v1094, %v1090
      %v1459 = vpack.c.b16 %v1095, %v1091
      %v1460 = vpack.c.b16 %v1096, %v1092
      %v1461 = vpack.c.b16 %v1101, %v1097
      %v1462 = vpack.c.b16 %v1102, %v1098
      %v1463 = vpack.c.b16 %v1103, %v1099
      %v1464 = vpack.c.b16 %v1104, %v1100
      %v1465 = vpack.c.b16 %v1109, %v1105
      %v1466 = vpack.c.b16 %v1110, %v1106
      %v1467 = vpack.c.b16 %v1111, %v1107
      %v1468 = vpack.c.b16 %v1112, %v1108
      %v1469 = vpack.c.b16 %v1117, %v1113
      %v1470 = vpack.c.b16 %v1118, %v1114
      %v1471 = vpack.c.b16 %v1119, %v1115
      %v1472 = vpack.c.b16 %v1120, %v1116
      %v1473 = vpack.c.b16 %v1125, %v1121
      %v1474 = vpack.c.b16 %v1126, %v1122
      %v1475 = vpack.c.b16 %v1127, %v1123
      %v1476 = vpack.c.b16 %v1128, %v1124
      %v1477 = vpack.c.b16 %v1133, %v1129
      %v1478 = vpack.c.b16 %v1134, %v1130
      %v1479 = vpack.c.b16 %v1135, %v1131
      %v1480 = vpack.c.b16 %v1136, %v1132
      %v1481 = vpack.c.b16 %v1141, %v1137
      %v1482 = vpack.c.b16 %v1142, %v1138
      %v1483 = vpack.c.b16 %v1143, %v1139
      %v1484 = vpack.c.b16 %v1144, %v1140
      %v1485 = vpack.c.b16 %v1149, %v1145
      %v1486 = vpack.c.b16 %v1150, %v1146
      %v1487 = vpack.c.b16 %v1151, %v1147
      %v1488 = vpack.c.b16 %v1152, %v1148
      %v1489 = vpack.c.b16 %v1157, %v1153
      %v1490 = vpack.c.b16 %v1158, %v1154
      %v1491 = vpack.c.b16 %v1159, %v1155
      %v1492 = vpack.c.b16 %v1160, %v1156
      %v1493 = vpack.c.b16 %v1165, %v1161
      %v1494 = vpack.c.b16 %v1166, %v1162
      %v1495 = vpack.c.b16 %v1167, %v1163
      %v1496 = vpack.c.b16 %v1168, %v1164
      %v1497 = vpack.c.b16 %v1173, %v1169
      %v1498 = vpack.c.b16 %v1174, %v1170
      %v1499 = vpack.c.b16 %v1175, %v1171
      %v1500 = vpack.c.b16 %v1176, %v1172
      %v1501 = vpack.c.b16 %v1181, %v1177
      %v1502 = vpack.c.b16 %v1182, %v1178
      %v1503 = vpack.c.b16 %v1183, %v1179
      %v1504 = vpack.c.b16 %v1184, %v1180
      %v1505 = vpack.c.b16 %v1189, %v1185
      %v1506 = vpack.c.b16 %v1190, %v1186
      %v1507 = vpack.c.b16 %v1191, %v1187
      %v1508 = vpack.c.b16 %v1192, %v1188
      %v1509 = vpack.c.b16 %v1197, %v1193
      %v1510 = vpack.c.b16 %v1198, %v1194
      %v1511 = vpack.c.b16 %v1199, %v1195
      %v1512 = vpack.c.b16 %v1200, %v1196
      %v1513 = vpack.c.b16 %v1205, %v1201
      %v1514 = vpack.c.b16 %v1206, %v1202
      %v1515 = vpack.c.b16 %v1207, %v1203
      %v1516 = vpack.c.b16 %v1208, %v1204
      %v1517 = vpack.c.b16 %v1213, %v1209
      %v1518 = vpack.c.b16 %v1214, %v1210
      %v1519 = vpack.c.b16 %v1215, %v1211
      %v1520 = vpack.c.b16 %v1216, %v1212
      %v1521 = vpack.c.b16 %v1221, %v1217
      %v1522 = vpack.c.b16 %v1222, %v1218
      %v1523 = vpack.c.b16 %v1223, %v1219
      %v1524 = vpack.c.b16 %v1224, %v1220
      %v1525 = vpack.c.b16 %v1229, %v1225
      %v1526 = vpack.c.b16 %v1230, %v1226
      %v1527 = vpack.c.b16 %v1231, %v1227
      %v1528 = vpack.c.b16 %v1232, %v1228
      %v1529 = vpack.c.b16 %v1237, %v1233
      %v1530 = vpack.c.b16 %v1238, %v1234
      %v1531 = vpack.c.b16 %v1239, %v1235
      %v1532 = vpack.c.b16 %v1240, %v1236
      %v1533 = vpack.c.b16 %v1245, %v1241
      %v1534 = vpack.c.b16 %v1246, %v1242
      %v1535 = vpack.c.b16 %v1247, %v1243
      %v1536 = vpack.c.b16 %v1248, %v1244
      %v1537 = vpack.c.b16 %v1253, %v1249
      %v1538 = vpack.c.b16 %v1254, %v1250
      %v1539 = vpack.c.b16 %v1255, %v1251
      %v1540 = vpack.c.b16 %v1256, %v1252
      %v1541 = vpack.c.b16 %v1261, %v1257
      %v1542 = vpack.c.b16 %v1262, %v1258
      %v1543 = vpack.c.b16 %v1263, %v1259
      %v1544 = vpack.c.b16 %v1264, %v1260
      %v1545 = vpack.c.b16 %v1269, %v1265
      %v1546 = vpack.c.b16 %v1270, %v1266
      %v1547 = vpack.c.b16 %v1271, %v1267
      %v1548 = vpack.c.b16 %v1272, %v1268
      %v1549 = vpack.c.b16 %v1277, %v1273
      %v1550 = vpack.c.b16 %v1278, %v1274
      %v1551 = vpack.c.b16 %v1279, %v1275
      %v1552 = vpack.c.b16 %v1280, %v1276
      %v1553 = vpack.c.b16 %v1285, %v1281
      %v1554 = vpack.c.b16 %v1286, %v1282
      %v1555 = vpack.c.b16 %v1287, %v1283
      %v1556 = vpack.c.b16 %v1288, %v1284
      %v1557 = vpack.c.b16 %v1293, %v1289
      %v1558 = vpack.c.b16 %v1294, %v1290
      %v1559 = vpack.c.b16 %v1295, %v1291
      %v1560 = vpack.c.b16 %v1296, %v1292
      %v1561 = vpack.c.b16 %v1301, %v1297
      %v1562 = vpack.c.b16 %v1302, %v1298
      %v1563 = vpack.c.b16 %v1303, %v1299
      %v1564 = vpack.c.b16 %v1304, %v1300
      %v1565 = vpack.c.b16 %v1309, %v1305
      %v1566 = vpack.c.b16 %v1310, %v1306
      %v1567 = vpack.c.b16 %v1311, %v1307
      %v1568 = vpack.c.b16 %v1312, %v1308
      %1825 = vmatpush.bf16.msra.mxu0 %v1341
      %1826 = vmatpush.bf16.msra.mxu0 %v1337
      %1827 = vmatpush.bf16.msra.mxu0 %v1333
      %1828 = vmatpush.bf16.msra.mxu0 %v1329
      %1829 = vmatpush.bf16.msra.mxu0 %v1325
      %1830 = vmatpush.bf16.msra.mxu0 %v1321
      %1831 = vmatpush.bf16.msra.mxu0 %v1317
      %1832 = vmatpush.bf16.msra.mxu0 %v1313
      %1833 = vmatmul.bf16.gmra.mxu0 %v529
      %v1834 = vpop.f32.mrf.mxu0
      %v1835 = vadd.f32 %v497, %v1834
      %v1836 = vpop.f32.mrf.mxu0
      %v1837 = vadd.f32 %v497, %v1836
      %1838 = vdwg.mxu0
      %1839 = vmatpush.bf16.msra.mxu0 %v1373
      %1840 = vmatpush.bf16.msra.mxu0 %v1369
      %1841 = vmatpush.bf16.msra.mxu0 %v1365
      %1842 = vmatpush.bf16.msra.mxu0 %v1361
      %1843 = vmatpush.bf16.msra.mxu0 %v1357
      %1844 = vmatpush.bf16.msra.mxu0 %v1353
      %1845 = vmatpush.bf16.msra.mxu0 %v1349
      %1846 = vmatpush.bf16.msra.mxu0 %v1345
      %1847 = vmatmul.bf16.gmra.mxu0 %v530
      %v1848 = vpop.f32.mrf.mxu0
      %v1849 = vadd.f32 %v1835, %v1848
      %v1850 = vpop.f32.mrf.mxu0
      %v1851 = vadd.f32 %v1837, %v1850
      %1852 = vdwg.mxu0
      %1853 = vmatpush.bf16.msra.mxu0 %v1405
      %1854 = vmatpush.bf16.msra.mxu0 %v1401
      %1855 = vmatpush.bf16.msra.mxu0 %v1397
      %1856 = vmatpush.bf16.msra.mxu0 %v1393
      %1857 = vmatpush.bf16.msra.mxu0 %v1389
      %1858 = vmatpush.bf16.msra.mxu0 %v1385
      %1859 = vmatpush.bf16.msra.mxu0 %v1381
      %1860 = vmatpush.bf16.msra.mxu0 %v1377
      %1861 = vmatmul.bf16.gmra.mxu0 %v531
      %v1862 = vpop.f32.mrf.mxu0
      %v1863 = vadd.f32 %v1849, %v1862
      %v1864 = vpop.f32.mrf.mxu0
      %v1865 = vadd.f32 %v1851, %v1864
      %1866 = vdwg.mxu0
      %1867 = vmatpush.bf16.msra.mxu0 %v1437
      %1868 = vmatpush.bf16.msra.mxu0 %v1433
      %1869 = vmatpush.bf16.msra.mxu0 %v1429
      %1870 = vmatpush.bf16.msra.mxu0 %v1425
      %1871 = vmatpush.bf16.msra.mxu0 %v1421
      %1872 = vmatpush.bf16.msra.mxu0 %v1417
      %1873 = vmatpush.bf16.msra.mxu0 %v1413
      %1874 = vmatpush.bf16.msra.mxu0 %v1409
      %1875 = vmatmul.bf16.gmra.mxu0 %v532
      %v1876 = vpop.f32.mrf.mxu0
      %v1877 = vadd.f32 %v1863, %v1876
      %v1878 = vpop.f32.mrf.mxu0
      %v1879 = vadd.f32 %v1865, %v1878
      %1880 = vdwg.mxu0
      %1881 = vmatpush.bf16.msra.mxu0 %v1469
      %1882 = vmatpush.bf16.msra.mxu0 %v1465
      %1883 = vmatpush.bf16.msra.mxu0 %v1461
      %1884 = vmatpush.bf16.msra.mxu0 %v1457
      %1885 = vmatpush.bf16.msra.mxu0 %v1453
      %1886 = vmatpush.bf16.msra.mxu0 %v1449
      %1887 = vmatpush.bf16.msra.mxu0 %v1445
      %1888 = vmatpush.bf16.msra.mxu0 %v1441
      %1889 = vmatmul.bf16.gmra.mxu0 %v533
      %v1890 = vpop.f32.mrf.mxu0
      %v1891 = vadd.f32 %v1877, %v1890
      %v1892 = vpop.f32.mrf.mxu0
      %v1893 = vadd.f32 %v1879, %v1892
      %1894 = vdwg.mxu0
      %1895 = vmatpush.bf16.msra.mxu0 %v1501
      %1896 = vmatpush.bf16.msra.mxu0 %v1497
      %1897 = vmatpush.bf16.msra.mxu0 %v1493
      %1898 = vmatpush.bf16.msra.mxu0 %v1489
      %1899 = vmatpush.bf16.msra.mxu0 %v1485
      %1900 = vmatpush.bf16.msra.mxu0 %v1481
      %1901 = vmatpush.bf16.msra.mxu0 %v1477
      %1902 = vmatpush.bf16.msra.mxu0 %v1473
      %1903 = vmatmul.bf16.gmra.mxu0 %v534
      %v1904 = vpop.f32.mrf.mxu0
      %v1905 = vadd.f32 %v1891, %v1904
      %v1906 = vpop.f32.mrf.mxu0
      %v1907 = vadd.f32 %v1893, %v1906
      %1908 = vdwg.mxu0
      %1909 = vmatpush.bf16.msra.mxu0 %v1533
      %1910 = vmatpush.bf16.msra.mxu0 %v1529
      %1911 = vmatpush.bf16.msra.mxu0 %v1525
      %1912 = vmatpush.bf16.msra.mxu0 %v1521
      %1913 = vmatpush.bf16.msra.mxu0 %v1517
      %1914 = vmatpush.bf16.msra.mxu0 %v1513
      %1915 = vmatpush.bf16.msra.mxu0 %v1509
      %1916 = vmatpush.bf16.msra.mxu0 %v1505
      %1917 = vmatmul.bf16.gmra.mxu0 %v535
      %v1918 = vpop.f32.mrf.mxu0
      %v1919 = vadd.f32 %v1905, %v1918
      %v1920 = vpop.f32.mrf.mxu0
      %v1921 = vadd.f32 %v1907, %v1920
      %1922 = vdwg.mxu0
      %1923 = vmatpush.bf16.msra.mxu0 %v1565
      %1924 = vmatpush.bf16.msra.mxu0 %v1561
      %1925 = vmatpush.bf16.msra.mxu0 %v1557
      %1926 = vmatpush.bf16.msra.mxu0 %v1553
      %1927 = vmatpush.bf16.msra.mxu0 %v1549
      %1928 = vmatpush.bf16.msra.mxu0 %v1545
      %1929 = vmatpush.bf16.msra.mxu0 %v1541
      %1930 = vmatpush.bf16.msra.mxu0 %v1537
      %1931 = vmatmul.bf16.gmra.mxu0 %v536
      %v1932 = vpop.f32.mrf.mxu0
      %v1933 = vadd.f32 %v1919, %v1932
      %v1934 = vpop.f32.mrf.mxu0
      %v1935 = vadd.f32 %v1921, %v1934
      %1936 = vdwg.mxu0
      %1937 = vmatpush.bf16.msra.mxu0 %v1342
      %1938 = vmatpush.bf16.msra.mxu0 %v1338
      %1939 = vmatpush.bf16.msra.mxu0 %v1334
      %1940 = vmatpush.bf16.msra.mxu0 %v1330
      %1941 = vmatpush.bf16.msra.mxu0 %v1326
      %1942 = vmatpush.bf16.msra.mxu0 %v1322
      %1943 = vmatpush.bf16.msra.mxu0 %v1318
      %1944 = vmatpush.bf16.msra.mxu0 %v1314
      %1945 = vmatmul.bf16.gmra.mxu0 %v529
      %v1946 = vpop.f32.mrf.mxu0
      %v1947 = vadd.f32 %v498, %v1946
      %v1948 = vpop.f32.mrf.mxu0
      %v1949 = vadd.f32 %v498, %v1948
      %1950 = vdwg.mxu0
      %1951 = vmatpush.bf16.msra.mxu0 %v1374
      %1952 = vmatpush.bf16.msra.mxu0 %v1370
      %1953 = vmatpush.bf16.msra.mxu0 %v1366
      %1954 = vmatpush.bf16.msra.mxu0 %v1362
      %1955 = vmatpush.bf16.msra.mxu0 %v1358
      %1956 = vmatpush.bf16.msra.mxu0 %v1354
      %1957 = vmatpush.bf16.msra.mxu0 %v1350
      %1958 = vmatpush.bf16.msra.mxu0 %v1346
      %1959 = vmatmul.bf16.gmra.mxu0 %v530
      %v1960 = vpop.f32.mrf.mxu0
      %v1961 = vadd.f32 %v1947, %v1960
      %v1962 = vpop.f32.mrf.mxu0
      %v1963 = vadd.f32 %v1949, %v1962
      %1964 = vdwg.mxu0
      %1965 = vmatpush.bf16.msra.mxu0 %v1406
      %1966 = vmatpush.bf16.msra.mxu0 %v1402
      %1967 = vmatpush.bf16.msra.mxu0 %v1398
      %1968 = vmatpush.bf16.msra.mxu0 %v1394
      %1969 = vmatpush.bf16.msra.mxu0 %v1390
      %1970 = vmatpush.bf16.msra.mxu0 %v1386
      %1971 = vmatpush.bf16.msra.mxu0 %v1382
      %1972 = vmatpush.bf16.msra.mxu0 %v1378
      %1973 = vmatmul.bf16.gmra.mxu0 %v531
      %v1974 = vpop.f32.mrf.mxu0
      %v1975 = vadd.f32 %v1961, %v1974
      %v1976 = vpop.f32.mrf.mxu0
      %v1977 = vadd.f32 %v1963, %v1976
      %1978 = vdwg.mxu0
      %1979 = vmatpush.bf16.msra.mxu0 %v1438
      %1980 = vmatpush.bf16.msra.mxu0 %v1434
      %1981 = vmatpush.bf16.msra.mxu0 %v1430
      %1982 = vmatpush.bf16.msra.mxu0 %v1426
      %1983 = vmatpush.bf16.msra.mxu0 %v1422
      %1984 = vmatpush.bf16.msra.mxu0 %v1418
      %1985 = vmatpush.bf16.msra.mxu0 %v1414
      %1986 = vmatpush.bf16.msra.mxu0 %v1410
      %1987 = vmatmul.bf16.gmra.mxu0 %v532
      %v1988 = vpop.f32.mrf.mxu0
      %v1989 = vadd.f32 %v1975, %v1988
      %v1990 = vpop.f32.mrf.mxu0
      %v1991 = vadd.f32 %v1977, %v1990
      %1992 = vdwg.mxu0
      %1993 = vmatpush.bf16.msra.mxu0 %v1470
      %1994 = vmatpush.bf16.msra.mxu0 %v1466
      %1995 = vmatpush.bf16.msra.mxu0 %v1462
      %1996 = vmatpush.bf16.msra.mxu0 %v1458
      %1997 = vmatpush.bf16.msra.mxu0 %v1454
      %1998 = vmatpush.bf16.msra.mxu0 %v1450
      %1999 = vmatpush.bf16.msra.mxu0 %v1446
      %2000 = vmatpush.bf16.msra.mxu0 %v1442
      %2001 = vmatmul.bf16.gmra.mxu0 %v533
      %v2002 = vpop.f32.mrf.mxu0
      %v2003 = vadd.f32 %v1989, %v2002
      %v2004 = vpop.f32.mrf.mxu0
      %v2005 = vadd.f32 %v1991, %v2004
      %2006 = vdwg.mxu0
      %2007 = vmatpush.bf16.msra.mxu0 %v1502
      %2008 = vmatpush.bf16.msra.mxu0 %v1498
      %2009 = vmatpush.bf16.msra.mxu0 %v1494
      %2010 = vmatpush.bf16.msra.mxu0 %v1490
      %2011 = vmatpush.bf16.msra.mxu0 %v1486
      %2012 = vmatpush.bf16.msra.mxu0 %v1482
      %2013 = vmatpush.bf16.msra.mxu0 %v1478
      %2014 = vmatpush.bf16.msra.mxu0 %v1474
      %2015 = vmatmul.bf16.gmra.mxu0 %v534
      %v2016 = vpop.f32.mrf.mxu0
      %v2017 = vadd.f32 %v2003, %v2016
      %v2018 = vpop.f32.mrf.mxu0
      %v2019 = vadd.f32 %v2005, %v2018
      %2020 = vdwg.mxu0
      %2021 = vmatpush.bf16.msra.mxu0 %v1534
      %2022 = vmatpush.bf16.msra.mxu0 %v1530
      %2023 = vmatpush.bf16.msra.mxu0 %v1526
      %2024 = vmatpush.bf16.msra.mxu0 %v1522
      %2025 = vmatpush.bf16.msra.mxu0 %v1518
      %2026 = vmatpush.bf16.msra.mxu0 %v1514
      %2027 = vmatpush.bf16.msra.mxu0 %v1510
      %2028 = vmatpush.bf16.msra.mxu0 %v1506
      %2029 = vmatmul.bf16.gmra.mxu0 %v535
      %v2030 = vpop.f32.mrf.mxu0
      %v2031 = vadd.f32 %v2017, %v2030
      %v2032 = vpop.f32.mrf.mxu0
      %v2033 = vadd.f32 %v2019, %v2032
      %2034 = vdwg.mxu0
      %2035 = vmatpush.bf16.msra.mxu0 %v1566
      %2036 = vmatpush.bf16.msra.mxu0 %v1562
      %2037 = vmatpush.bf16.msra.mxu0 %v1558
      %2038 = vmatpush.bf16.msra.mxu0 %v1554
      %2039 = vmatpush.bf16.msra.mxu0 %v1550
      %2040 = vmatpush.bf16.msra.mxu0 %v1546
      %2041 = vmatpush.bf16.msra.mxu0 %v1542
      %2042 = vmatpush.bf16.msra.mxu0 %v1538
      %2043 = vmatmul.bf16.gmra.mxu0 %v536
      %v2044 = vpop.f32.mrf.mxu0
      %v2045 = vadd.f32 %v2031, %v2044
      %v2046 = vpop.f32.mrf.mxu0
      %v2047 = vadd.f32 %v2033, %v2046
      %2048 = vdwg.mxu0
      %2049 = vmatpush.bf16.msra.mxu0 %v1343
      %2050 = vmatpush.bf16.msra.mxu0 %v1339
      %2051 = vmatpush.bf16.msra.mxu0 %v1335
      %2052 = vmatpush.bf16.msra.mxu0 %v1331
      %2053 = vmatpush.bf16.msra.mxu0 %v1327
      %2054 = vmatpush.bf16.msra.mxu0 %v1323
      %2055 = vmatpush.bf16.msra.mxu0 %v1319
      %2056 = vmatpush.bf16.msra.mxu0 %v1315
      %2057 = vmatmul.bf16.gmra.mxu0 %v529
      %v2058 = vpop.f32.mrf.mxu0
      %v2059 = vadd.f32 %v499, %v2058
      %v2060 = vpop.f32.mrf.mxu0
      %v2061 = vadd.f32 %v499, %v2060
      %2062 = vdwg.mxu0
      %2063 = vmatpush.bf16.msra.mxu0 %v1375
      %2064 = vmatpush.bf16.msra.mxu0 %v1371
      %2065 = vmatpush.bf16.msra.mxu0 %v1367
      %2066 = vmatpush.bf16.msra.mxu0 %v1363
      %2067 = vmatpush.bf16.msra.mxu0 %v1359
      %2068 = vmatpush.bf16.msra.mxu0 %v1355
      %2069 = vmatpush.bf16.msra.mxu0 %v1351
      %2070 = vmatpush.bf16.msra.mxu0 %v1347
      %2071 = vmatmul.bf16.gmra.mxu0 %v530
      %v2072 = vpop.f32.mrf.mxu0
      %v2073 = vadd.f32 %v2059, %v2072
      %v2074 = vpop.f32.mrf.mxu0
      %v2075 = vadd.f32 %v2061, %v2074
      %2076 = vdwg.mxu0
      %2077 = vmatpush.bf16.msra.mxu0 %v1407
      %2078 = vmatpush.bf16.msra.mxu0 %v1403
      %2079 = vmatpush.bf16.msra.mxu0 %v1399
      %2080 = vmatpush.bf16.msra.mxu0 %v1395
      %2081 = vmatpush.bf16.msra.mxu0 %v1391
      %2082 = vmatpush.bf16.msra.mxu0 %v1387
      %2083 = vmatpush.bf16.msra.mxu0 %v1383
      %2084 = vmatpush.bf16.msra.mxu0 %v1379
      %2085 = vmatmul.bf16.gmra.mxu0 %v531
      %v2086 = vpop.f32.mrf.mxu0
      %v2087 = vadd.f32 %v2073, %v2086
      %v2088 = vpop.f32.mrf.mxu0
      %v2089 = vadd.f32 %v2075, %v2088
      %2090 = vdwg.mxu0
      %2091 = vmatpush.bf16.msra.mxu0 %v1439
      %2092 = vmatpush.bf16.msra.mxu0 %v1435
      %2093 = vmatpush.bf16.msra.mxu0 %v1431
      %2094 = vmatpush.bf16.msra.mxu0 %v1427
      %2095 = vmatpush.bf16.msra.mxu0 %v1423
      %2096 = vmatpush.bf16.msra.mxu0 %v1419
      %2097 = vmatpush.bf16.msra.mxu0 %v1415
      %2098 = vmatpush.bf16.msra.mxu0 %v1411
      %2099 = vmatmul.bf16.gmra.mxu0 %v532
      %v2100 = vpop.f32.mrf.mxu0
      %v2101 = vadd.f32 %v2087, %v2100
      %v2102 = vpop.f32.mrf.mxu0
      %v2103 = vadd.f32 %v2089, %v2102
      %2104 = vdwg.mxu0
      %2105 = vmatpush.bf16.msra.mxu0 %v1471
      %2106 = vmatpush.bf16.msra.mxu0 %v1467
      %2107 = vmatpush.bf16.msra.mxu0 %v1463
      %2108 = vmatpush.bf16.msra.mxu0 %v1459
      %2109 = vmatpush.bf16.msra.mxu0 %v1455
      %2110 = vmatpush.bf16.msra.mxu0 %v1451
      %2111 = vmatpush.bf16.msra.mxu0 %v1447
      %2112 = vmatpush.bf16.msra.mxu0 %v1443
      %2113 = vmatmul.bf16.gmra.mxu0 %v533
      %v2114 = vpop.f32.mrf.mxu0
      %v2115 = vadd.f32 %v2101, %v2114
      %v2116 = vpop.f32.mrf.mxu0
      %v2117 = vadd.f32 %v2103, %v2116
      %2118 = vdwg.mxu0
      %2119 = vmatpush.bf16.msra.mxu0 %v1503
      %2120 = vmatpush.bf16.msra.mxu0 %v1499
      %2121 = vmatpush.bf16.msra.mxu0 %v1495
      %2122 = vmatpush.bf16.msra.mxu0 %v1491
      %2123 = vmatpush.bf16.msra.mxu0 %v1487
      %2124 = vmatpush.bf16.msra.mxu0 %v1483
      %2125 = vmatpush.bf16.msra.mxu0 %v1479
      %2126 = vmatpush.bf16.msra.mxu0 %v1475
      %2127 = vmatmul.bf16.gmra.mxu0 %v534
      %v2128 = vpop.f32.mrf.mxu0
      %v2129 = vadd.f32 %v2115, %v2128
      %v2130 = vpop.f32.mrf.mxu0
      %v2131 = vadd.f32 %v2117, %v2130
      %2132 = vdwg.mxu0
      %2133 = vmatpush.bf16.msra.mxu0 %v1535
      %2134 = vmatpush.bf16.msra.mxu0 %v1531
      %2135 = vmatpush.bf16.msra.mxu0 %v1527
      %2136 = vmatpush.bf16.msra.mxu0 %v1523
      %2137 = vmatpush.bf16.msra.mxu0 %v1519
      %2138 = vmatpush.bf16.msra.mxu0 %v1515
      %2139 = vmatpush.bf16.msra.mxu0 %v1511
      %2140 = vmatpush.bf16.msra.mxu0 %v1507
      %2141 = vmatmul.bf16.gmra.mxu0 %v535
      %v2142 = vpop.f32.mrf.mxu0
      %v2143 = vadd.f32 %v2129, %v2142
      %v2144 = vpop.f32.mrf.mxu0
      %v2145 = vadd.f32 %v2131, %v2144
      %2146 = vdwg.mxu0
      %2147 = vmatpush.bf16.msra.mxu0 %v1567
      %2148 = vmatpush.bf16.msra.mxu0 %v1563
      %2149 = vmatpush.bf16.msra.mxu0 %v1559
      %2150 = vmatpush.bf16.msra.mxu0 %v1555
      %2151 = vmatpush.bf16.msra.mxu0 %v1551
      %2152 = vmatpush.bf16.msra.mxu0 %v1547
      %2153 = vmatpush.bf16.msra.mxu0 %v1543
      %2154 = vmatpush.bf16.msra.mxu0 %v1539
      %2155 = vmatmul.bf16.gmra.mxu0 %v536
      %v2156 = vpop.f32.mrf.mxu0
      %v2157 = vadd.f32 %v2143, %v2156
      %v2158 = vpop.f32.mrf.mxu0
      %v2159 = vadd.f32 %v2145, %v2158
      %2160 = vdwg.mxu0
      %2161 = vmatpush.bf16.msra.mxu0 %v1344
      %2162 = vmatpush.bf16.msra.mxu0 %v1340
      %2163 = vmatpush.bf16.msra.mxu0 %v1336
      %2164 = vmatpush.bf16.msra.mxu0 %v1332
      %2165 = vmatpush.bf16.msra.mxu0 %v1328
      %2166 = vmatpush.bf16.msra.mxu0 %v1324
      %2167 = vmatpush.bf16.msra.mxu0 %v1320
      %2168 = vmatpush.bf16.msra.mxu0 %v1316
      %2169 = vmatmul.bf16.gmra.mxu0 %v529
      %v2170 = vpop.f32.mrf.mxu0
      %v2171 = vadd.f32 %v500, %v2170
      %v2172 = vpop.f32.mrf.mxu0
      %v2173 = vadd.f32 %v500, %v2172
      %2174 = vdwg.mxu0
      %2175 = vmatpush.bf16.msra.mxu0 %v1376
      %2176 = vmatpush.bf16.msra.mxu0 %v1372
      %2177 = vmatpush.bf16.msra.mxu0 %v1368
      %2178 = vmatpush.bf16.msra.mxu0 %v1364
      %2179 = vmatpush.bf16.msra.mxu0 %v1360
      %2180 = vmatpush.bf16.msra.mxu0 %v1356
      %2181 = vmatpush.bf16.msra.mxu0 %v1352
      %2182 = vmatpush.bf16.msra.mxu0 %v1348
      %2183 = vmatmul.bf16.gmra.mxu0 %v530
      %v2184 = vpop.f32.mrf.mxu0
      %v2185 = vadd.f32 %v2171, %v2184
      %v2186 = vpop.f32.mrf.mxu0
      %v2187 = vadd.f32 %v2173, %v2186
      %2188 = vdwg.mxu0
      %2189 = vmatpush.bf16.msra.mxu0 %v1408
      %2190 = vmatpush.bf16.msra.mxu0 %v1404
      %2191 = vmatpush.bf16.msra.mxu0 %v1400
      %2192 = vmatpush.bf16.msra.mxu0 %v1396
      %2193 = vmatpush.bf16.msra.mxu0 %v1392
      %2194 = vmatpush.bf16.msra.mxu0 %v1388
      %2195 = vmatpush.bf16.msra.mxu0 %v1384
      %2196 = vmatpush.bf16.msra.mxu0 %v1380
      %2197 = vmatmul.bf16.gmra.mxu0 %v531
      %v2198 = vpop.f32.mrf.mxu0
      %v2199 = vadd.f32 %v2185, %v2198
      %v2200 = vpop.f32.mrf.mxu0
      %v2201 = vadd.f32 %v2187, %v2200
      %2202 = vdwg.mxu0
      %2203 = vmatpush.bf16.msra.mxu0 %v1440
      %2204 = vmatpush.bf16.msra.mxu0 %v1436
      %2205 = vmatpush.bf16.msra.mxu0 %v1432
      %2206 = vmatpush.bf16.msra.mxu0 %v1428
      %2207 = vmatpush.bf16.msra.mxu0 %v1424
      %2208 = vmatpush.bf16.msra.mxu0 %v1420
      %2209 = vmatpush.bf16.msra.mxu0 %v1416
      %2210 = vmatpush.bf16.msra.mxu0 %v1412
      %2211 = vmatmul.bf16.gmra.mxu0 %v532
      %v2212 = vpop.f32.mrf.mxu0
      %v2213 = vadd.f32 %v2199, %v2212
      %v2214 = vpop.f32.mrf.mxu0
      %v2215 = vadd.f32 %v2201, %v2214
      %2216 = vdwg.mxu0
      %2217 = vmatpush.bf16.msra.mxu0 %v1472
      %2218 = vmatpush.bf16.msra.mxu0 %v1468
      %2219 = vmatpush.bf16.msra.mxu0 %v1464
      %2220 = vmatpush.bf16.msra.mxu0 %v1460
      %2221 = vmatpush.bf16.msra.mxu0 %v1456
      %2222 = vmatpush.bf16.msra.mxu0 %v1452
      %2223 = vmatpush.bf16.msra.mxu0 %v1448
      %2224 = vmatpush.bf16.msra.mxu0 %v1444
      %2225 = vmatmul.bf16.gmra.mxu0 %v533
      %v2226 = vpop.f32.mrf.mxu0
      %v2227 = vadd.f32 %v2213, %v2226
      %v2228 = vpop.f32.mrf.mxu0
      %v2229 = vadd.f32 %v2215, %v2228
      %2230 = vdwg.mxu0
      %2231 = vmatpush.bf16.msra.mxu0 %v1504
      %2232 = vmatpush.bf16.msra.mxu0 %v1500
      %2233 = vmatpush.bf16.msra.mxu0 %v1496
      %2234 = vmatpush.bf16.msra.mxu0 %v1492
      %2235 = vmatpush.bf16.msra.mxu0 %v1488
      %2236 = vmatpush.bf16.msra.mxu0 %v1484
      %2237 = vmatpush.bf16.msra.mxu0 %v1480
      %2238 = vmatpush.bf16.msra.mxu0 %v1476
      %2239 = vmatmul.bf16.gmra.mxu0 %v534
      %v2240 = vpop.f32.mrf.mxu0
      %v2241 = vadd.f32 %v2227, %v2240
      %v2242 = vpop.f32.mrf.mxu0
      %v2243 = vadd.f32 %v2229, %v2242
      %2244 = vdwg.mxu0
      %2245 = vmatpush.bf16.msra.mxu0 %v1536
      %2246 = vmatpush.bf16.msra.mxu0 %v1532
      %2247 = vmatpush.bf16.msra.mxu0 %v1528
      %2248 = vmatpush.bf16.msra.mxu0 %v1524
      %2249 = vmatpush.bf16.msra.mxu0 %v1520
      %2250 = vmatpush.bf16.msra.mxu0 %v1516
      %2251 = vmatpush.bf16.msra.mxu0 %v1512
      %2252 = vmatpush.bf16.msra.mxu0 %v1508
      %2253 = vmatmul.bf16.gmra.mxu0 %v535
      %v2254 = vpop.f32.mrf.mxu0
      %v2255 = vadd.f32 %v2241, %v2254
      %v2256 = vpop.f32.mrf.mxu0
      %v2257 = vadd.f32 %v2243, %v2256
      %2258 = vdwg.mxu0
      %2259 = vmatpush.bf16.msra.mxu0 %v1568
      %2260 = vmatpush.bf16.msra.mxu0 %v1564
      %2261 = vmatpush.bf16.msra.mxu0 %v1560
      %2262 = vmatpush.bf16.msra.mxu0 %v1556
      %2263 = vmatpush.bf16.msra.mxu0 %v1552
      %2264 = vmatpush.bf16.msra.mxu0 %v1548
      %2265 = vmatpush.bf16.msra.mxu0 %v1544
      %2266 = vmatpush.bf16.msra.mxu0 %v1540
      %2267 = vmatmul.bf16.gmra.mxu0 %v536
      %v2268 = vpop.f32.mrf.mxu0
      %v2269 = vadd.f32 %v2255, %v2268
      %v2270 = vpop.f32.mrf.mxu0
      %v2271 = vadd.f32 %v2257, %v2270
      %2272 = vdwg.mxu0
      %v2273 = vmax.f32 %v1933, 0.0
      %v2274 = vmax.f32 %v2045, 0.0
      %v2275 = vmax.f32 %v2157, 0.0
      %v2276 = vmax.f32 %v2269, 0.0
      %v2277 = vmax.f32 %v1935, 0.0
      %v2278 = vmax.f32 %v2047, 0.0
      %v2279 = vmax.f32 %v2159, 0.0
      %v2280 = vmax.f32 %v2271, 0.0
      %v2281 = vpack.c.bf16 %v2277, %v2273
      %v2282 = vpack.c.bf16 %v2278, %v2274
      %v2283 = vpack.c.bf16 %v2279, %v2275
      %v2284 = vpack.c.bf16 %v2280, %v2276
      %v2285 = vld [vmem:[%s3] sm:$0xf]
      %v2286 = vld [vmem:[%s3 + $0x4] sm:$0xf]
      %v2287 = vld [vmem:[%s3 + $0x8] sm:$0xf]
      %v2288 = vld [vmem:[%s3 + $0xc] sm:$0xf]
      %v2289 = vld [vmem:[%s3 + $0x10] sm:$0xf]
      %v2290 = vld [vmem:[%s3 + $0x14] sm:$0xf]
      %v2291 = vld [vmem:[%s3 + $0x18] sm:$0xf]
      %v2292 = vld [vmem:[%s3 + $0x1c] sm:$0xf]
      %v2293 = vld [vmem:[%s3 + $0x20] sm:$0xf]
      %v2294 = vld [vmem:[%s3 + $0x24] sm:$0xf]
      %v2295 = vld [vmem:[%s3 + $0x28] sm:$0xf]
      %v2296 = vld [vmem:[%s3 + $0x2c] sm:$0xf]
      %v2297 = vld [vmem:[%s3 + $0x30] sm:$0xf]
      %v2298 = vld [vmem:[%s3 + $0x34] sm:$0xf]
      %v2299 = vld [vmem:[%s3 + $0x38] sm:$0xf]
      %v2300 = vld [vmem:[%s3 + $0x3c] sm:$0xf]
      %v2301 = vld [vmem:[%s3 + $0x40] sm:$0xf]
      %v2302 = vld [vmem:[%s3 + $0x44] sm:$0xf]
      %v2303 = vld [vmem:[%s3 + $0x48] sm:$0xf]
      %v2304 = vld [vmem:[%s3 + $0x4c] sm:$0xf]
      %v2305 = vld [vmem:[%s3 + $0x50] sm:$0xf]
      %v2306 = vld [vmem:[%s3 + $0x54] sm:$0xf]
      %v2307 = vld [vmem:[%s3 + $0x58] sm:$0xf]
      %v2308 = vld [vmem:[%s3 + $0x5c] sm:$0xf]
      %v2309 = vld [vmem:[%s3 + $0x60] sm:$0xf]
      %v2310 = vld [vmem:[%s3 + $0x64] sm:$0xf]
      %v2311 = vld [vmem:[%s3 + $0x68] sm:$0xf]
      %v2312 = vld [vmem:[%s3 + $0x6c] sm:$0xf]
      %v2313 = vld [vmem:[%s3 + $0x70] sm:$0xf]
      %v2314 = vld [vmem:[%s3 + $0x74] sm:$0xf]
      %v2315 = vld [vmem:[%s3 + $0x78] sm:$0xf]
      %v2316 = vld [vmem:[%s3 + $0x7c] sm:$0xf]
      %v2317 = vld [vmem:[%s3 + $0x80] sm:$0xf]
      %v2318 = vld [vmem:[%s3 + $0x84] sm:$0xf]
      %v2319 = vld [vmem:[%s3 + $0x88] sm:$0xf]
      %v2320 = vld [vmem:[%s3 + $0x8c] sm:$0xf]
      %v2321 = vld [vmem:[%s3 + $0x90] sm:$0xf]
      %v2322 = vld [vmem:[%s3 + $0x94] sm:$0xf]
      %v2323 = vld [vmem:[%s3 + $0x98] sm:$0xf]
      %v2324 = vld [vmem:[%s3 + $0x9c] sm:$0xf]
      %v2325 = vld [vmem:[%s3 + $0xa0] sm:$0xf]
      %v2326 = vld [vmem:[%s3 + $0xa4] sm:$0xf]
      %v2327 = vld [vmem:[%s3 + $0xa8] sm:$0xf]
      %v2328 = vld [vmem:[%s3 + $0xac] sm:$0xf]
      %v2329 = vld [vmem:[%s3 + $0xb0] sm:$0xf]
      %v2330 = vld [vmem:[%s3 + $0xb4] sm:$0xf]
      %v2331 = vld [vmem:[%s3 + $0xb8] sm:$0xf]
      %v2332 = vld [vmem:[%s3 + $0xbc] sm:$0xf]
      %v2333 = vld [vmem:[%s3 + $0xc0] sm:$0xf]
      %v2334 = vld [vmem:[%s3 + $0xc4] sm:$0xf]
      %v2335 = vld [vmem:[%s3 + $0xc8] sm:$0xf]
      %v2336 = vld [vmem:[%s3 + $0xcc] sm:$0xf]
      %v2337 = vld [vmem:[%s3 + $0xd0] sm:$0xf]
      %v2338 = vld [vmem:[%s3 + $0xd4] sm:$0xf]
      %v2339 = vld [vmem:[%s3 + $0xd8] sm:$0xf]
      %v2340 = vld [vmem:[%s3 + $0xdc] sm:$0xf]
      %v2341 = vld [vmem:[%s3 + $0xe0] sm:$0xf]
      %v2342 = vld [vmem:[%s3 + $0xe4] sm:$0xf]
      %v2343 = vld [vmem:[%s3 + $0xe8] sm:$0xf]
      %v2344 = vld [vmem:[%s3 + $0xec] sm:$0xf]
      %v2345 = vld [vmem:[%s3 + $0xf0] sm:$0xf]
      %v2346 = vld [vmem:[%s3 + $0xf4] sm:$0xf]
      %v2347 = vld [vmem:[%s3 + $0xf8] sm:$0xf]
      %v2348 = vld [vmem:[%s3 + $0xfc] sm:$0xf]
      %v2349 = vld [vmem:[%s4] sm:$0x1]
      %v2351 = vperm.slane %v2349, 0
      %v2417 = vunpack.c.l.b16 %v2285
      %v2418 = vunpack.c.l.b16 %v2286
      %v2419 = vunpack.c.l.b16 %v2287
      %v2420 = vunpack.c.l.b16 %v2288
      %v2421 = vunpack.c.l.b16 %v2289
      %v2422 = vunpack.c.l.b16 %v2290
      %v2423 = vunpack.c.l.b16 %v2291
      %v2424 = vunpack.c.l.b16 %v2292
      %v2425 = vunpack.c.l.b16 %v2293
      %v2426 = vunpack.c.l.b16 %v2294
      %v2427 = vunpack.c.l.b16 %v2295
      %v2428 = vunpack.c.l.b16 %v2296
      %v2429 = vunpack.c.l.b16 %v2297
      %v2430 = vunpack.c.l.b16 %v2298
      %v2431 = vunpack.c.l.b16 %v2299
      %v2432 = vunpack.c.l.b16 %v2300
      %v2433 = vunpack.c.l.b16 %v2301
      %v2434 = vunpack.c.l.b16 %v2302
      %v2435 = vunpack.c.l.b16 %v2303
      %v2436 = vunpack.c.l.b16 %v2304
      %v2437 = vunpack.c.l.b16 %v2305
      %v2438 = vunpack.c.l.b16 %v2306
      %v2439 = vunpack.c.l.b16 %v2307
      %v2440 = vunpack.c.l.b16 %v2308
      %v2441 = vunpack.c.l.b16 %v2309
      %v2442 = vunpack.c.l.b16 %v2310
      %v2443 = vunpack.c.l.b16 %v2311
      %v2444 = vunpack.c.l.b16 %v2312
      %v2445 = vunpack.c.l.b16 %v2313
      %v2446 = vunpack.c.l.b16 %v2314
      %v2447 = vunpack.c.l.b16 %v2315
      %v2448 = vunpack.c.l.b16 %v2316
      %v2449 = vunpack.c.l.b16 %v2317
      %v2450 = vunpack.c.l.b16 %v2318
      %v2451 = vunpack.c.l.b16 %v2319
      %v2452 = vunpack.c.l.b16 %v2320
      %v2453 = vunpack.c.l.b16 %v2321
      %v2454 = vunpack.c.l.b16 %v2322
      %v2455 = vunpack.c.l.b16 %v2323
      %v2456 = vunpack.c.l.b16 %v2324
      %v2457 = vunpack.c.l.b16 %v2325
      %v2458 = vunpack.c.l.b16 %v2326
      %v2459 = vunpack.c.l.b16 %v2327
      %v2460 = vunpack.c.l.b16 %v2328
      %v2461 = vunpack.c.l.b16 %v2329
      %v2462 = vunpack.c.l.b16 %v2330
      %v2463 = vunpack.c.l.b16 %v2331
      %v2464 = vunpack.c.l.b16 %v2332
      %v2465 = vunpack.c.l.b16 %v2333
      %v2466 = vunpack.c.l.b16 %v2334
      %v2467 = vunpack.c.l.b16 %v2335
      %v2468 = vunpack.c.l.b16 %v2336
      %v2469 = vunpack.c.l.b16 %v2337
      %v2470 = vunpack.c.l.b16 %v2338
      %v2471 = vunpack.c.l.b16 %v2339
      %v2472 = vunpack.c.l.b16 %v2340
      %v2473 = vunpack.c.l.b16 %v2341
      %v2474 = vunpack.c.l.b16 %v2342
      %v2475 = vunpack.c.l.b16 %v2343
      %v2476 = vunpack.c.l.b16 %v2344
      %v2477 = vunpack.c.l.b16 %v2345
      %v2478 = vunpack.c.l.b16 %v2346
      %v2479 = vunpack.c.l.b16 %v2347
      %v2480 = vunpack.c.l.b16 %v2348
      %v2481 = vpack.c.b16 %v2418, %v2417
      %v2482 = vpack.c.b16 %v2420, %v2419
      %v2483 = vpack.c.b16 %v2422, %v2421
      %v2484 = vpack.c.b16 %v2424, %v2423
      %v2485 = vpack.c.b16 %v2426, %v2425
      %v2486 = vpack.c.b16 %v2428, %v2427
      %v2487 = vpack.c.b16 %v2430, %v2429
      %v2488 = vpack.c.b16 %v2432, %v2431
      %v2489 = vpack.c.b16 %v2434, %v2433
      %v2490 = vpack.c.b16 %v2436, %v2435
      %v2491 = vpack.c.b16 %v2438, %v2437
      %v2492 = vpack.c.b16 %v2440, %v2439
      %v2493 = vpack.c.b16 %v2442, %v2441
      %v2494 = vpack.c.b16 %v2444, %v2443
      %v2495 = vpack.c.b16 %v2446, %v2445
      %v2496 = vpack.c.b16 %v2448, %v2447
      %v2497 = vpack.c.b16 %v2450, %v2449
      %v2498 = vpack.c.b16 %v2452, %v2451
      %v2499 = vpack.c.b16 %v2454, %v2453
      %v2500 = vpack.c.b16 %v2456, %v2455
      %v2501 = vpack.c.b16 %v2458, %v2457
      %v2502 = vpack.c.b16 %v2460, %v2459
      %v2503 = vpack.c.b16 %v2462, %v2461
      %v2504 = vpack.c.b16 %v2464, %v2463
      %v2505 = vpack.c.b16 %v2466, %v2465
      %v2506 = vpack.c.b16 %v2468, %v2467
      %v2507 = vpack.c.b16 %v2470, %v2469
      %v2508 = vpack.c.b16 %v2472, %v2471
      %v2509 = vpack.c.b16 %v2474, %v2473
      %v2510 = vpack.c.b16 %v2476, %v2475
      %v2511 = vpack.c.b16 %v2478, %v2477
      %v2512 = vpack.c.b16 %v2480, %v2479
      %2545 = vmatpush.bf16.msra.mxu0 %v2488
      %2546 = vmatpush.bf16.msra.mxu0 %v2487
      %2547 = vmatpush.bf16.msra.mxu0 %v2486
      %2548 = vmatpush.bf16.msra.mxu0 %v2485
      %2549 = vmatpush.bf16.msra.mxu0 %v2484
      %2550 = vmatpush.bf16.msra.mxu0 %v2483
      %2551 = vmatpush.bf16.msra.mxu0 %v2482
      %2552 = vmatpush.bf16.msra.mxu0 %v2481
      %2553 = vmatmul.bf16.gmra.mxu0 %v2281
      %v2554 = vpop.f32.mrf.mxu0
      %v2555 = vadd.f32 %v2351, %v2554
      %v2556 = vpop.f32.mrf.mxu0
      %v2557 = vadd.f32 %v2351, %v2556
      %2558 = vdwg.mxu0
      %2559 = vmatpush.bf16.msra.mxu0 %v2496
      %2560 = vmatpush.bf16.msra.mxu0 %v2495
      %2561 = vmatpush.bf16.msra.mxu0 %v2494
      %2562 = vmatpush.bf16.msra.mxu0 %v2493
      %2563 = vmatpush.bf16.msra.mxu0 %v2492
      %2564 = vmatpush.bf16.msra.mxu0 %v2491
      %2565 = vmatpush.bf16.msra.mxu0 %v2490
      %2566 = vmatpush.bf16.msra.mxu0 %v2489
      %2567 = vmatmul.bf16.gmra.mxu0 %v2282
      %v2568 = vpop.f32.mrf.mxu0
      %v2569 = vadd.f32 %v2555, %v2568
      %v2570 = vpop.f32.mrf.mxu0
      %v2571 = vadd.f32 %v2557, %v2570
      %2572 = vdwg.mxu0
      %2573 = vmatpush.bf16.msra.mxu0 %v2504
      %2574 = vmatpush.bf16.msra.mxu0 %v2503
      %2575 = vmatpush.bf16.msra.mxu0 %v2502
      %2576 = vmatpush.bf16.msra.mxu0 %v2501
      %2577 = vmatpush.bf16.msra.mxu0 %v2500
      %2578 = vmatpush.bf16.msra.mxu0 %v2499
      %2579 = vmatpush.bf16.msra.mxu0 %v2498
      %2580 = vmatpush.bf16.msra.mxu0 %v2497
      %2581 = vmatmul.bf16.gmra.mxu0 %v2283
      %v2582 = vpop.f32.mrf.mxu0
      %v2583 = vadd.f32 %v2569, %v2582
      %v2584 = vpop.f32.mrf.mxu0
      %v2585 = vadd.f32 %v2571, %v2584
      %2586 = vdwg.mxu0
      %2587 = vmatpush.bf16.msra.mxu0 %v2512
      %2588 = vmatpush.bf16.msra.mxu0 %v2511
      %2589 = vmatpush.bf16.msra.mxu0 %v2510
      %2590 = vmatpush.bf16.msra.mxu0 %v2509
      %2591 = vmatpush.bf16.msra.mxu0 %v2508
      %2592 = vmatpush.bf16.msra.mxu0 %v2507
      %2593 = vmatpush.bf16.msra.mxu0 %v2506
      %2594 = vmatpush.bf16.msra.mxu0 %v2505
      %2595 = vmatmul.bf16.gmra.mxu0 %v2284
      %v2596 = vpop.f32.mrf.mxu0
      %v2597 = vadd.f32 %v2583, %v2596
      %v2598 = vpop.f32.mrf.mxu0
      %v2599 = vadd.f32 %v2585, %v2598
      %2600 = vdwg.mxu0
      %2601 = vmax.xlane.f32.xlu0 %v2597
      %v2602 = vpop.xlane.xlu0 %2601
      %2603 = vmax.xlane.f32.xlu0 %v2599
      %v2604 = vpop.xlane.xlu0 %2603
      %v2605 = vsub.f32 %v2597, %v2602
      %v2606 = vsub.f32 %v2599, %v2604
      %v2607 = vmul.f32 %v2605, 1.442695
      %v2608 = vpow.pop %v2607
      %v2609 = vmul.f32 %v2606, 1.442695
      %v2610 = vpow.pop %v2609
      %2611 = vadd.xlane.f32.xlu0 %v2608
      %v2612 = vpop.xlane.xlu0 %2611
      %2613 = vadd.xlane.f32.xlu0 %v2610
      %v2614 = vpop.xlane.xlu0 %2613
      %v2615 = vlog2.pop %v2612
      %v2616 = vmul.f32 %v2615, 0.6931472
      %v2617 = vlog2.pop %v2614
      %v2618 = vmul.f32 %v2617, 0.6931472
      %v2619 = vsub.f32 %v2605, %v2616
      %v2620 = vsub.f32 %v2606, %v2618
      %2621 = vst [vmem:[%s229] sm:$0xff] %v2619
      %2622 = vst [vmem:[%s229 + $0x8] sm:$0xff] %v2620
      %s2623 = smul.u32 2, %s16
      %p2624 = scmp.lt.s32.totalorder %s2623, 3
      %s2625 = scalar_select %p2624, %s2623, 3
      %s2626 = smul.addr %s2625, 8
      %s2627 = scalar_lea.vmem %s5, %s2626
      // Predicated region
      $region41: #{net_forward.5} parent=39 // pred_check
        %p2628 = pneg %p144
      $region42: #{net_forward.5} parent=39 // pred_check_branch
        %2630 = sbr.rel (%p2628) target = $region44
      $region43: #{net_forward.5} parent=39 // pred_region
        %s2631 = smul.u32 2, %s16
      $region44: #{net_forward.5} parent=39 // pred_fallthru
        _
    $region40: #{net_forward.5} parent=5 // pred_fallthru
      _
    %p2632 = scmp.le.s32.totalorder 2, %s11
    // Predicated region
    $region45: #{net_forward.5} parent=5 // pred_check
      %p2633 = pneg %p2632
    $region46: #{net_forward.5} parent=5 // pred_check_branch
      %2635 = sbr.rel (%p2633) target = $region48
    $region47: #{net_forward.5} parent=5 // pred_region
      %s2636 = ssub.s32 %s11, 2
      // Predicated region
      $region49: #{net_forward.5} parent=47 // pred_check
        %p2637 = pneg %p150
      $region50: #{net_forward.5} parent=47 // pred_check_branch
        %2639 = sbr.rel (%p2637) target = $region52
      $region51: #{net_forward.5} parent=47 // pred_region
        %s2640 = smul.u32 2, %s17
        %p2641 = scmp.lt.s32.totalorder %s2640, 3
        %s2642 = scalar_select %p2641, %s2640, 3
        %s2643 = smul.addr %s2642, 8
        %s2644 = scalar_lea.vmem %s5, %s2643
      $region52: #{net_forward.5} parent=47 // pred_fallthru
        _
    $region48: #{net_forward.5} parent=5 // pred_fallthru
      _
  $region6: #{net_forward.5} parent=0 // loop_footer
    %s15 = sadd.s32 1, %s11
  $region7: #{net_forward.5} parent=0 // loop_footer_branch
    %10 = sbr.rel target = $region3
  $region8: #{net_forward.5} parent=0 // loop_exit
    _

</llo_original>
